<compile_context>
chip_gen: v7x
topology: tpu7x:2x2x1
jax: 0.10.0
libtpu: 0.0.40
codegen_flags: <defaults>
</compile_context>

<pallas_src>
import math

import jax
import jax.numpy as jnp
from jax import lax
from jax.experimental import pallas as pl
from jax.experimental.pallas import tpu as pltpu

# ------------- toy config (synthetic stand-in for chinese_L-12_H-768_A-12) -------------
VOCAB = 128
MAX_POS = 64
TYPE_VOCAB = 2
HIDDEN = 128                      # multiple of 128 -> lane-dense stores (real ckpt: 768)
HEADS = 4
HEAD_DIM = HIDDEN // HEADS        # 32
FFN = 4 * HIDDEN                  # 512 (real ckpt: 3072)
LAYERS = 2                        # real ckpt: 12
LN_EPS = 1e-12

BATCH = 2
SEQ = 8


# ----------------------------------- math helpers -----------------------------------
def _layernorm(x, g, b):
    mu = jnp.mean(x, axis=-1, keepdims=True)
    xc = x - mu
    var = jnp.mean(xc * xc, axis=-1, keepdims=True)
    return xc * lax.rsqrt(var + LN_EPS) * g + b


def _gelu(x):
    # TODO(synk): HF BERT uses erf-based GELU; tanh approximation used here because
    # erf lowering is not guaranteed in Mosaic.
    c = math.sqrt(2.0 / math.pi)
    return 0.5 * x * (1.0 + jnp.tanh(c * (x + 0.044715 * x * x * x)))


# -------------------------------- fused encoder kernel --------------------------------
def _encoder_kernel(emb_ref, emb_g_ref, emb_b_ref,
                    wqkv_ref, bqkv_ref, wo_ref, bo_ref, ln1_g_ref, ln1_b_ref,
                    wi_ref, bi_ref, wo2_ref, bo2_ref, ln2_g_ref, ln2_b_ref,
                    out_ref):
    """One grid step == one batch element. All transformer layers run inside a
    fori_loop with the (small) stacked weights VMEM-resident; the hidden state never
    leaves VMEM/registers between layers."""
    seq, hidden = emb_ref.shape

    # Embedding LayerNorm (no residual) initializes the hidden state (f32).
    h0 = _layernorm(emb_ref[...], emb_g_ref[...], emb_b_ref[...])

    def layer(l, h):
        # ---- fused per-head Q/K/V projection (heads on the leading/batch axis) ----
        hb = jnp.broadcast_to(h.astype(jnp.bfloat16)[None], (HEADS, seq, hidden))
        qkv = jnp.einsum("hsc,hcd->hsd", hb, wqkv_ref[l],
                         preferred_element_type=jnp.float32) + bqkv_ref[l]
        q = qkv[:, :, 0:HEAD_DIM]                    # 1/sqrt(D) pre-folded into weights
        k = qkv[:, :, HEAD_DIM:2 * HEAD_DIM]
        v = qkv[:, :, 2 * HEAD_DIM:3 * HEAD_DIM]

        # ---- head-batched self-attention (f32 softmax, exact normalization) ----
        s = jnp.einsum("hqd,hkd->hqk",
                       q.astype(jnp.bfloat16), k.astype(jnp.bfloat16),
                       preferred_element_type=jnp.float32)
        s = s - jnp.max(s, axis=-1, keepdims=True)
        p = jnp.exp(s)
        p = p / jnp.sum(p, axis=-1, keepdims=True)
        ctx = jnp.einsum("hqk,hkd->hqd",
                         p.astype(jnp.bfloat16), v.astype(jnp.bfloat16),
                         preferred_element_type=jnp.float32)

        # ---- attention output projection: per-head partials, reduced over the head
        #      axis (no head-merge reshape, no scratch, no masked partial stores) ----
        attn = jnp.einsum("hqd,hde->hqe",
                          ctx.astype(jnp.bfloat16), wo_ref[l],
                          preferred_element_type=jnp.float32)
        attn = jnp.sum(attn, axis=0) + bo_ref[l]
        h1 = _layernorm(attn + h, ln1_g_ref[l], ln1_b_ref[l])

        # ---- feed-forward (bf16 matmul inputs, f32 accumulation & elementwise) ----
        ffn = _gelu(jnp.dot(h1.astype(jnp.bfloat16), wi_ref[l],
                            preferred_element_type=jnp.float32) + bi_ref[l])
        ffn_out = jnp.dot(ffn.astype(jnp.bfloat16), wo2_ref[l],
                          preferred_element_type=jnp.float32) + bo2_ref[l]
        return _layernorm(ffn_out + h1, ln2_g_ref[l], ln2_b_ref[l])

    out_ref[...] = lax.fori_loop(0, LAYERS, layer, h0, unroll=True)


def _encoder_pallas(emb, kp):
    B, S, H = emb.shape

    def full(shape):
        nd = len(shape)
        return pl.BlockSpec(shape, lambda b: (0,) * nd)

    in_specs = [
        pl.BlockSpec((None, S, H), lambda b: (b, 0, 0)),           # emb (per-batch block)
        full((1, HIDDEN)), full((1, HIDDEN)),                       # emb LN gamma/beta
        full((LAYERS, HEADS, HIDDEN, 3 * HEAD_DIM)),                # wqkv  (bf16)
        full((LAYERS, HEADS, 1, 3 * HEAD_DIM)),                     # bqkv  (f32)
        full((LAYERS, HEADS, HEAD_DIM, HIDDEN)),                    # wo    (bf16)
        full((LAYERS, 1, HIDDEN)),                                  # bo
        full((LAYERS, 1, HIDDEN)), full((LAYERS, 1, HIDDEN)),       # ln1 gamma/beta
        full((LAYERS, HIDDEN, FFN)), full((LAYERS, 1, FFN)),        # wi (bf16), bi
        full((LAYERS, FFN, HIDDEN)), full((LAYERS, 1, HIDDEN)),     # wo2 (bf16), bo2
        full((LAYERS, 1, HIDDEN)), full((LAYERS, 1, HIDDEN)),       # ln2 gamma/beta
    ]

    return pl.pallas_call(
        _encoder_kernel,
        out_shape=jax.ShapeDtypeStruct((B, S, H), jnp.float32),
        grid=(B,),
        in_specs=in_specs,
        out_specs=pl.BlockSpec((None, S, H), lambda b: (b, 0, 0)),
        compiler_params=pltpu.CompilerParams(
            dimension_semantics=("parallel",)),      # batch sharded across TCs on v7x
    )(emb,
      kp["emb_ln_g"], kp["emb_ln_b"],
      kp["wqkv"], kp["bqkv"], kp["wo"], kp["bo"], kp["ln1_g"], kp["ln1_b"],
      kp["wi"], kp["bi"], kp["wo2"], kp["bo2"], kp["ln2_g"], kp["ln2_b"])


# --------------------------------- parameter creation ---------------------------------
def _normal(key, shape, scale=0.02):
    return scale * jax.random.normal(key, shape, dtype=jnp.float32)


def init_params(key):
    """Canonical (HF-like) f32 weights. TODO(synk): load the real pretrained
    chinese_L-12_H-768_A-12 checkpoint instead of this synthetic stand-in."""
    ks = jax.random.split(key, 20)
    return {
        "word_emb": _normal(ks[0], (VOCAB, HIDDEN)),
        "pos_emb": _normal(ks[1], (MAX_POS, HIDDEN)),
        "type_emb": _normal(ks[2], (TYPE_VOCAB, HIDDEN)),
        "emb_ln_g": 1.0 + _normal(ks[3], (HIDDEN,), 0.05),
        "emb_ln_b": _normal(ks[4], (HIDDEN,), 0.05),
        "wq": _normal(ks[5], (LAYERS, HIDDEN, HIDDEN)),
        "wk": _normal(ks[6], (LAYERS, HIDDEN, HIDDEN)),
        "wv": _normal(ks[7], (LAYERS, HIDDEN, HIDDEN)),
        "bq": _normal(ks[8], (LAYERS, HIDDEN)),
        "bk": _normal(ks[9], (LAYERS, HIDDEN)),
        "bv": _normal(ks[10], (LAYERS, HIDDEN)),
        "wo": _normal(ks[11], (LAYERS, HIDDEN, HIDDEN)),
        "bo": _normal(ks[12], (LAYERS, HIDDEN)),
        "ln1_g": 1.0 + _normal(ks[13], (LAYERS, HIDDEN), 0.05),
        "ln1_b": _normal(ks[14], (LAYERS, HIDDEN), 0.05),
        "wi": _normal(ks[15], (LAYERS, HIDDEN, FFN)),
        "bi": _normal(ks[16], (LAYERS, FFN)),
        "wo2": _normal(ks[17], (LAYERS, FFN, HIDDEN)),
        "bo2": _normal(ks[18], (LAYERS, HIDDEN)),
        "ln2_g": 1.0 + _normal(ks[19], (LAYERS, HIDDEN), 0.05),
        "ln2_b": jnp.zeros((LAYERS, HIDDEN), jnp.float32),
    }


def prepare_kernel_params(p):
    """Host-side re-layout: head-batched bf16 matmul weights, f32 biases/LN params,
    1/sqrt(HEAD_DIM) folded into the Q columns of the fused QKV projection."""
    scale = 1.0 / math.sqrt(HEAD_DIM)

    def heads_cols(w):   # (L, H, H) -> (L, HEADS, H, D): per-head output columns
        return w.reshape(LAYERS, HIDDEN, HEADS, HEAD_DIM).transpose(0, 2, 1, 3)

    def heads_bias(b):   # (L, H) -> (L, HEADS, 1, D)
        return b.reshape(LAYERS, HEADS, 1, HEAD_DIM)

    wqkv = jnp.concatenate([heads_cols(p["wq"]) * scale,
                            heads_cols(p["wk"]),
                            heads_cols(p["wv"])], axis=-1).astype(jnp.bfloat16)
    bqkv = jnp.concatenate([heads_bias(p["bq"]) * scale,
                            heads_bias(p["bk"]),
                            heads_bias(p["bv"])], axis=-1)

    row = lambda x: x.reshape(LAYERS, 1, -1)
    return {
        "emb_ln_g": p["emb_ln_g"].reshape(1, HIDDEN),
        "emb_ln_b": p["emb_ln_b"].reshape(1, HIDDEN),
        "wqkv": wqkv, "bqkv": bqkv,
        "wo": p["wo"].reshape(LAYERS, HEADS, HEAD_DIM, HIDDEN).astype(jnp.bfloat16),
        "bo": row(p["bo"]),
        "ln1_g": row(p["ln1_g"]), "ln1_b": row(p["ln1_b"]),
        "wi": p["wi"].astype(jnp.bfloat16), "bi": row(p["bi"]),
        "wo2": p["wo2"].astype(jnp.bfloat16), "bo2": row(p["bo2"]),
        "ln2_g": row(p["ln2_g"]), "ln2_b": row(p["ln2_b"]),
    }


# ------------------------------------ forward pass ------------------------------------
@jax.jit
def bert_representer_forward(params, input_ids):
    """Equivalent of `self.bert(input_ids)[0]` (last hidden states).

    With only input_ids, HF's BertModel defaults attention_mask to all-ones (no
    masking) and token_type_ids to zeros — both reproduced here."""
    B, S = input_ids.shape
    kp = prepare_kernel_params(params)                        # host-side weight re-layout
    # Embedding-table gathers are left to XLA; everything downstream is one Pallas call.
    word = jnp.take(params["word_emb"], input_ids, axis=0)    # (B, S, H)
    pos = params["pos_emb"][:S][None, :, :]                   # (1, S, H)
    tok = params["type_emb"][0][None, None, :]                # token_type_ids = 0
    emb = word + pos + tok                                    # (B, S, H)
    return _encoder_pallas(emb, kp)


# -------------------------------- pure-JAX reference -----------------------------------
def _reference_forward(params, input_ids):
    B, S = input_ids.shape
    word = jnp.take(params["word_emb"], input_ids, axis=0)
    pos = params["pos_emb"][:S][None, :, :]
    tok = params["type_emb"][0][None, None, :]
    h = _layernorm(word + pos + tok, params["emb_ln_g"], params["emb_ln_b"])
    for l in range(LAYERS):
        q = h @ params["wq"][l] + params["bq"][l]
        k = h @ params["wk"][l] + params["bk"][l]
        v = h @ params["wv"][l] + params["bv"][l]
        split = lambda x: x.reshape(B, S, HEADS, HEAD_DIM).transpose(0, 2, 1, 3)
        s = jnp.einsum("bhqd,bhkd->bhqk", split(q), split(k)) / math.sqrt(HEAD_DIM)
        p = jax.nn.softmax(s, axis=-1)
        ctx = jnp.einsum("bhqk,bhkd->bhqd", p, split(v))
        ctx = ctx.transpose(0, 2, 1, 3).reshape(B, S, HIDDEN)
        attn = ctx @ params["wo"][l] + params["bo"][l]
        h1 = _layernorm(attn + h, params["ln1_g"][l], params["ln1_b"][l])
        ffn = _gelu(h1 @ params["wi"][l] + params["bi"][l])
        h = _layernorm(ffn @ params["wo2"][l] + params["bo2"][l] + h1,
                       params["ln2_g"][l], params["ln2_b"][l])
    return h


# ---------------------------------------- main -----------------------------------------
if __name__ == "__main__":
    key = jax.random.PRNGKey(0)
    pkey, ikey = jax.random.split(key)

    params = init_params(pkey)
    input_ids = jax.random.randint(ikey, (BATCH, SEQ), 0, VOCAB, dtype=jnp.int32)

    out = jax.block_until_ready(bert_representer_forward(params, input_ids))

    assert out.shape == (BATCH, SEQ, HIDDEN), out.shape
    assert out.dtype == jnp.float32
    assert bool(jnp.all(jnp.isfinite(out)))

    # Loose tolerance: kernel uses bf16 matmul inputs with f32 accumulation.
    ref = _reference_forward(params, input_ids)
    assert bool(jnp.allclose(out, ref, atol=5e-2, rtol=5e-2)), float(
        jnp.max(jnp.abs(out - ref)))

    print("KERNEL_OK")
</pallas_src>

<mosaic_0001>
module attributes {stable_mosaic.version = 11 : i64} {
  func.func @_encoder_kernel(%arg0: i32, %arg1: memref<1x8x128xf32, #tpu.memory_space<vmem>>, %arg2: memref<1x128xf32, #tpu.memory_space<vmem>>, %arg3: memref<1x128xf32, #tpu.memory_space<vmem>>, %arg4: memref<2x4x128x96xbf16, #tpu.memory_space<vmem>>, %arg5: memref<2x4x1x96xf32, #tpu.memory_space<vmem>>, %arg6: memref<2x4x32x128xbf16, #tpu.memory_space<vmem>>, %arg7: memref<2x1x128xf32, #tpu.memory_space<vmem>>, %arg8: memref<2x1x128xf32, #tpu.memory_space<vmem>>, %arg9: memref<2x1x128xf32, #tpu.memory_space<vmem>>, %arg10: memref<2x128x512xbf16, #tpu.memory_space<vmem>>, %arg11: memref<2x1x512xf32, #tpu.memory_space<vmem>>, %arg12: memref<2x512x128xbf16, #tpu.memory_space<vmem>>, %arg13: memref<2x1x128xf32, #tpu.memory_space<vmem>>, %arg14: memref<2x1x128xf32, #tpu.memory_space<vmem>>, %arg15: memref<2x1x128xf32, #tpu.memory_space<vmem>>, %arg16: memref<1x8x128xf32, #tpu.memory_space<vmem>>) attributes {dimension_semantics = [#tpu.dimension_semantics<parallel>], iteration_bounds = array<i64: 2>, scalar_prefetch = 0 : i64, scratch_operands = 0 : i64, tpu.core_type = #tpu.core_type<tc>, window_params = [{transform_indices = @transform_0, window_bounds = array<i64: 1, 8, 128>}, {pipeline_mode = #tpu.pipeline_mode<synchronous>, transform_indices = @transform_1, window_bounds = array<i64: 1, 128>}, {pipeline_mode = #tpu.pipeline_mode<synchronous>, transform_indices = @transform_2, window_bounds = array<i64: 1, 128>}, {pipeline_mode = #tpu.pipeline_mode<synchronous>, transform_indices = @transform_3, window_bounds = array<i64: 2, 4, 128, 96>}, {pipeline_mode = #tpu.pipeline_mode<synchronous>, transform_indices = @transform_4, window_bounds = array<i64: 2, 4, 1, 96>}, {pipeline_mode = #tpu.pipeline_mode<synchronous>, transform_indices = @transform_5, window_bounds = array<i64: 2, 4, 32, 128>}, {pipeline_mode = #tpu.pipeline_mode<synchronous>, transform_indices = @transform_6, window_bounds = array<i64: 2, 1, 128>}, {pipeline_mode = #tpu.pipeline_mode<synchronous>, transform_indices = @transform_7, window_bounds = array<i64: 2, 1, 128>}, {pipeline_mode = #tpu.pipeline_mode<synchronous>, transform_indices = @transform_8, window_bounds = array<i64: 2, 1, 128>}, {pipeline_mode = #tpu.pipeline_mode<synchronous>, transform_indices = @transform_9, window_bounds = array<i64: 2, 128, 512>}, {pipeline_mode = #tpu.pipeline_mode<synchronous>, transform_indices = @transform_10, window_bounds = array<i64: 2, 1, 512>}, {pipeline_mode = #tpu.pipeline_mode<synchronous>, transform_indices = @transform_11, window_bounds = array<i64: 2, 512, 128>}, {pipeline_mode = #tpu.pipeline_mode<synchronous>, transform_indices = @transform_12, window_bounds = array<i64: 2, 1, 128>}, {pipeline_mode = #tpu.pipeline_mode<synchronous>, transform_indices = @transform_13, window_bounds = array<i64: 2, 1, 128>}, {pipeline_mode = #tpu.pipeline_mode<synchronous>, transform_indices = @transform_14, window_bounds = array<i64: 2, 1, 128>}, {transform_indices = @transform_15, window_bounds = array<i64: 1, 8, 128>}]} {
    %c0 = arith.constant 0 : index
    %c0_0 = arith.constant 0 : index
    %c0_1 = arith.constant 0 : index
    %0 = vector.load %arg1[%c0, %c0_0, %c0_1] : memref<1x8x128xf32, #tpu.memory_space<vmem>>, vector<1x8x128xf32>
    %1 = vector.shape_cast %0 : vector<1x8x128xf32> to vector<8x128xf32>
    %c0_2 = arith.constant 0 : index
    %c0_3 = arith.constant 0 : index
    %2 = vector.load %arg2[%c0_2, %c0_3] : memref<1x128xf32, #tpu.memory_space<vmem>>, vector<1x128xf32>
    %c0_4 = arith.constant 0 : index
    %c0_5 = arith.constant 0 : index
    %3 = vector.load %arg3[%c0_4, %c0_5] : memref<1x128xf32, #tpu.memory_space<vmem>>, vector<1x128xf32>
    %cst = arith.constant dense<0.000000e+00> : vector<8xf32>
    %4 = vector.multi_reduction <add>, %1, %cst [1] : vector<8x128xf32> to vector<8xf32>
    %5 = vector.shape_cast %4 : vector<8xf32> to vector<8x1xf32>
    %cst_6 = arith.constant 1.280000e+02 : f32
    %6 = vector.broadcast %cst_6 : f32 to vector<8x1xf32>
    %7 = arith.divf %5, %6 : vector<8x1xf32>
    %8 = vector.broadcast %7 : vector<8x1xf32> to vector<8x128xf32>
    %9 = arith.subf %1, %8 : vector<8x128xf32>
    %10 = arith.mulf %9, %9 : vector<8x128xf32>
    %cst_7 = arith.constant dense<0.000000e+00> : vector<8xf32>
    %11 = vector.multi_reduction <add>, %10, %cst_7 [1] : vector<8x128xf32> to vector<8xf32>
    %12 = vector.shape_cast %11 : vector<8xf32> to vector<8x1xf32>
    %cst_8 = arith.constant 1.280000e+02 : f32
    %13 = vector.broadcast %cst_8 : f32 to vector<8x1xf32>
    %14 = arith.divf %12, %13 : vector<8x1xf32>
    %cst_9 = arith.constant 9.99999996E-13 : f32
    %15 = vector.broadcast %cst_9 : f32 to vector<8x1xf32>
    %16 = arith.addf %14, %15 : vector<8x1xf32>
    %17 = math.rsqrt %16 : vector<8x1xf32>
    %18 = vector.broadcast %17 : vector<8x1xf32> to vector<8x128xf32>
    %19 = arith.mulf %9, %18 : vector<8x128xf32>
    %20 = vector.broadcast %2 : vector<1x128xf32> to vector<8x128xf32>
    %21 = arith.mulf %19, %20 : vector<8x128xf32>
    %22 = vector.broadcast %3 : vector<1x128xf32> to vector<8x128xf32>
    %23 = arith.addf %21, %22 : vector<8x128xf32>
    %c0_i32 = arith.constant 0 : i32
    %24 = arith.truncf %23 : vector<8x128xf32> to vector<8x128xbf16>
    %25 = vector.shape_cast %24 : vector<8x128xbf16> to vector<1x8x128xbf16>
    %26 = vector.shape_cast %25 : vector<1x8x128xbf16> to vector<1x8x128xbf16>
    %27 = vector.broadcast %26 : vector<1x8x128xbf16> to vector<4x8x128xbf16>
    %28 = arith.index_cast %c0_i32 : i32 to index
    %c0_10 = arith.constant 0 : index
    %c0_11 = arith.constant 0 : index
    %c0_12 = arith.constant 0 : index
    %29 = vector.load %arg4[%28, %c0_10, %c0_11, %c0_12] : memref<2x4x128x96xbf16, #tpu.memory_space<vmem>>, vector<1x4x128x96xbf16>
    %30 = vector.shape_cast %29 : vector<1x4x128x96xbf16> to vector<4x128x96xbf16>
    "tpu.trace_start"() <{level = 10 : i32, message = "hsc,hcd->hsd"}> : () -> ()
    %cst_13 = arith.constant dense<0.000000e+00> : vector<4x8x96xf32>
    %31 = tpu.matmul %27, %30, %cst_13 {dimension_numbers = #tpu.dot_dimension_numbers<[2], [1], [1], [2], [0, 0, 0, 1, 1, 2], [0], [0]>} : vector<4x8x128xbf16>, vector<4x128x96xbf16>, vector<4x8x96xf32> -> vector<4x8x96xf32>
    "tpu.trace_stop"() : () -> ()
    %32 = arith.index_cast %c0_i32 : i32 to index
    %c0_14 = arith.constant 0 : index
    %c0_15 = arith.constant 0 : index
    %c0_16 = arith.constant 0 : index
    %33 = vector.load %arg5[%32, %c0_14, %c0_15, %c0_16] : memref<2x4x1x96xf32, #tpu.memory_space<vmem>>, vector<1x4x1x96xf32>
    %34 = vector.shape_cast %33 : vector<1x4x1x96xf32> to vector<4x1x96xf32>
    %35 = vector.broadcast %34 : vector<4x1x96xf32> to vector<4x8x96xf32>
    %36 = arith.addf %31, %35 : vector<4x8x96xf32>
    %37 = vector.extract_strided_slice %36 {offsets = [0, 0, 0], sizes = [4, 8, 32], strides = [1, 1, 1]} : vector<4x8x96xf32> to vector<4x8x32xf32>
    %38 = vector.extract_strided_slice %36 {offsets = [0, 0, 32], sizes = [4, 8, 32], strides = [1, 1, 1]} : vector<4x8x96xf32> to vector<4x8x32xf32>
    %39 = vector.extract_strided_slice %36 {offsets = [0, 0, 64], sizes = [4, 8, 32], strides = [1, 1, 1]} : vector<4x8x96xf32> to vector<4x8x32xf32>
    %40 = arith.truncf %37 : vector<4x8x32xf32> to vector<4x8x32xbf16>
    %41 = arith.truncf %38 : vector<4x8x32xf32> to vector<4x8x32xbf16>
    "tpu.trace_start"() <{level = 10 : i32, message = "hqd,hkd->hqk"}> : () -> ()
    %cst_17 = arith.constant dense<0.000000e+00> : vector<4x8x8xf32>
    %42 = tpu.matmul %40, %41, %cst_17 {dimension_numbers = #tpu.dot_dimension_numbers<[2], [2], [1], [1], [0, 0, 0, 1, 1, 1], [0], [0]>} : vector<4x8x32xbf16>, vector<4x8x32xbf16>, vector<4x8x8xf32> -> vector<4x8x8xf32>
    "tpu.trace_stop"() : () -> ()
    %cst_18 = arith.constant dense<0xFF800000> : vector<4x8xf32>
    %43 = vector.multi_reduction <maximumf>, %42, %cst_18 [2] : vector<4x8x8xf32> to vector<4x8xf32>
    %44 = vector.shape_cast %43 : vector<4x8xf32> to vector<4x8x1xf32>
    %45 = vector.broadcast %44 : vector<4x8x1xf32> to vector<4x8x8xf32>
    %46 = arith.subf %42, %45 : vector<4x8x8xf32>
    %47 = math.exp %46 : vector<4x8x8xf32>
    %cst_19 = arith.constant dense<0.000000e+00> : vector<4x8xf32>
    %48 = vector.multi_reduction <add>, %47, %cst_19 [2] : vector<4x8x8xf32> to vector<4x8xf32>
    %49 = vector.shape_cast %48 : vector<4x8xf32> to vector<4x8x1xf32>
    %50 = vector.broadcast %49 : vector<4x8x1xf32> to vector<4x8x8xf32>
    %51 = arith.divf %47, %50 : vector<4x8x8xf32>
    %52 = arith.truncf %51 : vector<4x8x8xf32> to vector<4x8x8xbf16>
    %53 = arith.truncf %39 : vector<4x8x32xf32> to vector<4x8x32xbf16>
    "tpu.trace_start"() <{level = 10 : i32, message = "hqk,hkd->hqd"}> : () -> ()
    %cst_20 = arith.constant dense<0.000000e+00> : vector<4x8x32xf32>
    %54 = tpu.matmul %52, %53, %cst_20 {dimension_numbers = #tpu.dot_dimension_numbers<[2], [1], [1], [2], [0, 0, 0, 1, 1, 2], [0], [0]>} : vector<4x8x8xbf16>, vector<4x8x32xbf16>, vector<4x8x32xf32> -> vector<4x8x32xf32>
    "tpu.trace_stop"() : () -> ()
    %55 = arith.truncf %54 : vector<4x8x32xf32> to vector<4x8x32xbf16>
    %56 = arith.index_cast %c0_i32 : i32 to index
    %c0_21 = arith.constant 0 : index
    %c0_22 = arith.constant 0 : index
    %c0_23 = arith.constant 0 : index
    %57 = vector.load %arg6[%56, %c0_21, %c0_22, %c0_23] : memref<2x4x32x128xbf16, #tpu.memory_space<vmem>>, vector<1x4x32x128xbf16>
    %58 = vector.shape_cast %57 : vector<1x4x32x128xbf16> to vector<4x32x128xbf16>
    "tpu.trace_start"() <{level = 10 : i32, message = "hqd,hde->hqe"}> : () -> ()
    %cst_24 = arith.constant dense<0.000000e+00> : vector<4x8x128xf32>
    %59 = tpu.matmul %55, %58, %cst_24 {dimension_numbers = #tpu.dot_dimension_numbers<[2], [1], [1], [2], [0, 0, 0, 1, 1, 2], [0], [0]>} : vector<4x8x32xbf16>, vector<4x32x128xbf16>, vector<4x8x128xf32> -> vector<4x8x128xf32>
    "tpu.trace_stop"() : () -> ()
    %cst_25 = arith.constant dense<0.000000e+00> : vector<8x128xf32>
    %60 = vector.multi_reduction <add>, %59, %cst_25 [0] : vector<4x8x128xf32> to vector<8x128xf32>
    %61 = arith.index_cast %c0_i32 : i32 to index
    %c0_26 = arith.constant 0 : index
    %c0_27 = arith.constant 0 : index
    %62 = vector.load %arg7[%61, %c0_26, %c0_27] : memref<2x1x128xf32, #tpu.memory_space<vmem>>, vector<1x1x128xf32>
    %63 = vector.shape_cast %62 : vector<1x1x128xf32> to vector<1x128xf32>
    %64 = vector.broadcast %63 : vector<1x128xf32> to vector<8x128xf32>
    %65 = arith.addf %60, %64 : vector<8x128xf32>
    %66 = arith.addf %65, %23 : vector<8x128xf32>
    %67 = arith.index_cast %c0_i32 : i32 to index
    %c0_28 = arith.constant 0 : index
    %c0_29 = arith.constant 0 : index
    %68 = vector.load %arg8[%67, %c0_28, %c0_29] : memref<2x1x128xf32, #tpu.memory_space<vmem>>, vector<1x1x128xf32>
    %69 = vector.shape_cast %68 : vector<1x1x128xf32> to vector<1x128xf32>
    %70 = arith.index_cast %c0_i32 : i32 to index
    %c0_30 = arith.constant 0 : index
    %c0_31 = arith.constant 0 : index
    %71 = vector.load %arg9[%70, %c0_30, %c0_31] : memref<2x1x128xf32, #tpu.memory_space<vmem>>, vector<1x1x128xf32>
    %72 = vector.shape_cast %71 : vector<1x1x128xf32> to vector<1x128xf32>
    %cst_32 = arith.constant dense<0.000000e+00> : vector<8xf32>
    %73 = vector.multi_reduction <add>, %66, %cst_32 [1] : vector<8x128xf32> to vector<8xf32>
    %74 = vector.shape_cast %73 : vector<8xf32> to vector<8x1xf32>
    %cst_33 = arith.constant 1.280000e+02 : f32
    %75 = vector.broadcast %cst_33 : f32 to vector<8x1xf32>
    %76 = arith.divf %74, %75 : vector<8x1xf32>
    %77 = vector.broadcast %76 : vector<8x1xf32> to vector<8x128xf32>
    %78 = arith.subf %66, %77 : vector<8x128xf32>
    %79 = arith.mulf %78, %78 : vector<8x128xf32>
    %cst_34 = arith.constant dense<0.000000e+00> : vector<8xf32>
    %80 = vector.multi_reduction <add>, %79, %cst_34 [1] : vector<8x128xf32> to vector<8xf32>
    %81 = vector.shape_cast %80 : vector<8xf32> to vector<8x1xf32>
    %cst_35 = arith.constant 1.280000e+02 : f32
    %82 = vector.broadcast %cst_35 : f32 to vector<8x1xf32>
    %83 = arith.divf %81, %82 : vector<8x1xf32>
    %cst_36 = arith.constant 9.99999996E-13 : f32
    %84 = vector.broadcast %cst_36 : f32 to vector<8x1xf32>
    %85 = arith.addf %83, %84 : vector<8x1xf32>
    %86 = math.rsqrt %85 : vector<8x1xf32>
    %87 = vector.broadcast %86 : vector<8x1xf32> to vector<8x128xf32>
    %88 = arith.mulf %78, %87 : vector<8x128xf32>
    %89 = vector.broadcast %69 : vector<1x128xf32> to vector<8x128xf32>
    %90 = arith.mulf %88, %89 : vector<8x128xf32>
    %91 = vector.broadcast %72 : vector<1x128xf32> to vector<8x128xf32>
    %92 = arith.addf %90, %91 : vector<8x128xf32>
    %93 = arith.truncf %92 : vector<8x128xf32> to vector<8x128xbf16>
    %94 = arith.index_cast %c0_i32 : i32 to index
    %c0_37 = arith.constant 0 : index
    %c0_38 = arith.constant 0 : index
    %95 = vector.load %arg10[%94, %c0_37, %c0_38] : memref<2x128x512xbf16, #tpu.memory_space<vmem>>, vector<1x128x512xbf16>
    %96 = vector.shape_cast %95 : vector<1x128x512xbf16> to vector<128x512xbf16>
    %cst_39 = arith.constant dense<0.000000e+00> : vector<8x512xf32>
    %97 = tpu.matmul %93, %96, %cst_39 {dimension_numbers = #tpu.dot_dimension_numbers<[1], [0], [0], [1], [0, 0, 1, 1], [], []>} : vector<8x128xbf16>, vector<128x512xbf16>, vector<8x512xf32> -> vector<8x512xf32>
    %98 = arith.index_cast %c0_i32 : i32 to index
    %c0_40 = arith.constant 0 : index
    %c0_41 = arith.constant 0 : index
    %99 = vector.load %arg11[%98, %c0_40, %c0_41] : memref<2x1x512xf32, #tpu.memory_space<vmem>>, vector<1x1x512xf32>
    %100 = vector.shape_cast %99 : vector<1x1x512xf32> to vector<1x512xf32>
    %101 = vector.broadcast %100 : vector<1x512xf32> to vector<8x512xf32>
    %102 = arith.addf %97, %101 : vector<8x512xf32>
    %cst_42 = arith.constant 5.000000e-01 : f32
    %103 = vector.broadcast %cst_42 : f32 to vector<8x512xf32>
    %104 = arith.mulf %103, %102 : vector<8x512xf32>
    %cst_43 = arith.constant 4.471500e-02 : f32
    %105 = vector.broadcast %cst_43 : f32 to vector<8x512xf32>
    %106 = arith.mulf %105, %102 : vector<8x512xf32>
    %107 = arith.mulf %106, %102 : vector<8x512xf32>
    %108 = arith.mulf %107, %102 : vector<8x512xf32>
    %109 = arith.addf %102, %108 : vector<8x512xf32>
    %cst_44 = arith.constant 0.797884583 : f32
    %110 = vector.broadcast %cst_44 : f32 to vector<8x512xf32>
    %111 = arith.mulf %110, %109 : vector<8x512xf32>
    %112 = math.tanh %111 : vector<8x512xf32>
    %cst_45 = arith.constant 1.000000e+00 : f32
    %113 = vector.broadcast %cst_45 : f32 to vector<8x512xf32>
    %114 = arith.addf %113, %112 : vector<8x512xf32>
    %115 = arith.mulf %104, %114 : vector<8x512xf32>
    %116 = arith.truncf %115 : vector<8x512xf32> to vector<8x512xbf16>
    %117 = arith.index_cast %c0_i32 : i32 to index
    %c0_46 = arith.constant 0 : index
    %c0_47 = arith.constant 0 : index
    %118 = vector.load %arg12[%117, %c0_46, %c0_47] : memref<2x512x128xbf16, #tpu.memory_space<vmem>>, vector<1x512x128xbf16>
    %119 = vector.shape_cast %118 : vector<1x512x128xbf16> to vector<512x128xbf16>
    %cst_48 = arith.constant dense<0.000000e+00> : vector<8x128xf32>
    %120 = tpu.matmul %116, %119, %cst_48 {dimension_numbers = #tpu.dot_dimension_numbers<[1], [0], [0], [1], [0, 0, 1, 1], [], []>} : vector<8x512xbf16>, vector<512x128xbf16>, vector<8x128xf32> -> vector<8x128xf32>
    %121 = arith.index_cast %c0_i32 : i32 to index
    %c0_49 = arith.constant 0 : index
    %c0_50 = arith.constant 0 : index
    %122 = vector.load %arg13[%121, %c0_49, %c0_50] : memref<2x1x128xf32, #tpu.memory_space<vmem>>, vector<1x1x128xf32>
    %123 = vector.shape_cast %122 : vector<1x1x128xf32> to vector<1x128xf32>
    %124 = vector.broadcast %123 : vector<1x128xf32> to vector<8x128xf32>
    %125 = arith.addf %120, %124 : vector<8x128xf32>
    %126 = arith.addf %125, %92 : vector<8x128xf32>
    %127 = arith.index_cast %c0_i32 : i32 to index
    %c0_51 = arith.constant 0 : index
    %c0_52 = arith.constant 0 : index
    %128 = vector.load %arg14[%127, %c0_51, %c0_52] : memref<2x1x128xf32, #tpu.memory_space<vmem>>, vector<1x1x128xf32>
    %129 = vector.shape_cast %128 : vector<1x1x128xf32> to vector<1x128xf32>
    %130 = arith.index_cast %c0_i32 : i32 to index
    %c0_53 = arith.constant 0 : index
    %c0_54 = arith.constant 0 : index
    %131 = vector.load %arg15[%130, %c0_53, %c0_54] : memref<2x1x128xf32, #tpu.memory_space<vmem>>, vector<1x1x128xf32>
    %132 = vector.shape_cast %131 : vector<1x1x128xf32> to vector<1x128xf32>
    %cst_55 = arith.constant dense<0.000000e+00> : vector<8xf32>
    %133 = vector.multi_reduction <add>, %126, %cst_55 [1] : vector<8x128xf32> to vector<8xf32>
    %134 = vector.shape_cast %133 : vector<8xf32> to vector<8x1xf32>
    %cst_56 = arith.constant 1.280000e+02 : f32
    %135 = vector.broadcast %cst_56 : f32 to vector<8x1xf32>
    %136 = arith.divf %134, %135 : vector<8x1xf32>
    %137 = vector.broadcast %136 : vector<8x1xf32> to vector<8x128xf32>
    %138 = arith.subf %126, %137 : vector<8x128xf32>
    %139 = arith.mulf %138, %138 : vector<8x128xf32>
    %cst_57 = arith.constant dense<0.000000e+00> : vector<8xf32>
    %140 = vector.multi_reduction <add>, %139, %cst_57 [1] : vector<8x128xf32> to vector<8xf32>
    %141 = vector.shape_cast %140 : vector<8xf32> to vector<8x1xf32>
    %cst_58 = arith.constant 1.280000e+02 : f32
    %142 = vector.broadcast %cst_58 : f32 to vector<8x1xf32>
    %143 = arith.divf %141, %142 : vector<8x1xf32>
    %cst_59 = arith.constant 9.99999996E-13 : f32
    %144 = vector.broadcast %cst_59 : f32 to vector<8x1xf32>
    %145 = arith.addf %143, %144 : vector<8x1xf32>
    %146 = math.rsqrt %145 : vector<8x1xf32>
    %147 = vector.broadcast %146 : vector<8x1xf32> to vector<8x128xf32>
    %148 = arith.mulf %138, %147 : vector<8x128xf32>
    %149 = vector.broadcast %129 : vector<1x128xf32> to vector<8x128xf32>
    %150 = arith.mulf %148, %149 : vector<8x128xf32>
    %151 = vector.broadcast %132 : vector<1x128xf32> to vector<8x128xf32>
    %152 = arith.addf %150, %151 : vector<8x128xf32>
    %c1_i32 = arith.constant 1 : i32
    %153 = arith.truncf %152 : vector<8x128xf32> to vector<8x128xbf16>
    %154 = vector.shape_cast %153 : vector<8x128xbf16> to vector<1x8x128xbf16>
    %155 = vector.shape_cast %154 : vector<1x8x128xbf16> to vector<1x8x128xbf16>
    %156 = vector.broadcast %155 : vector<1x8x128xbf16> to vector<4x8x128xbf16>
    %157 = arith.index_cast %c1_i32 : i32 to index
    %c0_60 = arith.constant 0 : index
    %c0_61 = arith.constant 0 : index
    %c0_62 = arith.constant 0 : index
    %158 = vector.load %arg4[%157, %c0_60, %c0_61, %c0_62] : memref<2x4x128x96xbf16, #tpu.memory_space<vmem>>, vector<1x4x128x96xbf16>
    %159 = vector.shape_cast %158 : vector<1x4x128x96xbf16> to vector<4x128x96xbf16>
    "tpu.trace_start"() <{level = 10 : i32, message = "hsc,hcd->hsd"}> : () -> ()
    %cst_63 = arith.constant dense<0.000000e+00> : vector<4x8x96xf32>
    %160 = tpu.matmul %156, %159, %cst_63 {dimension_numbers = #tpu.dot_dimension_numbers<[2], [1], [1], [2], [0, 0, 0, 1, 1, 2], [0], [0]>} : vector<4x8x128xbf16>, vector<4x128x96xbf16>, vector<4x8x96xf32> -> vector<4x8x96xf32>
    "tpu.trace_stop"() : () -> ()
    %161 = arith.index_cast %c1_i32 : i32 to index
    %c0_64 = arith.constant 0 : index
    %c0_65 = arith.constant 0 : index
    %c0_66 = arith.constant 0 : index
    %162 = vector.load %arg5[%161, %c0_64, %c0_65, %c0_66] : memref<2x4x1x96xf32, #tpu.memory_space<vmem>>, vector<1x4x1x96xf32>
    %163 = vector.shape_cast %162 : vector<1x4x1x96xf32> to vector<4x1x96xf32>
    %164 = vector.broadcast %163 : vector<4x1x96xf32> to vector<4x8x96xf32>
    %165 = arith.addf %160, %164 : vector<4x8x96xf32>
    %166 = vector.extract_strided_slice %165 {offsets = [0, 0, 0], sizes = [4, 8, 32], strides = [1, 1, 1]} : vector<4x8x96xf32> to vector<4x8x32xf32>
    %167 = vector.extract_strided_slice %165 {offsets = [0, 0, 32], sizes = [4, 8, 32], strides = [1, 1, 1]} : vector<4x8x96xf32> to vector<4x8x32xf32>
    %168 = vector.extract_strided_slice %165 {offsets = [0, 0, 64], sizes = [4, 8, 32], strides = [1, 1, 1]} : vector<4x8x96xf32> to vector<4x8x32xf32>
    %169 = arith.truncf %166 : vector<4x8x32xf32> to vector<4x8x32xbf16>
    %170 = arith.truncf %167 : vector<4x8x32xf32> to vector<4x8x32xbf16>
    "tpu.trace_start"() <{level = 10 : i32, message = "hqd,hkd->hqk"}> : () -> ()
    %cst_67 = arith.constant dense<0.000000e+00> : vector<4x8x8xf32>
    %171 = tpu.matmul %169, %170, %cst_67 {dimension_numbers = #tpu.dot_dimension_numbers<[2], [2], [1], [1], [0, 0, 0, 1, 1, 1], [0], [0]>} : vector<4x8x32xbf16>, vector<4x8x32xbf16>, vector<4x8x8xf32> -> vector<4x8x8xf32>
    "tpu.trace_stop"() : () -> ()
    %cst_68 = arith.constant dense<0xFF800000> : vector<4x8xf32>
    %172 = vector.multi_reduction <maximumf>, %171, %cst_68 [2] : vector<4x8x8xf32> to vector<4x8xf32>
    %173 = vector.shape_cast %172 : vector<4x8xf32> to vector<4x8x1xf32>
    %174 = vector.broadcast %173 : vector<4x8x1xf32> to vector<4x8x8xf32>
    %175 = arith.subf %171, %174 : vector<4x8x8xf32>
    %176 = math.exp %175 : vector<4x8x8xf32>
    %cst_69 = arith.constant dense<0.000000e+00> : vector<4x8xf32>
    %177 = vector.multi_reduction <add>, %176, %cst_69 [2] : vector<4x8x8xf32> to vector<4x8xf32>
    %178 = vector.shape_cast %177 : vector<4x8xf32> to vector<4x8x1xf32>
    %179 = vector.broadcast %178 : vector<4x8x1xf32> to vector<4x8x8xf32>
    %180 = arith.divf %176, %179 : vector<4x8x8xf32>
    %181 = arith.truncf %180 : vector<4x8x8xf32> to vector<4x8x8xbf16>
    %182 = arith.truncf %168 : vector<4x8x32xf32> to vector<4x8x32xbf16>
    "tpu.trace_start"() <{level = 10 : i32, message = "hqk,hkd->hqd"}> : () -> ()
    %cst_70 = arith.constant dense<0.000000e+00> : vector<4x8x32xf32>
    %183 = tpu.matmul %181, %182, %cst_70 {dimension_numbers = #tpu.dot_dimension_numbers<[2], [1], [1], [2], [0, 0, 0, 1, 1, 2], [0], [0]>} : vector<4x8x8xbf16>, vector<4x8x32xbf16>, vector<4x8x32xf32> -> vector<4x8x32xf32>
    "tpu.trace_stop"() : () -> ()
    %184 = arith.truncf %183 : vector<4x8x32xf32> to vector<4x8x32xbf16>
    %185 = arith.index_cast %c1_i32 : i32 to index
    %c0_71 = arith.constant 0 : index
    %c0_72 = arith.constant 0 : index
    %c0_73 = arith.constant 0 : index
    %186 = vector.load %arg6[%185, %c0_71, %c0_72, %c0_73] : memref<2x4x32x128xbf16, #tpu.memory_space<vmem>>, vector<1x4x32x128xbf16>
    %187 = vector.shape_cast %186 : vector<1x4x32x128xbf16> to vector<4x32x128xbf16>
    "tpu.trace_start"() <{level = 10 : i32, message = "hqd,hde->hqe"}> : () -> ()
    %cst_74 = arith.constant dense<0.000000e+00> : vector<4x8x128xf32>
    %188 = tpu.matmul %184, %187, %cst_74 {dimension_numbers = #tpu.dot_dimension_numbers<[2], [1], [1], [2], [0, 0, 0, 1, 1, 2], [0], [0]>} : vector<4x8x32xbf16>, vector<4x32x128xbf16>, vector<4x8x128xf32> -> vector<4x8x128xf32>
    "tpu.trace_stop"() : () -> ()
    %cst_75 = arith.constant dense<0.000000e+00> : vector<8x128xf32>
    %189 = vector.multi_reduction <add>, %188, %cst_75 [0] : vector<4x8x128xf32> to vector<8x128xf32>
    %190 = arith.index_cast %c1_i32 : i32 to index
    %c0_76 = arith.constant 0 : index
    %c0_77 = arith.constant 0 : index
    %191 = vector.load %arg7[%190, %c0_76, %c0_77] : memref<2x1x128xf32, #tpu.memory_space<vmem>>, vector<1x1x128xf32>
    %192 = vector.shape_cast %191 : vector<1x1x128xf32> to vector<1x128xf32>
    %193 = vector.broadcast %192 : vector<1x128xf32> to vector<8x128xf32>
    %194 = arith.addf %189, %193 : vector<8x128xf32>
    %195 = arith.addf %194, %152 : vector<8x128xf32>
    %196 = arith.index_cast %c1_i32 : i32 to index
    %c0_78 = arith.constant 0 : index
    %c0_79 = arith.constant 0 : index
    %197 = vector.load %arg8[%196, %c0_78, %c0_79] : memref<2x1x128xf32, #tpu.memory_space<vmem>>, vector<1x1x128xf32>
    %198 = vector.shape_cast %197 : vector<1x1x128xf32> to vector<1x128xf32>
    %199 = arith.index_cast %c1_i32 : i32 to index
    %c0_80 = arith.constant 0 : index
    %c0_81 = arith.constant 0 : index
    %200 = vector.load %arg9[%199, %c0_80, %c0_81] : memref<2x1x128xf32, #tpu.memory_space<vmem>>, vector<1x1x128xf32>
    %201 = vector.shape_cast %200 : vector<1x1x128xf32> to vector<1x128xf32>
    %cst_82 = arith.constant dense<0.000000e+00> : vector<8xf32>
    %202 = vector.multi_reduction <add>, %195, %cst_82 [1] : vector<8x128xf32> to vector<8xf32>
    %203 = vector.shape_cast %202 : vector<8xf32> to vector<8x1xf32>
    %cst_83 = arith.constant 1.280000e+02 : f32
    %204 = vector.broadcast %cst_83 : f32 to vector<8x1xf32>
    %205 = arith.divf %203, %204 : vector<8x1xf32>
    %206 = vector.broadcast %205 : vector<8x1xf32> to vector<8x128xf32>
    %207 = arith.subf %195, %206 : vector<8x128xf32>
    %208 = arith.mulf %207, %207 : vector<8x128xf32>
    %cst_84 = arith.constant dense<0.000000e+00> : vector<8xf32>
    %209 = vector.multi_reduction <add>, %208, %cst_84 [1] : vector<8x128xf32> to vector<8xf32>
    %210 = vector.shape_cast %209 : vector<8xf32> to vector<8x1xf32>
    %cst_85 = arith.constant 1.280000e+02 : f32
    %211 = vector.broadcast %cst_85 : f32 to vector<8x1xf32>
    %212 = arith.divf %210, %211 : vector<8x1xf32>
    %cst_86 = arith.constant 9.99999996E-13 : f32
    %213 = vector.broadcast %cst_86 : f32 to vector<8x1xf32>
    %214 = arith.addf %212, %213 : vector<8x1xf32>
    %215 = math.rsqrt %214 : vector<8x1xf32>
    %216 = vector.broadcast %215 : vector<8x1xf32> to vector<8x128xf32>
    %217 = arith.mulf %207, %216 : vector<8x128xf32>
    %218 = vector.broadcast %198 : vector<1x128xf32> to vector<8x128xf32>
    %219 = arith.mulf %217, %218 : vector<8x128xf32>
    %220 = vector.broadcast %201 : vector<1x128xf32> to vector<8x128xf32>
    %221 = arith.addf %219, %220 : vector<8x128xf32>
    %222 = arith.truncf %221 : vector<8x128xf32> to vector<8x128xbf16>
    %223 = arith.index_cast %c1_i32 : i32 to index
    %c0_87 = arith.constant 0 : index
    %c0_88 = arith.constant 0 : index
    %224 = vector.load %arg10[%223, %c0_87, %c0_88] : memref<2x128x512xbf16, #tpu.memory_space<vmem>>, vector<1x128x512xbf16>
    %225 = vector.shape_cast %224 : vector<1x128x512xbf16> to vector<128x512xbf16>
    %cst_89 = arith.constant dense<0.000000e+00> : vector<8x512xf32>
    %226 = tpu.matmul %222, %225, %cst_89 {dimension_numbers = #tpu.dot_dimension_numbers<[1], [0], [0], [1], [0, 0, 1, 1], [], []>} : vector<8x128xbf16>, vector<128x512xbf16>, vector<8x512xf32> -> vector<8x512xf32>
    %227 = arith.index_cast %c1_i32 : i32 to index
    %c0_90 = arith.constant 0 : index
    %c0_91 = arith.constant 0 : index
    %228 = vector.load %arg11[%227, %c0_90, %c0_91] : memref<2x1x512xf32, #tpu.memory_space<vmem>>, vector<1x1x512xf32>
    %229 = vector.shape_cast %228 : vector<1x1x512xf32> to vector<1x512xf32>
    %230 = vector.broadcast %229 : vector<1x512xf32> to vector<8x512xf32>
    %231 = arith.addf %226, %230 : vector<8x512xf32>
    %cst_92 = arith.constant 5.000000e-01 : f32
    %232 = vector.broadcast %cst_92 : f32 to vector<8x512xf32>
    %233 = arith.mulf %232, %231 : vector<8x512xf32>
    %cst_93 = arith.constant 4.471500e-02 : f32
    %234 = vector.broadcast %cst_93 : f32 to vector<8x512xf32>
    %235 = arith.mulf %234, %231 : vector<8x512xf32>
    %236 = arith.mulf %235, %231 : vector<8x512xf32>
    %237 = arith.mulf %236, %231 : vector<8x512xf32>
    %238 = arith.addf %231, %237 : vector<8x512xf32>
    %cst_94 = arith.constant 0.797884583 : f32
    %239 = vector.broadcast %cst_94 : f32 to vector<8x512xf32>
    %240 = arith.mulf %239, %238 : vector<8x512xf32>
    %241 = math.tanh %240 : vector<8x512xf32>
    %cst_95 = arith.constant 1.000000e+00 : f32
    %242 = vector.broadcast %cst_95 : f32 to vector<8x512xf32>
    %243 = arith.addf %242, %241 : vector<8x512xf32>
    %244 = arith.mulf %233, %243 : vector<8x512xf32>
    %245 = arith.truncf %244 : vector<8x512xf32> to vector<8x512xbf16>
    %246 = arith.index_cast %c1_i32 : i32 to index
    %c0_96 = arith.constant 0 : index
    %c0_97 = arith.constant 0 : index
    %247 = vector.load %arg12[%246, %c0_96, %c0_97] : memref<2x512x128xbf16, #tpu.memory_space<vmem>>, vector<1x512x128xbf16>
    %248 = vector.shape_cast %247 : vector<1x512x128xbf16> to vector<512x128xbf16>
    %cst_98 = arith.constant dense<0.000000e+00> : vector<8x128xf32>
    %249 = tpu.matmul %245, %248, %cst_98 {dimension_numbers = #tpu.dot_dimension_numbers<[1], [0], [0], [1], [0, 0, 1, 1], [], []>} : vector<8x512xbf16>, vector<512x128xbf16>, vector<8x128xf32> -> vector<8x128xf32>
    %250 = arith.index_cast %c1_i32 : i32 to index
    %c0_99 = arith.constant 0 : index
    %c0_100 = arith.constant 0 : index
    %251 = vector.load %arg13[%250, %c0_99, %c0_100] : memref<2x1x128xf32, #tpu.memory_space<vmem>>, vector<1x1x128xf32>
    %252 = vector.shape_cast %251 : vector<1x1x128xf32> to vector<1x128xf32>
    %253 = vector.broadcast %252 : vector<1x128xf32> to vector<8x128xf32>
    %254 = arith.addf %249, %253 : vector<8x128xf32>
    %255 = arith.addf %254, %221 : vector<8x128xf32>
    %256 = arith.index_cast %c1_i32 : i32 to index
    %c0_101 = arith.constant 0 : index
    %c0_102 = arith.constant 0 : index
    %257 = vector.load %arg14[%256, %c0_101, %c0_102] : memref<2x1x128xf32, #tpu.memory_space<vmem>>, vector<1x1x128xf32>
    %258 = vector.shape_cast %257 : vector<1x1x128xf32> to vector<1x128xf32>
    %259 = arith.index_cast %c1_i32 : i32 to index
    %c0_103 = arith.constant 0 : index
    %c0_104 = arith.constant 0 : index
    %260 = vector.load %arg15[%259, %c0_103, %c0_104] : memref<2x1x128xf32, #tpu.memory_space<vmem>>, vector<1x1x128xf32>
    %261 = vector.shape_cast %260 : vector<1x1x128xf32> to vector<1x128xf32>
    %cst_105 = arith.constant dense<0.000000e+00> : vector<8xf32>
    %262 = vector.multi_reduction <add>, %255, %cst_105 [1] : vector<8x128xf32> to vector<8xf32>
    %263 = vector.shape_cast %262 : vector<8xf32> to vector<8x1xf32>
    %cst_106 = arith.constant 1.280000e+02 : f32
    %264 = vector.broadcast %cst_106 : f32 to vector<8x1xf32>
    %265 = arith.divf %263, %264 : vector<8x1xf32>
    %266 = vector.broadcast %265 : vector<8x1xf32> to vector<8x128xf32>
    %267 = arith.subf %255, %266 : vector<8x128xf32>
    %268 = arith.mulf %267, %267 : vector<8x128xf32>
    %cst_107 = arith.constant dense<0.000000e+00> : vector<8xf32>
    %269 = vector.multi_reduction <add>, %268, %cst_107 [1] : vector<8x128xf32> to vector<8xf32>
    %270 = vector.shape_cast %269 : vector<8xf32> to vector<8x1xf32>
    %cst_108 = arith.constant 1.280000e+02 : f32
    %271 = vector.broadcast %cst_108 : f32 to vector<8x1xf32>
    %272 = arith.divf %270, %271 : vector<8x1xf32>
    %cst_109 = arith.constant 9.99999996E-13 : f32
    %273 = vector.broadcast %cst_109 : f32 to vector<8x1xf32>
    %274 = arith.addf %272, %273 : vector<8x1xf32>
    %275 = math.rsqrt %274 : vector<8x1xf32>
    %276 = vector.broadcast %275 : vector<8x1xf32> to vector<8x128xf32>
    %277 = arith.mulf %267, %276 : vector<8x128xf32>
    %278 = vector.broadcast %258 : vector<1x128xf32> to vector<8x128xf32>
    %279 = arith.mulf %277, %278 : vector<8x128xf32>
    %280 = vector.broadcast %261 : vector<1x128xf32> to vector<8x128xf32>
    %281 = arith.addf %279, %280 : vector<8x128xf32>
    %c2_i32 = arith.constant 2 : i32
    %c0_110 = arith.constant 0 : index
    %c0_111 = arith.constant 0 : index
    %c0_112 = arith.constant 0 : index
    %282 = vector.load %arg16[%c0_110, %c0_111, %c0_112] : memref<1x8x128xf32, #tpu.memory_space<vmem>>, vector<1x8x128xf32>
    %283 = vector.shape_cast %282 : vector<1x8x128xf32> to vector<8x128xf32>
    %284 = vector.shape_cast %281 : vector<8x128xf32> to vector<1x8x128xf32>
    tpu.vector_store %arg16[%c0_110, %c0_111, %c0_112], %284 {strides = array<i32>} : memref<1x8x128xf32, #tpu.memory_space<vmem>>, vector<1x8x128xf32>,
    return
  }
  func.func @transform_0(%arg0: i32) -> (i32, i32, i32) {
    %c0_i32 = arith.constant 0 : i32
    %c0_i32_0 = arith.constant 0 : i32
    %c0_i32_1 = arith.constant 0 : i32
    return %arg0, %c0_i32, %c0_i32_0 : i32, i32, i32
  }
  func.func @transform_1(%arg0: i32) -> (i32, i32) {
    %c0_i32 = arith.constant 0 : i32
    %c0_i32_0 = arith.constant 0 : i32
    %c0_i32_1 = arith.constant 0 : i32
    return %c0_i32, %c0_i32_0 : i32, i32
  }
  func.func @transform_2(%arg0: i32) -> (i32, i32) {
    %c0_i32 = arith.constant 0 : i32
    %c0_i32_0 = arith.constant 0 : i32
    %c0_i32_1 = arith.constant 0 : i32
    return %c0_i32, %c0_i32_0 : i32, i32
  }
  func.func @transform_3(%arg0: i32) -> (i32, i32, i32, i32) {
    %c0_i32 = arith.constant 0 : i32
    %c0_i32_0 = arith.constant 0 : i32
    %c0_i32_1 = arith.constant 0 : i32
    %c0_i32_2 = arith.constant 0 : i32
    %c0_i32_3 = arith.constant 0 : i32
    return %c0_i32, %c0_i32_0, %c0_i32_1, %c0_i32_2 : i32, i32, i32, i32
  }
  func.func @transform_4(%arg0: i32) -> (i32, i32, i32, i32) {
    %c0_i32 = arith.constant 0 : i32
    %c0_i32_0 = arith.constant 0 : i32
    %c0_i32_1 = arith.constant 0 : i32
    %c0_i32_2 = arith.constant 0 : i32
    %c0_i32_3 = arith.constant 0 : i32
    return %c0_i32, %c0_i32_0, %c0_i32_1, %c0_i32_2 : i32, i32, i32, i32
  }
  func.func @transform_5(%arg0: i32) -> (i32, i32, i32, i32) {
    %c0_i32 = arith.constant 0 : i32
    %c0_i32_0 = arith.constant 0 : i32
    %c0_i32_1 = arith.constant 0 : i32
    %c0_i32_2 = arith.constant 0 : i32
    %c0_i32_3 = arith.constant 0 : i32
    return %c0_i32, %c0_i32_0, %c0_i32_1, %c0_i32_2 : i32, i32, i32, i32
  }
  func.func @transform_6(%arg0: i32) -> (i32, i32, i32) {
    %c0_i32 = arith.constant 0 : i32
    %c0_i32_0 = arith.constant 0 : i32
    %c0_i32_1 = arith.constant 0 : i32
    %c0_i32_2 = arith.constant 0 : i32
    return %c0_i32, %c0_i32_0, %c0_i32_1 : i32, i32, i32
  }
  func.func @transform_7(%arg0: i32) -> (i32, i32, i32) {
    %c0_i32 = arith.constant 0 : i32
    %c0_i32_0 = arith.constant 0 : i32
    %c0_i32_1 = arith.constant 0 : i32
    %c0_i32_2 = arith.constant 0 : i32
    return %c0_i32, %c0_i32_0, %c0_i32_1 : i32, i32, i32
  }
  func.func @transform_8(%arg0: i32) -> (i32, i32, i32) {
    %c0_i32 = arith.constant 0 : i32
    %c0_i32_0 = arith.constant 0 : i32
    %c0_i32_1 = arith.constant 0 : i32
    %c0_i32_2 = arith.constant 0 : i32
    return %c0_i32, %c0_i32_0, %c0_i32_1 : i32, i32, i32
  }
  func.func @transform_9(%arg0: i32) -> (i32, i32, i32) {
    %c0_i32 = arith.constant 0 : i32
    %c0_i32_0 = arith.constant 0 : i32
    %c0_i32_1 = arith.constant 0 : i32
    %c0_i32_2 = arith.constant 0 : i32
    return %c0_i32, %c0_i32_0, %c0_i32_1 : i32, i32, i32
  }
  func.func @transform_10(%arg0: i32) -> (i32, i32, i32) {
    %c0_i32 = arith.constant 0 : i32
    %c0_i32_0 = arith.constant 0 : i32
    %c0_i32_1 = arith.constant 0 : i32
    %c0_i32_2 = arith.constant 0 : i32
    return %c0_i32, %c0_i32_0, %c0_i32_1 : i32, i32, i32
  }
  func.func @transform_11(%arg0: i32) -> (i32, i32, i32) {
    %c0_i32 = arith.constant 0 : i32
    %c0_i32_0 = arith.constant 0 : i32
    %c0_i32_1 = arith.constant 0 : i32
    %c0_i32_2 = arith.constant 0 : i32
    return %c0_i32, %c0_i32_0, %c0_i32_1 : i32, i32, i32
  }
  func.func @transform_12(%arg0: i32) -> (i32, i32, i32) {
    %c0_i32 = arith.constant 0 : i32
    %c0_i32_0 = arith.constant 0 : i32
    %c0_i32_1 = arith.constant 0 : i32
    %c0_i32_2 = arith.constant 0 : i32
    return %c0_i32, %c0_i32_0, %c0_i32_1 : i32, i32, i32
  }
  func.func @transform_13(%arg0: i32) -> (i32, i32, i32) {
    %c0_i32 = arith.constant 0 : i32
    %c0_i32_0 = arith.constant 0 : i32
    %c0_i32_1 = arith.constant 0 : i32
    %c0_i32_2 = arith.constant 0 : i32
    return %c0_i32, %c0_i32_0, %c0_i32_1 : i32, i32, i32
  }
  func.func @transform_14(%arg0: i32) -> (i32, i32, i32) {
    %c0_i32 = arith.constant 0 : i32
    %c0_i32_0 = arith.constant 0 : i32
    %c0_i32_1 = arith.constant 0 : i32
    %c0_i32_2 = arith.constant 0 : i32
    return %c0_i32, %c0_i32_0, %c0_i32_1 : i32, i32, i32
  }
  func.func @transform_15(%arg0: i32) -> (i32, i32, i32) {
    %c0_i32 = arith.constant 0 : i32
    %c0_i32_0 = arith.constant 0 : i32
    %c0_i32_1 = arith.constant 0 : i32
    return %arg0, %c0_i32, %c0_i32_0 : i32, i32, i32
  }
}

</mosaic_0001>

<llo_original>
// kernel: bert_representer_forward.1
$region0: #{bert_representer_forward.1}
  #allocation0 [shape = 'u32[]', space=smem, size = 0x4, offset = 0x4, fixed_abs, tag = 'smem constant byte address 0x4 - core index']
  #allocation1 [shape = 'u32[144,128]{1,0:T(1,128)}', space=vmem, size = 0x12000, scoped, tag = 'internal scratch']
  %s0 = inlined_call_operand.vmem [shape: f32[2,8,128], index: 0, kind: input, shape index: {}]
  %s1 = inlined_call_operand.vmem [shape: f32[1,128], index: 1, kind: input, shape index: {}]
  %s2 = inlined_call_operand.vmem [shape: f32[1,128], index: 2, kind: input, shape index: {}]
  %s3 = inlined_call_operand.vmem [shape: bf16[2,4,128,96], index: 3, kind: input, shape index: {}]
  %s4 = inlined_call_operand.vmem [shape: f32[2,4,1,96], index: 4, kind: input, shape index: {}]
  %s5 = inlined_call_operand.vmem [shape: bf16[2,4,32,128], index: 5, kind: input, shape index: {}]
  %s6 = inlined_call_operand.vmem [shape: f32[2,1,128], index: 6, kind: input, shape index: {}]
  %s7 = inlined_call_operand.vmem [shape: f32[2,1,128], index: 7, kind: input, shape index: {}]
  %s8 = inlined_call_operand.vmem [shape: f32[2,1,128], index: 8, kind: input, shape index: {}]
  %s9 = inlined_call_operand.vmem [shape: bf16[2,128,512], index: 9, kind: input, shape index: {}]
  %s10 = inlined_call_operand.vmem [shape: f32[2,1,512], index: 10, kind: input, shape index: {}]
  %s11 = inlined_call_operand.vmem [shape: bf16[2,512,128], index: 11, kind: input, shape index: {}]
  %s12 = inlined_call_operand.vmem [shape: f32[2,1,128], index: 12, kind: input, shape index: {}]
  %s13 = inlined_call_operand.vmem [shape: f32[2,1,128], index: 13, kind: input, shape index: {}]
  %s14 = inlined_call_operand.vmem [shape: f32[2,1,128], index: 14, kind: input, shape index: {}]
  %s15 = inlined_call_operand.hbm [shape: f32[2,8,128], index: 15, kind: output, shape index: {}]
  %s16 = sld [smem:[#allocation0]]
  $region93: #{bert_representer_forward.1} parent=0
    _
  %s18 = ssub.s32 1, %s16
  %s19 = scalar_select 0, %s18, %s16
  $region1: #{bert_representer_forward.1} parent=0
    #allocation2 [shape = 'u8[8192]{0}', space=vmem, size = 0x2000, scoped, tag = 'output window, operand 0']
    #allocation3 [shape = 's32[2]{0}', space=sflag, size = 0x8, scoped, tag = 'scoped memory for bert_representer_forward.1']
    %20 = vsyncpa [#allocation3], 0
    %s21 = scalar_lea.sflag [#allocation3], 1
    %22 = vsyncpa %s21, 0
    loop: start=0, step=1, limit=4
    $region2: #{bert_representer_forward.1} parent=1 // loop_pre_header
      _
    $region3: #{bert_representer_forward.1} parent=1 // loop_header
      %s24 = sphi 0, %s28
      %p25 = scmp.ge.s32.totalorder %s24, 4
      %s34 = sphi 0, %s36
      %s37 = sphi 0, %s34
      %s38 = sphi 0, %s37
      %s54 = sphi 0, %s38
      %s58 = sphi 0, %s58
      %s60 = sphi 0, %s58
      %s61 = sphi 0, %s60
      %s75 = sphi 0, %s61
      %s79 = sphi 0, %s79
      %s81 = sphi 0, %s79
      %s82 = sphi 0, %s81
      %s96 = sphi 0, %s82
      %s100 = sphi 0, %s100
      %s102 = sphi 0, %s100
      %s103 = sphi 0, %s102
      %s117 = sphi 0, %s103
      %s121 = sphi 0, %s121
      %s123 = sphi 0, %s121
      %s124 = sphi 0, %s123
      %s138 = sphi 0, %s124
      %s142 = sphi 0, %s142
      %s144 = sphi 0, %s142
      %s145 = sphi 0, %s144
      %s159 = sphi 0, %s145
      %s163 = sphi 0, %s163
      %s165 = sphi 0, %s163
      %s166 = sphi 0, %s165
      %s180 = sphi 0, %s166
      %s184 = sphi 0, %s184
      %s186 = sphi 0, %s184
      %s187 = sphi 0, %s186
      %s201 = sphi 0, %s187
      %s205 = sphi 0, %s205
      %s207 = sphi 0, %s205
      %s208 = sphi 0, %s207
      %s222 = sphi 0, %s208
      %s226 = sphi 0, %s226
      %s228 = sphi 0, %s226
      %s229 = sphi 0, %s228
      %s243 = sphi 0, %s229
      %s247 = sphi 0, %s247
      %s249 = sphi 0, %s247
      %s250 = sphi 0, %s249
      %s264 = sphi 0, %s250
      %s268 = sphi 0, %s268
      %s270 = sphi 0, %s268
      %s271 = sphi 0, %s270
      %s285 = sphi 0, %s271
      %s289 = sphi 0, %s289
      %s291 = sphi 0, %s289
      %s292 = sphi 0, %s291
      %s306 = sphi 0, %s292
      %s310 = sphi 0, %s310
      %s312 = sphi 0, %s310
      %s313 = sphi 0, %s312
      %s327 = sphi 0, %s313
      %s331 = sphi 0, %s331
      %s333 = sphi 0, %s331
      %s334 = sphi 0, %s333
      %s348 = sphi 0, %s334
      %s354 = sphi 0, %s356
      %s357 = sphi 0, %s354
      %s358 = sphi 0, %s357
      %s374 = sphi 0, %s358
    $region4: #{bert_representer_forward.1} parent=1 // loop_header_branch
      %27 = sbr.rel (%p25) target = $region8
    $region5: #{bert_representer_forward.1} parent=1 // loop_body
      %s29 = ssub.s32 %s24, 1
      %s30 = ssub.s32 %s24, 2
      %s31 = sadd.s32 %s24, 1
      %s32 = ssub.s32 %s24, %s31
      %p33 = scmp.eq.s32.totalorder %s32, 0
      %s35 = sadd.s32 %s34, 1
      %s36 = scalar_select %p33, %s34, %s35
      %p39 = pneg %p33
      %p40 = scmp.eq.s32.totalorder %s24, 1
      %p41 = por %p39, %p40
      %p42 = scmp.ne.s32.totalorder %s34, %s37
      %p43 = scmp.eq.s32.totalorder %s24, 0
      %p44 = por %p42, %p43
      %p45 = scmp.ne.s32.totalorder %s34, %s37
      %p46 = scmp.eq.s32.totalorder %s29, 1
      %p47 = por %p45, %p46
      %p48 = scmp.ne.s32.totalorder %s37, %s38
      %p49 = scmp.eq.s32.totalorder %s29, 0
      %p50 = por %p48, %p49
      %p51 = scmp.ne.s32.totalorder %s37, %s38
      %p52 = scmp.eq.s32.totalorder %s30, 1
      %p53 = por %p51, %p52
      %p55 = scmp.ne.s32.totalorder %s38, %s54
      %p56 = scmp.eq.s32.totalorder %s30, 0
      %p57 = por %p55, %p56
      %s59 = sadd.s32 %s58, 1
      %p62 = scmp.eq.s32.totalorder %s24, 1
      %p63 = scmp.ne.s32.totalorder %s58, %s60
      %p64 = scmp.eq.s32.totalorder %s24, 0
      %p65 = por %p63, %p64
      %p66 = scmp.ne.s32.totalorder %s58, %s60
      %p67 = scmp.eq.s32.totalorder %s29, 1
      %p68 = por %p66, %p67
      %p69 = scmp.ne.s32.totalorder %s60, %s61
      %p70 = scmp.eq.s32.totalorder %s29, 0
      %p71 = por %p69, %p70
      %p72 = scmp.ne.s32.totalorder %s60, %s61
      %p73 = scmp.eq.s32.totalorder %s30, 1
      %p74 = por %p72, %p73
      %p76 = scmp.ne.s32.totalorder %s61, %s75
      %p77 = scmp.eq.s32.totalorder %s30, 0
      %p78 = por %p76, %p77
      %s80 = sadd.s32 %s79, 1
      %p83 = scmp.eq.s32.totalorder %s24, 1
      %p84 = scmp.ne.s32.totalorder %s79, %s81
      %p85 = scmp.eq.s32.totalorder %s24, 0
      %p86 = por %p84, %p85
      %p87 = scmp.ne.s32.totalorder %s79, %s81
      %p88 = scmp.eq.s32.totalorder %s29, 1
      %p89 = por %p87, %p88
      %p90 = scmp.ne.s32.totalorder %s81, %s82
      %p91 = scmp.eq.s32.totalorder %s29, 0
      %p92 = por %p90, %p91
      %p93 = scmp.ne.s32.totalorder %s81, %s82
      %p94 = scmp.eq.s32.totalorder %s30, 1
      %p95 = por %p93, %p94
      %p97 = scmp.ne.s32.totalorder %s82, %s96
      %p98 = scmp.eq.s32.totalorder %s30, 0
      %p99 = por %p97, %p98
      %s101 = sadd.s32 %s100, 1
      %p104 = scmp.eq.s32.totalorder %s24, 1
      %p105 = scmp.ne.s32.totalorder %s100, %s102
      %p106 = scmp.eq.s32.totalorder %s24, 0
      %p107 = por %p105, %p106
      %p108 = scmp.ne.s32.totalorder %s100, %s102
      %p109 = scmp.eq.s32.totalorder %s29, 1
      %p110 = por %p108, %p109
      %p111 = scmp.ne.s32.totalorder %s102, %s103
      %p112 = scmp.eq.s32.totalorder %s29, 0
      %p113 = por %p111, %p112
      %p114 = scmp.ne.s32.totalorder %s102, %s103
      %p115 = scmp.eq.s32.totalorder %s30, 1
      %p116 = por %p114, %p115
      %p118 = scmp.ne.s32.totalorder %s103, %s117
      %p119 = scmp.eq.s32.totalorder %s30, 0
      %p120 = por %p118, %p119
      %s122 = sadd.s32 %s121, 1
      %p125 = scmp.eq.s32.totalorder %s24, 1
      %p126 = scmp.ne.s32.totalorder %s121, %s123
      %p127 = scmp.eq.s32.totalorder %s24, 0
      %p128 = por %p126, %p127
      %p129 = scmp.ne.s32.totalorder %s121, %s123
      %p130 = scmp.eq.s32.totalorder %s29, 1
      %p131 = por %p129, %p130
      %p132 = scmp.ne.s32.totalorder %s123, %s124
      %p133 = scmp.eq.s32.totalorder %s29, 0
      %p134 = por %p132, %p133
      %p135 = scmp.ne.s32.totalorder %s123, %s124
      %p136 = scmp.eq.s32.totalorder %s30, 1
      %p137 = por %p135, %p136
      %p139 = scmp.ne.s32.totalorder %s124, %s138
      %p140 = scmp.eq.s32.totalorder %s30, 0
      %p141 = por %p139, %p140
      %s143 = sadd.s32 %s142, 1
      %p146 = scmp.eq.s32.totalorder %s24, 1
      %p147 = scmp.ne.s32.totalorder %s142, %s144
      %p148 = scmp.eq.s32.totalorder %s24, 0
      %p149 = por %p147, %p148
      %p150 = scmp.ne.s32.totalorder %s142, %s144
      %p151 = scmp.eq.s32.totalorder %s29, 1
      %p152 = por %p150, %p151
      %p153 = scmp.ne.s32.totalorder %s144, %s145
      %p154 = scmp.eq.s32.totalorder %s29, 0
      %p155 = por %p153, %p154
      %p156 = scmp.ne.s32.totalorder %s144, %s145
      %p157 = scmp.eq.s32.totalorder %s30, 1
      %p158 = por %p156, %p157
      %p160 = scmp.ne.s32.totalorder %s145, %s159
      %p161 = scmp.eq.s32.totalorder %s30, 0
      %p162 = por %p160, %p161
      %s164 = sadd.s32 %s163, 1
      %p167 = scmp.eq.s32.totalorder %s24, 1
      %p168 = scmp.ne.s32.totalorder %s163, %s165
      %p169 = scmp.eq.s32.totalorder %s24, 0
      %p170 = por %p168, %p169
      %p171 = scmp.ne.s32.totalorder %s163, %s165
      %p172 = scmp.eq.s32.totalorder %s29, 1
      %p173 = por %p171, %p172
      %p174 = scmp.ne.s32.totalorder %s165, %s166
      %p175 = scmp.eq.s32.totalorder %s29, 0
      %p176 = por %p174, %p175
      %p177 = scmp.ne.s32.totalorder %s165, %s166
      %p178 = scmp.eq.s32.totalorder %s30, 1
      %p179 = por %p177, %p178
      %p181 = scmp.ne.s32.totalorder %s166, %s180
      %p182 = scmp.eq.s32.totalorder %s30, 0
      %p183 = por %p181, %p182
      %s185 = sadd.s32 %s184, 1
      %p188 = scmp.eq.s32.totalorder %s24, 1
      %p189 = scmp.ne.s32.totalorder %s184, %s186
      %p190 = scmp.eq.s32.totalorder %s24, 0
      %p191 = por %p189, %p190
      %p192 = scmp.ne.s32.totalorder %s184, %s186
      %p193 = scmp.eq.s32.totalorder %s29, 1
      %p194 = por %p192, %p193
      %p195 = scmp.ne.s32.totalorder %s186, %s187
      %p196 = scmp.eq.s32.totalorder %s29, 0
      %p197 = por %p195, %p196
      %p198 = scmp.ne.s32.totalorder %s186, %s187
      %p199 = scmp.eq.s32.totalorder %s30, 1
      %p200 = por %p198, %p199
      %p202 = scmp.ne.s32.totalorder %s187, %s201
      %p203 = scmp.eq.s32.totalorder %s30, 0
      %p204 = por %p202, %p203
      %s206 = sadd.s32 %s205, 1
      %p209 = scmp.eq.s32.totalorder %s24, 1
      %p210 = scmp.ne.s32.totalorder %s205, %s207
      %p211 = scmp.eq.s32.totalorder %s24, 0
      %p212 = por %p210, %p211
      %p213 = scmp.ne.s32.totalorder %s205, %s207
      %p214 = scmp.eq.s32.totalorder %s29, 1
      %p215 = por %p213, %p214
      %p216 = scmp.ne.s32.totalorder %s207, %s208
      %p217 = scmp.eq.s32.totalorder %s29, 0
      %p218 = por %p216, %p217
      %p219 = scmp.ne.s32.totalorder %s207, %s208
      %p220 = scmp.eq.s32.totalorder %s30, 1
      %p221 = por %p219, %p220
      %p223 = scmp.ne.s32.totalorder %s208, %s222
      %p224 = scmp.eq.s32.totalorder %s30, 0
      %p225 = por %p223, %p224
      %s227 = sadd.s32 %s226, 1
      %p230 = scmp.eq.s32.totalorder %s24, 1
      %p231 = scmp.ne.s32.totalorder %s226, %s228
      %p232 = scmp.eq.s32.totalorder %s24, 0
      %p233 = por %p231, %p232
      %p234 = scmp.ne.s32.totalorder %s226, %s228
      %p235 = scmp.eq.s32.totalorder %s29, 1
      %p236 = por %p234, %p235
      %p237 = scmp.ne.s32.totalorder %s228, %s229
      %p238 = scmp.eq.s32.totalorder %s29, 0
      %p239 = por %p237, %p238
      %p240 = scmp.ne.s32.totalorder %s228, %s229
      %p241 = scmp.eq.s32.totalorder %s30, 1
      %p242 = por %p240, %p241
      %p244 = scmp.ne.s32.totalorder %s229, %s243
      %p245 = scmp.eq.s32.totalorder %s30, 0
      %p246 = por %p244, %p245
      %s248 = sadd.s32 %s247, 1
      %p251 = scmp.eq.s32.totalorder %s24, 1
      %p252 = scmp.ne.s32.totalorder %s247, %s249
      %p253 = scmp.eq.s32.totalorder %s24, 0
      %p254 = por %p252, %p253
      %p255 = scmp.ne.s32.totalorder %s247, %s249
      %p256 = scmp.eq.s32.totalorder %s29, 1
      %p257 = por %p255, %p256
      %p258 = scmp.ne.s32.totalorder %s249, %s250
      %p259 = scmp.eq.s32.totalorder %s29, 0
      %p260 = por %p258, %p259
      %p261 = scmp.ne.s32.totalorder %s249, %s250
      %p262 = scmp.eq.s32.totalorder %s30, 1
      %p263 = por %p261, %p262
      %p265 = scmp.ne.s32.totalorder %s250, %s264
      %p266 = scmp.eq.s32.totalorder %s30, 0
      %p267 = por %p265, %p266
      %s269 = sadd.s32 %s268, 1
      %p272 = scmp.eq.s32.totalorder %s24, 1
      %p273 = scmp.ne.s32.totalorder %s268, %s270
      %p274 = scmp.eq.s32.totalorder %s24, 0
      %p275 = por %p273, %p274
      %p276 = scmp.ne.s32.totalorder %s268, %s270
      %p277 = scmp.eq.s32.totalorder %s29, 1
      %p278 = por %p276, %p277
      %p279 = scmp.ne.s32.totalorder %s270, %s271
      %p280 = scmp.eq.s32.totalorder %s29, 0
      %p281 = por %p279, %p280
      %p282 = scmp.ne.s32.totalorder %s270, %s271
      %p283 = scmp.eq.s32.totalorder %s30, 1
      %p284 = por %p282, %p283
      %p286 = scmp.ne.s32.totalorder %s271, %s285
      %p287 = scmp.eq.s32.totalorder %s30, 0
      %p288 = por %p286, %p287
      %s290 = sadd.s32 %s289, 1
      %p293 = scmp.eq.s32.totalorder %s24, 1
      %p294 = scmp.ne.s32.totalorder %s289, %s291
      %p295 = scmp.eq.s32.totalorder %s24, 0
      %p296 = por %p294, %p295
      %p297 = scmp.ne.s32.totalorder %s289, %s291
      %p298 = scmp.eq.s32.totalorder %s29, 1
      %p299 = por %p297, %p298
      %p300 = scmp.ne.s32.totalorder %s291, %s292
      %p301 = scmp.eq.s32.totalorder %s29, 0
      %p302 = por %p300, %p301
      %p303 = scmp.ne.s32.totalorder %s291, %s292
      %p304 = scmp.eq.s32.totalorder %s30, 1
      %p305 = por %p303, %p304
      %p307 = scmp.ne.s32.totalorder %s292, %s306
      %p308 = scmp.eq.s32.totalorder %s30, 0
      %p309 = por %p307, %p308
      %s311 = sadd.s32 %s310, 1
      %p314 = scmp.eq.s32.totalorder %s24, 1
      %p315 = scmp.ne.s32.totalorder %s310, %s312
      %p316 = scmp.eq.s32.totalorder %s24, 0
      %p317 = por %p315, %p316
      %p318 = scmp.ne.s32.totalorder %s310, %s312
      %p319 = scmp.eq.s32.totalorder %s29, 1
      %p320 = por %p318, %p319
      %p321 = scmp.ne.s32.totalorder %s312, %s313
      %p322 = scmp.eq.s32.totalorder %s29, 0
      %p323 = por %p321, %p322
      %p324 = scmp.ne.s32.totalorder %s312, %s313
      %p325 = scmp.eq.s32.totalorder %s30, 1
      %p326 = por %p324, %p325
      %p328 = scmp.ne.s32.totalorder %s313, %s327
      %p329 = scmp.eq.s32.totalorder %s30, 0
      %p330 = por %p328, %p329
      %s332 = sadd.s32 %s331, 1
      %p335 = scmp.eq.s32.totalorder %s24, 1
      %p336 = scmp.ne.s32.totalorder %s331, %s333
      %p337 = scmp.eq.s32.totalorder %s24, 0
      %p338 = por %p336, %p337
      %p339 = scmp.ne.s32.totalorder %s331, %s333
      %p340 = scmp.eq.s32.totalorder %s29, 1
      %p341 = por %p339, %p340
      %p342 = scmp.ne.s32.totalorder %s333, %s334
      %p343 = scmp.eq.s32.totalorder %s29, 0
      %p344 = por %p342, %p343
      %p345 = scmp.ne.s32.totalorder %s333, %s334
      %p346 = scmp.eq.s32.totalorder %s30, 1
      %p347 = por %p345, %p346
      %p349 = scmp.ne.s32.totalorder %s334, %s348
      %p350 = scmp.eq.s32.totalorder %s30, 0
      %p351 = por %p349, %p350
      %s352 = ssub.s32 %s24, %s31
      %p353 = scmp.eq.s32.totalorder %s352, 0
      %s355 = sadd.s32 %s354, 1
      %s356 = scalar_select %p353, %s354, %s355
      %p359 = pneg %p353
      %p360 = scmp.eq.s32.totalorder %s24, 1
      %p361 = por %p359, %p360
      %p362 = scmp.ne.s32.totalorder %s354, %s357
      %p363 = scmp.eq.s32.totalorder %s24, 0
      %p364 = por %p362, %p363
      %p365 = scmp.ne.s32.totalorder %s354, %s357
      %p366 = scmp.eq.s32.totalorder %s29, 1
      %p367 = por %p365, %p366
      %p368 = scmp.ne.s32.totalorder %s357, %s358
      %p369 = scmp.eq.s32.totalorder %s29, 0
      %p370 = por %p368, %p369
      %p371 = scmp.ne.s32.totalorder %s357, %s358
      %p372 = scmp.eq.s32.totalorder %s30, 1
      %p373 = por %p371, %p372
      %p375 = scmp.ne.s32.totalorder %s358, %s374
      %p376 = scmp.eq.s32.totalorder %s30, 0
      %p377 = por %p375, %p376
      %p378 = scmp.le.s32.totalorder 1, %s24
      %p379 = scmp.lt.s32.totalorder %s24, 3
      %p380 = pnand %p378, %p379
      %p381 = pneg %p380
      // Predicated region
      $region9: #{bert_representer_forward.1} parent=5 // pred_check
        _
      $region10: #{bert_representer_forward.1} parent=5 // pred_check_branch
        %383 = sbr.rel (%p380) target = $region12
      $region11: #{bert_representer_forward.1} parent=5 // pred_region
        %s384 = ssub.s32 %s24, 1
        // Predicated region
        $region13: #{bert_representer_forward.1} parent=11 // pred_check
          %p385 = pneg %p71
        $region14: #{bert_representer_forward.1} parent=11 // pred_check_branch
          %387 = sbr.rel (%p385) target = $region16
        $region15: #{bert_representer_forward.1} parent=11 // pred_region
          _
        $region16: #{bert_representer_forward.1} parent=11 // pred_fallthru
          _
        // Predicated region
        $region17: #{bert_representer_forward.1} parent=11 // pred_check
          %p388 = pneg %p92
        $region18: #{bert_representer_forward.1} parent=11 // pred_check_branch
          %390 = sbr.rel (%p388) target = $region20
        $region19: #{bert_representer_forward.1} parent=11 // pred_region
          _
        $region20: #{bert_representer_forward.1} parent=11 // pred_fallthru
          _
        // Predicated region
        $region21: #{bert_representer_forward.1} parent=11 // pred_check
          %p391 = pneg %p113
        $region22: #{bert_representer_forward.1} parent=11 // pred_check_branch
          %393 = sbr.rel (%p391) target = $region24
        $region23: #{bert_representer_forward.1} parent=11 // pred_region
          _
        $region24: #{bert_representer_forward.1} parent=11 // pred_fallthru
          _
        // Predicated region
        $region25: #{bert_representer_forward.1} parent=11 // pred_check
          %p394 = pneg %p134
        $region26: #{bert_representer_forward.1} parent=11 // pred_check_branch
          %396 = sbr.rel (%p394) target = $region28
        $region27: #{bert_representer_forward.1} parent=11 // pred_region
          _
        $region28: #{bert_representer_forward.1} parent=11 // pred_fallthru
          _
        // Predicated region
        $region29: #{bert_representer_forward.1} parent=11 // pred_check
          %p397 = pneg %p155
        $region30: #{bert_representer_forward.1} parent=11 // pred_check_branch
          %399 = sbr.rel (%p397) target = $region32
        $region31: #{bert_representer_forward.1} parent=11 // pred_region
          _
        $region32: #{bert_representer_forward.1} parent=11 // pred_fallthru
          _
        // Predicated region
        $region33: #{bert_representer_forward.1} parent=11 // pred_check
          %p400 = pneg %p176
        $region34: #{bert_representer_forward.1} parent=11 // pred_check_branch
          %402 = sbr.rel (%p400) target = $region36
        $region35: #{bert_representer_forward.1} parent=11 // pred_region
          _
        $region36: #{bert_representer_forward.1} parent=11 // pred_fallthru
          _
        // Predicated region
        $region37: #{bert_representer_forward.1} parent=11 // pred_check
          %p403 = pneg %p197
        $region38: #{bert_representer_forward.1} parent=11 // pred_check_branch
          %405 = sbr.rel (%p403) target = $region40
        $region39: #{bert_representer_forward.1} parent=11 // pred_region
          _
        $region40: #{bert_representer_forward.1} parent=11 // pred_fallthru
          _
        // Predicated region
        $region41: #{bert_representer_forward.1} parent=11 // pred_check
          %p406 = pneg %p218
        $region42: #{bert_representer_forward.1} parent=11 // pred_check_branch
          %408 = sbr.rel (%p406) target = $region44
        $region43: #{bert_representer_forward.1} parent=11 // pred_region
          _
        $region44: #{bert_representer_forward.1} parent=11 // pred_fallthru
          _
        // Predicated region
        $region45: #{bert_representer_forward.1} parent=11 // pred_check
          %p409 = pneg %p239
        $region46: #{bert_representer_forward.1} parent=11 // pred_check_branch
          %411 = sbr.rel (%p409) target = $region48
        $region47: #{bert_representer_forward.1} parent=11 // pred_region
          _
        $region48: #{bert_representer_forward.1} parent=11 // pred_fallthru
          _
        // Predicated region
        $region49: #{bert_representer_forward.1} parent=11 // pred_check
          %p412 = pneg %p260
        $region50: #{bert_representer_forward.1} parent=11 // pred_check_branch
          %414 = sbr.rel (%p412) target = $region52
        $region51: #{bert_representer_forward.1} parent=11 // pred_region
          _
        $region52: #{bert_representer_forward.1} parent=11 // pred_fallthru
          _
        // Predicated region
        $region53: #{bert_representer_forward.1} parent=11 // pred_check
          %p415 = pneg %p281
        $region54: #{bert_representer_forward.1} parent=11 // pred_check_branch
          %417 = sbr.rel (%p415) target = $region56
        $region55: #{bert_representer_forward.1} parent=11 // pred_region
          _
        $region56: #{bert_representer_forward.1} parent=11 // pred_fallthru
          _
        // Predicated region
        $region57: #{bert_representer_forward.1} parent=11 // pred_check
          %p418 = pneg %p302
        $region58: #{bert_representer_forward.1} parent=11 // pred_check_branch
          %420 = sbr.rel (%p418) target = $region60
        $region59: #{bert_representer_forward.1} parent=11 // pred_region
          _
        $region60: #{bert_representer_forward.1} parent=11 // pred_fallthru
          _
        // Predicated region
        $region61: #{bert_representer_forward.1} parent=11 // pred_check
          %p421 = pneg %p323
        $region62: #{bert_representer_forward.1} parent=11 // pred_check_branch
          %423 = sbr.rel (%p421) target = $region64
        $region63: #{bert_representer_forward.1} parent=11 // pred_region
          _
        $region64: #{bert_representer_forward.1} parent=11 // pred_fallthru
          _
        // Predicated region
        $region65: #{bert_representer_forward.1} parent=11 // pred_check
          %p424 = pneg %p344
        $region66: #{bert_representer_forward.1} parent=11 // pred_check_branch
          %426 = sbr.rel (%p424) target = $region68
        $region67: #{bert_representer_forward.1} parent=11 // pred_region
          _
        $region68: #{bert_representer_forward.1} parent=11 // pred_fallthru
          _
      $region12: #{bert_representer_forward.1} parent=5 // pred_fallthru
        _
      %p427 = scmp.lt.s32.totalorder %s24, 2
      // Predicated region
      $region69: #{bert_representer_forward.1} parent=5 // pred_check
        %p428 = pneg %p427
      $region70: #{bert_representer_forward.1} parent=5 // pred_check_branch
        %430 = sbr.rel (%p428) target = $region72
      $region71: #{bert_representer_forward.1} parent=5 // pred_region
        // Predicated region
        $region73: #{bert_representer_forward.1} parent=71 // pred_check
          %p431 = pneg %p44
        $region74: #{bert_representer_forward.1} parent=71 // pred_check_branch
          %433 = sbr.rel (%p431) target = $region76
        $region75: #{bert_representer_forward.1} parent=71 // pred_region
          %p434 = scmp.lt.s32.totalorder %s24, 1
          %s435 = scalar_select %p434, %s24, 1
          %s436 = smul.addr %s435, 8
          %s437 = scalar_lea.vmem %s0, %s436
        $region76: #{bert_representer_forward.1} parent=71 // pred_fallthru
          _
      $region72: #{bert_representer_forward.1} parent=5 // pred_fallthru
        _
      %p438 = scmp.le.s32.totalorder 1, %s24
      %p439 = scmp.lt.s32.totalorder %s24, 3
      %p440 = pnand %p438, %p439
      %p441 = pneg %p440
      // Predicated region
      $region77: #{bert_representer_forward.1} parent=5 // pred_check
        _
      $region78: #{bert_representer_forward.1} parent=5 // pred_check_branch
        %443 = sbr.rel (%p440) target = $region80
      $region79: #{bert_representer_forward.1} parent=5 // pred_region
        %s444 = ssub.s32 %s24, 1
        %p445 = scmp.lt.s32.totalorder %s29, 1
        %s446 = scalar_select %p445, %s29, 1
        %s447 = smul.addr %s446, 8
        %s448 = scalar_lea.vmem %s0, %s447
        %p449 = pneg %p50
        %p450 = pneg %p47
        %p451 = pneg %p71
        %p452 = pneg %p68
        %p453 = pneg %p92
        %p454 = pneg %p89
        %p455 = pneg %p113
        %p456 = pneg %p110
        %p457 = pneg %p134
        %p458 = pneg %p131
        %p459 = pneg %p155
        %p460 = pneg %p152
        %p461 = pneg %p176
        %p462 = pneg %p173
        %p463 = pneg %p197
        %p464 = pneg %p194
        %p465 = pneg %p218
        %p466 = pneg %p215
        %p467 = pneg %p239
        %p468 = pneg %p236
        %p469 = pneg %p260
        %p470 = pneg %p257
        %p471 = pneg %p281
        %p472 = pneg %p278
        %p473 = pneg %p302
        %p474 = pneg %p299
        %p475 = pneg %p323
        %p476 = pneg %p320
        %p477 = pneg %p344
        %p478 = pneg %p341
        %p479 = pneg %p370
        %p480 = pneg %p367
        %s481 = sand.u32 %s357, 1
        %s482 = scalar_lea.sflag [#allocation3], %s481
        %s483 = sand.u32 %s357, 1
        %s484 = smul.addr %s483, 8
        %s485 = scalar_lea.vmem [#allocation2], %s484
        %p486 = scmp.lt.s32.totalorder %s29, 1
        %s487 = scalar_select %p486, %s29, 1
        %s488 = smul.addr %s487, 8
        %s489 = scalar_lea.vmem %s0, %s488
        %v491 = vld [vmem:[%s489] sm:$0xff]
        %v492 = vld [vmem:[%s1] sm:$0x1]
        %v493 = vld [vmem:[%s2] sm:$0x1]
        %494 = vadd.xlane.f32.xlu0 %v491
        %v495 = vpop.xlane.xlu0 %494
        %v496 = vrcp.pop 128.0
        %v497 = vmul.f32 %v495, %v496
        %v498 = vsub.f32 %v491, %v497
        %v499 = vmul.f32 %v498, %v498
        %500 = vadd.xlane.f32.xlu0 %v499
        %v501 = vpop.xlane.xlu0 %500
        %v502 = vmul.f32 %v501, %v496
        %v503 = vadd.f32 %v502, 1e-12
        %v504 = vrsqrt.pop %v503
        %v505 = vmul.f32 %v498, %v504
        %v507 = vlaneseq
        %v508 = vshrl.u32 %v507, 7
        %v509 = vsub.s32 0, %v508
        %v510 = vrot.slane %v492, %v509
        %v512 = vmul.f32 %v505, %v510
        %v514 = vlaneseq
        %v515 = vshrl.u32 %v514, 7
        %v516 = vsub.s32 0, %v515
        %v517 = vrot.slane %v493, %v516
        %v519 = vadd.f32 %v512, %v517
        %v520 = vpack.c.bf16 %v519, %v519
        %v521 = vld [vmem:[%s3] sm:$0xf]
        %v522 = vld [vmem:[%s3 + $0x4] sm:$0xf]
        %v523 = vld [vmem:[%s3 + $0x8] sm:$0xf]
        %v524 = vld [vmem:[%s3 + $0xc] sm:$0xf]
        %v525 = vld [vmem:[%s3 + $0x10] sm:$0xf]
        %v526 = vld [vmem:[%s3 + $0x14] sm:$0xf]
        %v527 = vld [vmem:[%s3 + $0x18] sm:$0xf]
        %v528 = vld [vmem:[%s3 + $0x1c] sm:$0xf]
        %v529 = vld [vmem:[%s3 + $0x20] sm:$0xf]
        %v530 = vld [vmem:[%s3 + $0x24] sm:$0xf]
        %v531 = vld [vmem:[%s3 + $0x28] sm:$0xf]
        %v532 = vld [vmem:[%s3 + $0x2c] sm:$0xf]
        %v533 = vld [vmem:[%s3 + $0x30] sm:$0xf]
        %v534 = vld [vmem:[%s3 + $0x34] sm:$0xf]
        %v535 = vld [vmem:[%s3 + $0x38] sm:$0xf]
        %v536 = vld [vmem:[%s3 + $0x3c] sm:$0xf]
        %v537 = vld [vmem:[%s3 + $0x40] sm:$0xf]
        %v538 = vld [vmem:[%s3 + $0x44] sm:$0xf]
        %v539 = vld [vmem:[%s3 + $0x48] sm:$0xf]
        %v540 = vld [vmem:[%s3 + $0x4c] sm:$0xf]
        %v541 = vld [vmem:[%s3 + $0x50] sm:$0xf]
        %v542 = vld [vmem:[%s3 + $0x54] sm:$0xf]
        %v543 = vld [vmem:[%s3 + $0x58] sm:$0xf]
        %v544 = vld [vmem:[%s3 + $0x5c] sm:$0xf]
        %v545 = vld [vmem:[%s3 + $0x60] sm:$0xf]
        %v546 = vld [vmem:[%s3 + $0x64] sm:$0xf]
        %v547 = vld [vmem:[%s3 + $0x68] sm:$0xf]
        %v548 = vld [vmem:[%s3 + $0x6c] sm:$0xf]
        %v549 = vld [vmem:[%s3 + $0x70] sm:$0xf]
        %v550 = vld [vmem:[%s3 + $0x74] sm:$0xf]
        %v551 = vld [vmem:[%s3 + $0x78] sm:$0xf]
        %v552 = vld [vmem:[%s3 + $0x7c] sm:$0xf]
        %v553 = vld [vmem:[%s3 + $0x80] sm:$0xf]
        %v554 = vld [vmem:[%s3 + $0x84] sm:$0xf]
        %v555 = vld [vmem:[%s3 + $0x88] sm:$0xf]
        %v556 = vld [vmem:[%s3 + $0x8c] sm:$0xf]
        %v557 = vld [vmem:[%s3 + $0x90] sm:$0xf]
        %v558 = vld [vmem:[%s3 + $0x94] sm:$0xf]
        %v559 = vld [vmem:[%s3 + $0x98] sm:$0xf]
        %v560 = vld [vmem:[%s3 + $0x9c] sm:$0xf]
        %v561 = vld [vmem:[%s3 + $0xa0] sm:$0xf]
        %v562 = vld [vmem:[%s3 + $0xa4] sm:$0xf]
        %v563 = vld [vmem:[%s3 + $0xa8] sm:$0xf]
        %v564 = vld [vmem:[%s3 + $0xac] sm:$0xf]
        %v565 = vld [vmem:[%s3 + $0xb0] sm:$0xf]
        %v566 = vld [vmem:[%s3 + $0xb4] sm:$0xf]
        %v567 = vld [vmem:[%s3 + $0xb8] sm:$0xf]
        %v568 = vld [vmem:[%s3 + $0xbc] sm:$0xf]
        %v569 = vld [vmem:[%s3 + $0xc0] sm:$0xf]
        %v570 = vld [vmem:[%s3 + $0xc4] sm:$0xf]
        %v571 = vld [vmem:[%s3 + $0xc8] sm:$0xf]
        %v572 = vld [vmem:[%s3 + $0xcc] sm:$0xf]
        %v573 = vld [vmem:[%s3 + $0xd0] sm:$0xf]
        %v574 = vld [vmem:[%s3 + $0xd4] sm:$0xf]
        %v575 = vld [vmem:[%s3 + $0xd8] sm:$0xf]
        %v576 = vld [vmem:[%s3 + $0xdc] sm:$0xf]
        %v577 = vld [vmem:[%s3 + $0xe0] sm:$0xf]
        %v578 = vld [vmem:[%s3 + $0xe4] sm:$0xf]
        %v579 = vld [vmem:[%s3 + $0xe8] sm:$0xf]
        %v580 = vld [vmem:[%s3 + $0xec] sm:$0xf]
        %v581 = vld [vmem:[%s3 + $0xf0] sm:$0xf]
        %v582 = vld [vmem:[%s3 + $0xf4] sm:$0xf]
        %v583 = vld [vmem:[%s3 + $0xf8] sm:$0xf]
        %v584 = vld [vmem:[%s3 + $0xfc] sm:$0xf]
        %v585 = vld [vmem:[%s4] sm:$0x1]
        %v586 = vld [vmem:[%s4 + $0x1] sm:$0x1]
        %v587 = vld [vmem:[%s4 + $0x2] sm:$0x1]
        %v588 = vld [vmem:[%s4 + $0x3] sm:$0x1]
        %v593 = vlaneseq
        %v594 = vshrl.u32 %v593, 7
        %v595 = vsub.s32 0, %v594
        %v596 = vrot.slane %v585, %v595
        %v597 = vlaneseq
        %v598 = vshrl.u32 %v597, 7
        %v599 = vsub.s32 0, %v598
        %v600 = vrot.slane %v586, %v599
        %v601 = vlaneseq
        %v602 = vshrl.u32 %v601, 7
        %v603 = vsub.s32 0, %v602
        %v604 = vrot.slane %v587, %v603
        %v605 = vlaneseq
        %v606 = vshrl.u32 %v605, 7
        %v607 = vsub.s32 0, %v606
        %v608 = vrot.slane %v588, %v607
        %v629 = vunpack.c.l.b16 %v521
        %v630 = vunpack.c.l.b16 %v522
        %v631 = vunpack.c.l.b16 %v523
        %v632 = vunpack.c.l.b16 %v524
        %v633 = vunpack.c.l.b16 %v525
        %v634 = vunpack.c.l.b16 %v526
        %v635 = vunpack.c.l.b16 %v527
        %v636 = vunpack.c.l.b16 %v528
        %v637 = vunpack.c.l.b16 %v529
        %v638 = vunpack.c.l.b16 %v530
        %v639 = vunpack.c.l.b16 %v531
        %v640 = vunpack.c.l.b16 %v532
        %v641 = vunpack.c.l.b16 %v533
        %v642 = vunpack.c.l.b16 %v534
        %v643 = vunpack.c.l.b16 %v535
        %v644 = vunpack.c.l.b16 %v536
        %v645 = vpack.c.b16 %v630, %v629
        %v646 = vpack.c.b16 %v632, %v631
        %v647 = vpack.c.b16 %v634, %v633
        %v648 = vpack.c.b16 %v636, %v635
        %v649 = vpack.c.b16 %v638, %v637
        %v650 = vpack.c.b16 %v640, %v639
        %v651 = vpack.c.b16 %v642, %v641
        %v652 = vpack.c.b16 %v644, %v643
        %661 = vmatprep.subr.bf16.mxu0 0
        %662 = vmatpush1.bf16.msra.mxu0 %v645
        %663 = vmatprep.subr.bf16.mxu0 0
        %664 = vmatpush1.bf16.msra.mxu0 %v646
        %665 = vmatprep.subr.bf16.mxu0 0
        %666 = vmatpush1.bf16.msra.mxu0 %v647
        %667 = vmatprep.subr.bf16.mxu0 0
        %668 = vmatpush1.bf16.msra.mxu0 %v648
        %669 = vmatprep.subr.bf16.mxu0 0
        %670 = vmatpush1.bf16.msra.mxu0 %v649
        %671 = vmatprep.subr.bf16.mxu0 0
        %672 = vmatpush1.bf16.msra.mxu0 %v650
        %673 = vmatprep.subr.bf16.mxu0 0
        %674 = vmatpush1.bf16.msra.mxu0 %v651
        %675 = vmatprep.subr.bf16.mxu0 0
        %676 = vmatpush1.bf16.msra.mxu0 %v652
        %677 = vmatprep.subr.bf16.mxu0 0
        %678 = vmatpush1.bf16.msra.mxu0 0
        %679 = vmatprep.subr.bf16.mxu0 0
        %680 = vmatpush1.bf16.msra.mxu0 0
        %681 = vmatprep.subr.bf16.mxu0 0
        %682 = vmatpush1.bf16.msra.mxu0 0
        %683 = vmatprep.subr.bf16.mxu0 0
        %684 = vmatpush1.bf16.msra.mxu0 0
        %685 = vmatprep.subr.bf16.mxu0 0
        %686 = vmatpush1.bf16.msra.mxu0 0
        %687 = vmatprep.subr.bf16.mxu0 0
        %688 = vmatpush1.bf16.msra.mxu0 0
        %689 = vmatprep.subr.bf16.mxu0 0
        %690 = vmatpush1.bf16.msra.mxu0 0
        %691 = vmatprep.subr.bf16.mxu0 0
        %692 = vmatpush1.bf16.msra.mxu0 0
        %693 = vmatprep.mubr.bf16.mxu0 0
        %694 = vmatmul.mubr.bf16.gmra.mrb[0].mxu0 %v520
        %v695 = vpop.f32.mrb[0].mxu0
        %v696 = vadd.f32 %v596, %v695
        %v697 = vpop.f32.mrb[0].mxu0
        %v698 = vpop.f32.mrb[0].mxu0
        %v699 = vpop.f32.mrb[0].mxu0
        %700 = vdwg.mxu0
        %v717 = vunpack.c.l.b16 %v537
        %v718 = vunpack.c.l.b16 %v538
        %v719 = vunpack.c.l.b16 %v539
        %v720 = vunpack.c.l.b16 %v540
        %v721 = vunpack.c.l.b16 %v541
        %v722 = vunpack.c.l.b16 %v542
        %v723 = vunpack.c.l.b16 %v543
        %v724 = vunpack.c.l.b16 %v544
        %v725 = vunpack.c.l.b16 %v545
        %v726 = vunpack.c.l.b16 %v546
        %v727 = vunpack.c.l.b16 %v547
        %v728 = vunpack.c.l.b16 %v548
        %v729 = vunpack.c.l.b16 %v549
        %v730 = vunpack.c.l.b16 %v550
        %v731 = vunpack.c.l.b16 %v551
        %v732 = vunpack.c.l.b16 %v552
        %v733 = vpack.c.b16 %v718, %v717
        %v734 = vpack.c.b16 %v720, %v719
        %v735 = vpack.c.b16 %v722, %v721
        %v736 = vpack.c.b16 %v724, %v723
        %v737 = vpack.c.b16 %v726, %v725
        %v738 = vpack.c.b16 %v728, %v727
        %v739 = vpack.c.b16 %v730, %v729
        %v740 = vpack.c.b16 %v732, %v731
        %749 = vmatprep.subr.bf16.mxu0 0
        %750 = vmatpush1.bf16.msra.mxu0 %v733
        %751 = vmatprep.subr.bf16.mxu0 0
        %752 = vmatpush1.bf16.msra.mxu0 %v734
        %753 = vmatprep.subr.bf16.mxu0 0
        %754 = vmatpush1.bf16.msra.mxu0 %v735
        %755 = vmatprep.subr.bf16.mxu0 0
        %756 = vmatpush1.bf16.msra.mxu0 %v736
        %757 = vmatprep.subr.bf16.mxu0 0
        %758 = vmatpush1.bf16.msra.mxu0 %v737
        %759 = vmatprep.subr.bf16.mxu0 0
        %760 = vmatpush1.bf16.msra.mxu0 %v738
        %761 = vmatprep.subr.bf16.mxu0 0
        %762 = vmatpush1.bf16.msra.mxu0 %v739
        %763 = vmatprep.subr.bf16.mxu0 0
        %764 = vmatpush1.bf16.msra.mxu0 %v740
        %765 = vmatprep.subr.bf16.mxu0 0
        %766 = vmatpush1.bf16.msra.mxu0 0
        %767 = vmatprep.subr.bf16.mxu0 0
        %768 = vmatpush1.bf16.msra.mxu0 0
        %769 = vmatprep.subr.bf16.mxu0 0
        %770 = vmatpush1.bf16.msra.mxu0 0
        %771 = vmatprep.subr.bf16.mxu0 0
        %772 = vmatpush1.bf16.msra.mxu0 0
        %773 = vmatprep.subr.bf16.mxu0 0
        %774 = vmatpush1.bf16.msra.mxu0 0
        %775 = vmatprep.subr.bf16.mxu0 0
        %776 = vmatpush1.bf16.msra.mxu0 0
        %777 = vmatprep.subr.bf16.mxu0 0
        %778 = vmatpush1.bf16.msra.mxu0 0
        %779 = vmatprep.subr.bf16.mxu0 0
        %780 = vmatpush1.bf16.msra.mxu0 0
        %781 = vmatprep.mubr.bf16.mxu0 0
        %782 = vmatmul.mubr.bf16.gmra.mrb[0].mxu0 %v520
        %v783 = vpop.f32.mrb[0].mxu0
        %v784 = vadd.f32 %v600, %v783
        %v785 = vpop.f32.mrb[0].mxu0
        %v786 = vpop.f32.mrb[0].mxu0
        %v787 = vpop.f32.mrb[0].mxu0
        %788 = vdwg.mxu0
        %v805 = vunpack.c.l.b16 %v553
        %v806 = vunpack.c.l.b16 %v554
        %v807 = vunpack.c.l.b16 %v555
        %v808 = vunpack.c.l.b16 %v556
        %v809 = vunpack.c.l.b16 %v557
        %v810 = vunpack.c.l.b16 %v558
        %v811 = vunpack.c.l.b16 %v559
        %v812 = vunpack.c.l.b16 %v560
        %v813 = vunpack.c.l.b16 %v561
        %v814 = vunpack.c.l.b16 %v562
        %v815 = vunpack.c.l.b16 %v563
        %v816 = vunpack.c.l.b16 %v564
        %v817 = vunpack.c.l.b16 %v565
        %v818 = vunpack.c.l.b16 %v566
        %v819 = vunpack.c.l.b16 %v567
        %v820 = vunpack.c.l.b16 %v568
        %v821 = vpack.c.b16 %v806, %v805
        %v822 = vpack.c.b16 %v808, %v807
        %v823 = vpack.c.b16 %v810, %v809
        %v824 = vpack.c.b16 %v812, %v811
        %v825 = vpack.c.b16 %v814, %v813
        %v826 = vpack.c.b16 %v816, %v815
        %v827 = vpack.c.b16 %v818, %v817
        %v828 = vpack.c.b16 %v820, %v819
        %837 = vmatprep.subr.bf16.mxu0 0
        %838 = vmatpush1.bf16.msra.mxu0 %v821
        %839 = vmatprep.subr.bf16.mxu0 0
        %840 = vmatpush1.bf16.msra.mxu0 %v822
        %841 = vmatprep.subr.bf16.mxu0 0
        %842 = vmatpush1.bf16.msra.mxu0 %v823
        %843 = vmatprep.subr.bf16.mxu0 0
        %844 = vmatpush1.bf16.msra.mxu0 %v824
        %845 = vmatprep.subr.bf16.mxu0 0
        %846 = vmatpush1.bf16.msra.mxu0 %v825
        %847 = vmatprep.subr.bf16.mxu0 0
        %848 = vmatpush1.bf16.msra.mxu0 %v826
        %849 = vmatprep.subr.bf16.mxu0 0
        %850 = vmatpush1.bf16.msra.mxu0 %v827
        %851 = vmatprep.subr.bf16.mxu0 0
        %852 = vmatpush1.bf16.msra.mxu0 %v828
        %853 = vmatprep.subr.bf16.mxu0 0
        %854 = vmatpush1.bf16.msra.mxu0 0
        %855 = vmatprep.subr.bf16.mxu0 0
        %856 = vmatpush1.bf16.msra.mxu0 0
        %857 = vmatprep.subr.bf16.mxu0 0
        %858 = vmatpush1.bf16.msra.mxu0 0
        %859 = vmatprep.subr.bf16.mxu0 0
        %860 = vmatpush1.bf16.msra.mxu0 0
        %861 = vmatprep.subr.bf16.mxu0 0
        %862 = vmatpush1.bf16.msra.mxu0 0
        %863 = vmatprep.subr.bf16.mxu0 0
        %864 = vmatpush1.bf16.msra.mxu0 0
        %865 = vmatprep.subr.bf16.mxu0 0
        %866 = vmatpush1.bf16.msra.mxu0 0
        %867 = vmatprep.subr.bf16.mxu0 0
        %868 = vmatpush1.bf16.msra.mxu0 0
        %869 = vmatprep.mubr.bf16.mxu0 0
        %870 = vmatmul.mubr.bf16.gmra.mrb[0].mxu0 %v520
        %v871 = vpop.f32.mrb[0].mxu0
        %v872 = vadd.f32 %v604, %v871
        %v873 = vpop.f32.mrb[0].mxu0
        %v874 = vpop.f32.mrb[0].mxu0
        %v875 = vpop.f32.mrb[0].mxu0
        %876 = vdwg.mxu0
        %v893 = vunpack.c.l.b16 %v569
        %v894 = vunpack.c.l.b16 %v570
        %v895 = vunpack.c.l.b16 %v571
        %v896 = vunpack.c.l.b16 %v572
        %v897 = vunpack.c.l.b16 %v573
        %v898 = vunpack.c.l.b16 %v574
        %v899 = vunpack.c.l.b16 %v575
        %v900 = vunpack.c.l.b16 %v576
        %v901 = vunpack.c.l.b16 %v577
        %v902 = vunpack.c.l.b16 %v578
        %v903 = vunpack.c.l.b16 %v579
        %v904 = vunpack.c.l.b16 %v580
        %v905 = vunpack.c.l.b16 %v581
        %v906 = vunpack.c.l.b16 %v582
        %v907 = vunpack.c.l.b16 %v583
        %v908 = vunpack.c.l.b16 %v584
        %v909 = vpack.c.b16 %v894, %v893
        %v910 = vpack.c.b16 %v896, %v895
        %v911 = vpack.c.b16 %v898, %v897
        %v912 = vpack.c.b16 %v900, %v899
        %v913 = vpack.c.b16 %v902, %v901
        %v914 = vpack.c.b16 %v904, %v903
        %v915 = vpack.c.b16 %v906, %v905
        %v916 = vpack.c.b16 %v908, %v907
        %925 = vmatprep.subr.bf16.mxu0 0
        %926 = vmatpush1.bf16.msra.mxu0 %v909
        %927 = vmatprep.subr.bf16.mxu0 0
        %928 = vmatpush1.bf16.msra.mxu0 %v910
        %929 = vmatprep.subr.bf16.mxu0 0
        %930 = vmatpush1.bf16.msra.mxu0 %v911
        %931 = vmatprep.subr.bf16.mxu0 0
        %932 = vmatpush1.bf16.msra.mxu0 %v912
        %933 = vmatprep.subr.bf16.mxu0 0
        %934 = vmatpush1.bf16.msra.mxu0 %v913
        %935 = vmatprep.subr.bf16.mxu0 0
        %936 = vmatpush1.bf16.msra.mxu0 %v914
        %937 = vmatprep.subr.bf16.mxu0 0
        %938 = vmatpush1.bf16.msra.mxu0 %v915
        %939 = vmatprep.subr.bf16.mxu0 0
        %940 = vmatpush1.bf16.msra.mxu0 %v916
        %941 = vmatprep.subr.bf16.mxu0 0
        %942 = vmatpush1.bf16.msra.mxu0 0
        %943 = vmatprep.subr.bf16.mxu0 0
        %944 = vmatpush1.bf16.msra.mxu0 0
        %945 = vmatprep.subr.bf16.mxu0 0
        %946 = vmatpush1.bf16.msra.mxu0 0
        %947 = vmatprep.subr.bf16.mxu0 0
        %948 = vmatpush1.bf16.msra.mxu0 0
        %949 = vmatprep.subr.bf16.mxu0 0
        %950 = vmatpush1.bf16.msra.mxu0 0
        %951 = vmatprep.subr.bf16.mxu0 0
        %952 = vmatpush1.bf16.msra.mxu0 0
        %953 = vmatprep.subr.bf16.mxu0 0
        %954 = vmatpush1.bf16.msra.mxu0 0
        %955 = vmatprep.subr.bf16.mxu0 0
        %956 = vmatpush1.bf16.msra.mxu0 0
        %957 = vmatprep.mubr.bf16.mxu0 0
        %958 = vmatmul.mubr.bf16.gmra.mrb[0].mxu0 %v520
        %v959 = vpop.f32.mrb[0].mxu0
        %v960 = vadd.f32 %v608, %v959
        %v961 = vpop.f32.mrb[0].mxu0
        %v962 = vpop.f32.mrb[0].mxu0
        %v963 = vpop.f32.mrb[0].mxu0
        %964 = vdwg.mxu0
        %v965 = vpack.c.bf16 %v696, %v696
        %v966 = vpack.c.bf16 %v784, %v784
        %v967 = vpack.c.bf16 %v872, %v872
        %v968 = vpack.c.bf16 %v960, %v960
        %970 = vrot.lane.b32.xlu0 %v965, 96
        %v971 = vpop.permute.xlu0 %970
        %vm972 = vcmask 261120
        %v974 = vsel %vm972, %v965, 0
        %v977 = vsel %vm972, %v971, 0
        %979 = vmatprep.subr.bf16.mxu0 0
        %980 = vmatpush1.bf16.xpose.msra.mxu0 %v977
        %981 = vmatprep.subr.bf16.mxu0 0
        %982 = vmatpush1.bf16.xpose.msra.mxu0 0
        %983 = vmatprep.subr.bf16.mxu0 0
        %984 = vmatpush1.bf16.xpose.msra.mxu0 0
        %985 = vmatprep.subr.bf16.mxu0 0
        %986 = vmatpush1.bf16.xpose.msra.mxu0 0
        %987 = vmatprep.subr.bf16.mxu0 0
        %988 = vmatpush1.bf16.xpose.msra.mxu0 0
        %989 = vmatprep.subr.bf16.mxu0 0
        %990 = vmatpush1.bf16.xpose.msra.mxu0 0
        %991 = vmatprep.subr.bf16.mxu0 0
        %992 = vmatpush1.bf16.xpose.msra.mxu0 0
        %993 = vmatprep.subr.bf16.mxu0 0
        %994 = vmatpush1.bf16.xpose.msra.mxu0 0
        %995 = vmatprep.subr.bf16.mxu0 0
        %996 = vmatpush1.bf16.xpose.msra.mxu0 0
        %997 = vmatprep.subr.bf16.mxu0 0
        %998 = vmatpush1.bf16.xpose.msra.mxu0 0
        %999 = vmatprep.subr.bf16.mxu0 0
        %1000 = vmatpush1.bf16.xpose.msra.mxu0 0
        %1001 = vmatprep.subr.bf16.mxu0 0
        %1002 = vmatpush1.bf16.xpose.msra.mxu0 0
        %1003 = vmatprep.subr.bf16.mxu0 0
        %1004 = vmatpush1.bf16.xpose.msra.mxu0 0
        %1005 = vmatprep.subr.bf16.mxu0 0
        %1006 = vmatpush1.bf16.xpose.msra.mxu0 0
        %1007 = vmatprep.subr.bf16.mxu0 0
        %1008 = vmatpush1.bf16.xpose.msra.mxu0 0
        %1009 = vmatprep.subr.bf16.mxu0 0
        %1010 = vmatpush1.bf16.xpose.msra.mxu0 0
        %1011 = vmatprep.mubr.bf16.mxu0 0
        %1012 = vmatmul.mubr.bf16.gmra.mrb[0].mxu0 %v974
        %v1013 = vpop.f32.mrb[0].mxu0
        %v1014 = vadd.f32 0.0, %v1013
        %v1015 = vpop.f32.mrb[0].mxu0
        %v1016 = vpop.f32.mrb[0].mxu0
        %v1017 = vpop.f32.mrb[0].mxu0
        %1018 = vdwg.mxu0
        %1020 = vrot.lane.b32.xlu0 %v966, 96
        %v1021 = vpop.permute.xlu0 %1020
        %v1023 = vsel %vm972, %v966, 0
        %v1026 = vsel %vm972, %v1021, 0
        %1028 = vmatprep.subr.bf16.mxu0 0
        %1029 = vmatpush1.bf16.xpose.msra.mxu0 %v1026
        %1030 = vmatprep.subr.bf16.mxu0 0
        %1031 = vmatpush1.bf16.xpose.msra.mxu0 0
        %1032 = vmatprep.subr.bf16.mxu0 0
        %1033 = vmatpush1.bf16.xpose.msra.mxu0 0
        %1034 = vmatprep.subr.bf16.mxu0 0
        %1035 = vmatpush1.bf16.xpose.msra.mxu0 0
        %1036 = vmatprep.subr.bf16.mxu0 0
        %1037 = vmatpush1.bf16.xpose.msra.mxu0 0
        %1038 = vmatprep.subr.bf16.mxu0 0
        %1039 = vmatpush1.bf16.xpose.msra.mxu0 0
        %1040 = vmatprep.subr.bf16.mxu0 0
        %1041 = vmatpush1.bf16.xpose.msra.mxu0 0
        %1042 = vmatprep.subr.bf16.mxu0 0
        %1043 = vmatpush1.bf16.xpose.msra.mxu0 0
        %1044 = vmatprep.subr.bf16.mxu0 0
        %1045 = vmatpush1.bf16.xpose.msra.mxu0 0
        %1046 = vmatprep.subr.bf16.mxu0 0
        %1047 = vmatpush1.bf16.xpose.msra.mxu0 0
        %1048 = vmatprep.subr.bf16.mxu0 0
        %1049 = vmatpush1.bf16.xpose.msra.mxu0 0
        %1050 = vmatprep.subr.bf16.mxu0 0
        %1051 = vmatpush1.bf16.xpose.msra.mxu0 0
        %1052 = vmatprep.subr.bf16.mxu0 0
        %1053 = vmatpush1.bf16.xpose.msra.mxu0 0
        %1054 = vmatprep.subr.bf16.mxu0 0
        %1055 = vmatpush1.bf16.xpose.msra.mxu0 0
        %1056 = vmatprep.subr.bf16.mxu0 0
        %1057 = vmatpush1.bf16.xpose.msra.mxu0 0
        %1058 = vmatprep.subr.bf16.mxu0 0
        %1059 = vmatpush1.bf16.xpose.msra.mxu0 0
        %1060 = vmatprep.mubr.bf16.mxu0 0
        %1061 = vmatmul.mubr.bf16.gmra.mrb[0].mxu0 %v1023
        %v1062 = vpop.f32.mrb[0].mxu0
        %v1063 = vadd.f32 0.0, %v1062
        %v1064 = vpop.f32.mrb[0].mxu0
        %v1065 = vpop.f32.mrb[0].mxu0
        %v1066 = vpop.f32.mrb[0].mxu0
        %1067 = vdwg.mxu0
        %1069 = vrot.lane.b32.xlu0 %v967, 96
        %v1070 = vpop.permute.xlu0 %1069
        %v1072 = vsel %vm972, %v967, 0
        %v1075 = vsel %vm972, %v1070, 0
        %1077 = vmatprep.subr.bf16.mxu0 0
        %1078 = vmatpush1.bf16.xpose.msra.mxu0 %v1075
        %1079 = vmatprep.subr.bf16.mxu0 0
        %1080 = vmatpush1.bf16.xpose.msra.mxu0 0
        %1081 = vmatprep.subr.bf16.mxu0 0
        %1082 = vmatpush1.bf16.xpose.msra.mxu0 0
        %1083 = vmatprep.subr.bf16.mxu0 0
        %1084 = vmatpush1.bf16.xpose.msra.mxu0 0
        %1085 = vmatprep.subr.bf16.mxu0 0
        %1086 = vmatpush1.bf16.xpose.msra.mxu0 0
        %1087 = vmatprep.subr.bf16.mxu0 0
        %1088 = vmatpush1.bf16.xpose.msra.mxu0 0
        %1089 = vmatprep.subr.bf16.mxu0 0
        %1090 = vmatpush1.bf16.xpose.msra.mxu0 0
        %1091 = vmatprep.subr.bf16.mxu0 0
        %1092 = vmatpush1.bf16.xpose.msra.mxu0 0
        %1093 = vmatprep.subr.bf16.mxu0 0
        %1094 = vmatpush1.bf16.xpose.msra.mxu0 0
        %1095 = vmatprep.subr.bf16.mxu0 0
        %1096 = vmatpush1.bf16.xpose.msra.mxu0 0
        %1097 = vmatprep.subr.bf16.mxu0 0
        %1098 = vmatpush1.bf16.xpose.msra.mxu0 0
        %1099 = vmatprep.subr.bf16.mxu0 0
        %1100 = vmatpush1.bf16.xpose.msra.mxu0 0
        %1101 = vmatprep.subr.bf16.mxu0 0
        %1102 = vmatpush1.bf16.xpose.msra.mxu0 0
        %1103 = vmatprep.subr.bf16.mxu0 0
        %1104 = vmatpush1.bf16.xpose.msra.mxu0 0
        %1105 = vmatprep.subr.bf16.mxu0 0
        %1106 = vmatpush1.bf16.xpose.msra.mxu0 0
        %1107 = vmatprep.subr.bf16.mxu0 0
        %1108 = vmatpush1.bf16.xpose.msra.mxu0 0
        %1109 = vmatprep.mubr.bf16.mxu0 0
        %1110 = vmatmul.mubr.bf16.gmra.mrb[0].mxu0 %v1072
        %v1111 = vpop.f32.mrb[0].mxu0
        %v1112 = vadd.f32 0.0, %v1111
        %v1113 = vpop.f32.mrb[0].mxu0
        %v1114 = vpop.f32.mrb[0].mxu0
        %v1115 = vpop.f32.mrb[0].mxu0
        %1116 = vdwg.mxu0
        %1118 = vrot.lane.b32.xlu0 %v968, 96
        %v1119 = vpop.permute.xlu0 %1118
        %v1121 = vsel %vm972, %v968, 0
        %v1124 = vsel %vm972, %v1119, 0
        %1126 = vmatprep.subr.bf16.mxu0 0
        %1127 = vmatpush1.bf16.xpose.msra.mxu0 %v1124
        %1128 = vmatprep.subr.bf16.mxu0 0
        %1129 = vmatpush1.bf16.xpose.msra.mxu0 0
        %1130 = vmatprep.subr.bf16.mxu0 0
        %1131 = vmatpush1.bf16.xpose.msra.mxu0 0
        %1132 = vmatprep.subr.bf16.mxu0 0
        %1133 = vmatpush1.bf16.xpose.msra.mxu0 0
        %1134 = vmatprep.subr.bf16.mxu0 0
        %1135 = vmatpush1.bf16.xpose.msra.mxu0 0
        %1136 = vmatprep.subr.bf16.mxu0 0
        %1137 = vmatpush1.bf16.xpose.msra.mxu0 0
        %1138 = vmatprep.subr.bf16.mxu0 0
        %1139 = vmatpush1.bf16.xpose.msra.mxu0 0
        %1140 = vmatprep.subr.bf16.mxu0 0
        %1141 = vmatpush1.bf16.xpose.msra.mxu0 0
        %1142 = vmatprep.subr.bf16.mxu0 0
        %1143 = vmatpush1.bf16.xpose.msra.mxu0 0
        %1144 = vmatprep.subr.bf16.mxu0 0
        %1145 = vmatpush1.bf16.xpose.msra.mxu0 0
        %1146 = vmatprep.subr.bf16.mxu0 0
        %1147 = vmatpush1.bf16.xpose.msra.mxu0 0
        %1148 = vmatprep.subr.bf16.mxu0 0
        %1149 = vmatpush1.bf16.xpose.msra.mxu0 0
        %1150 = vmatprep.subr.bf16.mxu0 0
        %1151 = vmatpush1.bf16.xpose.msra.mxu0 0
        %1152 = vmatprep.subr.bf16.mxu0 0
        %1153 = vmatpush1.bf16.xpose.msra.mxu0 0
        %1154 = vmatprep.subr.bf16.mxu0 0
        %1155 = vmatpush1.bf16.xpose.msra.mxu0 0
        %1156 = vmatprep.subr.bf16.mxu0 0
        %1157 = vmatpush1.bf16.xpose.msra.mxu0 0
        %1158 = vmatprep.mubr.bf16.mxu0 0
        %1159 = vmatmul.mubr.bf16.gmra.mrb[0].mxu0 %v1121
        %v1160 = vpop.f32.mrb[0].mxu0
        %v1161 = vadd.f32 0.0, %v1160
        %v1162 = vpop.f32.mrb[0].mxu0
        %v1163 = vpop.f32.mrb[0].mxu0
        %v1164 = vpop.f32.mrb[0].mxu0
        %1165 = vdwg.mxu0
        %vm1166 = vcmask 64512
        %v1167 = vsel %vm1166, %v1014, -inf
        %1168 = vmax.xlane.f32.xlu0 %v1167
        %v1169 = vpop.xlane.xlu0 %1168
        %v1170 = vsel %vm1166, %v1063, -inf
        %1171 = vmax.xlane.f32.xlu0 %v1170
        %v1172 = vpop.xlane.xlu0 %1171
        %v1173 = vsel %vm1166, %v1112, -inf
        %1174 = vmax.xlane.f32.xlu0 %v1173
        %v1175 = vpop.xlane.xlu0 %1174
        %v1176 = vsel %vm1166, %v1161, -inf
        %1177 = vmax.xlane.f32.xlu0 %v1176
        %v1178 = vpop.xlane.xlu0 %1177
        %v1179 = vsub.f32 %v1014, %v1169
        %v1180 = vsub.f32 %v1063, %v1172
        %v1181 = vsub.f32 %v1112, %v1175
        %v1182 = vsub.f32 %v1161, %v1178
        %v1183 = vmul.f32 %v1179, 1.442695
        %v1184 = vpow.pop %v1183
        %v1185 = vmul.f32 %v1180, 1.442695
        %v1186 = vpow.pop %v1185
        %v1187 = vmul.f32 %v1181, 1.442695
        %v1188 = vpow.pop %v1187
        %v1189 = vmul.f32 %v1182, 1.442695
        %v1190 = vpow.pop %v1189
        %v1191 = vsel %vm1166, %v1184, 0.0
        %1192 = vadd.xlane.f32.xlu0 %v1191
        %v1193 = vpop.xlane.xlu0 %1192
        %v1194 = vsel %vm1166, %v1186, 0.0
        %1195 = vadd.xlane.f32.xlu0 %v1194
        %v1196 = vpop.xlane.xlu0 %1195
        %v1197 = vsel %vm1166, %v1188, 0.0
        %1198 = vadd.xlane.f32.xlu0 %v1197
        %v1199 = vpop.xlane.xlu0 %1198
        %v1200 = vsel %vm1166, %v1190, 0.0
        %1201 = vadd.xlane.f32.xlu0 %v1200
        %v1202 = vpop.xlane.xlu0 %1201
        %v1203 = vrcp.pop %v1193
        %v1204 = vmul.f32 %v1184, %v1203
        %v1205 = vrcp.pop %v1196
        %v1206 = vmul.f32 %v1186, %v1205
        %v1207 = vrcp.pop %v1199
        %v1208 = vmul.f32 %v1188, %v1207
        %v1209 = vrcp.pop %v1202
        %v1210 = vmul.f32 %v1190, %v1209
        %v1211 = vpack.c.bf16 %v1204, %v1204
        %v1212 = vpack.c.bf16 %v1206, %v1206
        %v1213 = vpack.c.bf16 %v1208, %v1208
        %v1214 = vpack.c.bf16 %v1210, %v1210
        %1215 = vrot.lane.b32.xlu0 %v965, 64
        %v1216 = vpop.permute.xlu0 %1215
        %v1218 = vsel %vm1166, %v1211, 0
        %vm1220 = vcmask 1043456
        %v1222 = vsel %vm1220, %v1216, 0
        %1224 = vmatprep.subr.bf16.mxu0 0
        %1225 = vmatpush1.bf16.msra.mxu0 %v1222
        %1226 = vmatprep.subr.bf16.mxu0 0
        %1227 = vmatpush1.bf16.msra.mxu0 0
        %1228 = vmatprep.subr.bf16.mxu0 0
        %1229 = vmatpush1.bf16.msra.mxu0 0
        %1230 = vmatprep.subr.bf16.mxu0 0
        %1231 = vmatpush1.bf16.msra.mxu0 0
        %1232 = vmatprep.subr.bf16.mxu0 0
        %1233 = vmatpush1.bf16.msra.mxu0 0
        %1234 = vmatprep.subr.bf16.mxu0 0
        %1235 = vmatpush1.bf16.msra.mxu0 0
        %1236 = vmatprep.subr.bf16.mxu0 0
        %1237 = vmatpush1.bf16.msra.mxu0 0
        %1238 = vmatprep.subr.bf16.mxu0 0
        %1239 = vmatpush1.bf16.msra.mxu0 0
        %1240 = vmatprep.subr.bf16.mxu0 0
        %1241 = vmatpush1.bf16.msra.mxu0 0
        %1242 = vmatprep.subr.bf16.mxu0 0
        %1243 = vmatpush1.bf16.msra.mxu0 0
        %1244 = vmatprep.subr.bf16.mxu0 0
        %1245 = vmatpush1.bf16.msra.mxu0 0
        %1246 = vmatprep.subr.bf16.mxu0 0
        %1247 = vmatpush1.bf16.msra.mxu0 0
        %1248 = vmatprep.subr.bf16.mxu0 0
        %1249 = vmatpush1.bf16.msra.mxu0 0
        %1250 = vmatprep.subr.bf16.mxu0 0
        %1251 = vmatpush1.bf16.msra.mxu0 0
        %1252 = vmatprep.subr.bf16.mxu0 0
        %1253 = vmatpush1.bf16.msra.mxu0 0
        %1254 = vmatprep.subr.bf16.mxu0 0
        %1255 = vmatpush1.bf16.msra.mxu0 0
        %1256 = vmatprep.mubr.bf16.mxu0 0
        %1257 = vmatmul.mubr.bf16.gmra.mrb[0].mxu0 %v1218
        %v1258 = vpop.f32.mrb[0].mxu0
        %v1259 = vadd.f32 0.0, %v1258
        %v1260 = vpop.f32.mrb[0].mxu0
        %v1261 = vpop.f32.mrb[0].mxu0
        %v1262 = vpop.f32.mrb[0].mxu0
        %1263 = vdwg.mxu0
        %1264 = vrot.lane.b32.xlu0 %v966, 64
        %v1265 = vpop.permute.xlu0 %1264
        %v1267 = vsel %vm1166, %v1212, 0
        %v1270 = vsel %vm1220, %v1265, 0
        %1272 = vmatprep.subr.bf16.mxu0 0
        %1273 = vmatpush1.bf16.msra.mxu0 %v1270
        %1274 = vmatprep.subr.bf16.mxu0 0
        %1275 = vmatpush1.bf16.msra.mxu0 0
        %1276 = vmatprep.subr.bf16.mxu0 0
        %1277 = vmatpush1.bf16.msra.mxu0 0
        %1278 = vmatprep.subr.bf16.mxu0 0
        %1279 = vmatpush1.bf16.msra.mxu0 0
        %1280 = vmatprep.subr.bf16.mxu0 0
        %1281 = vmatpush1.bf16.msra.mxu0 0
        %1282 = vmatprep.subr.bf16.mxu0 0
        %1283 = vmatpush1.bf16.msra.mxu0 0
        %1284 = vmatprep.subr.bf16.mxu0 0
        %1285 = vmatpush1.bf16.msra.mxu0 0
        %1286 = vmatprep.subr.bf16.mxu0 0
        %1287 = vmatpush1.bf16.msra.mxu0 0
        %1288 = vmatprep.subr.bf16.mxu0 0
        %1289 = vmatpush1.bf16.msra.mxu0 0
        %1290 = vmatprep.subr.bf16.mxu0 0
        %1291 = vmatpush1.bf16.msra.mxu0 0
        %1292 = vmatprep.subr.bf16.mxu0 0
        %1293 = vmatpush1.bf16.msra.mxu0 0
        %1294 = vmatprep.subr.bf16.mxu0 0
        %1295 = vmatpush1.bf16.msra.mxu0 0
        %1296 = vmatprep.subr.bf16.mxu0 0
        %1297 = vmatpush1.bf16.msra.mxu0 0
        %1298 = vmatprep.subr.bf16.mxu0 0
        %1299 = vmatpush1.bf16.msra.mxu0 0
        %1300 = vmatprep.subr.bf16.mxu0 0
        %1301 = vmatpush1.bf16.msra.mxu0 0
        %1302 = vmatprep.subr.bf16.mxu0 0
        %1303 = vmatpush1.bf16.msra.mxu0 0
        %1304 = vmatprep.mubr.bf16.mxu0 0
        %1305 = vmatmul.mubr.bf16.gmra.mrb[0].mxu0 %v1267
        %v1306 = vpop.f32.mrb[0].mxu0
        %v1307 = vadd.f32 0.0, %v1306
        %v1308 = vpop.f32.mrb[0].mxu0
        %v1309 = vpop.f32.mrb[0].mxu0
        %v1310 = vpop.f32.mrb[0].mxu0
        %1311 = vdwg.mxu0
        %1312 = vrot.lane.b32.xlu0 %v967, 64
        %v1313 = vpop.permute.xlu0 %1312
        %v1315 = vsel %vm1166, %v1213, 0
        %v1318 = vsel %vm1220, %v1313, 0
        %1320 = vmatprep.subr.bf16.mxu0 0
        %1321 = vmatpush1.bf16.msra.mxu0 %v1318
        %1322 = vmatprep.subr.bf16.mxu0 0
        %1323 = vmatpush1.bf16.msra.mxu0 0
        %1324 = vmatprep.subr.bf16.mxu0 0
        %1325 = vmatpush1.bf16.msra.mxu0 0
        %1326 = vmatprep.subr.bf16.mxu0 0
        %1327 = vmatpush1.bf16.msra.mxu0 0
        %1328 = vmatprep.subr.bf16.mxu0 0
        %1329 = vmatpush1.bf16.msra.mxu0 0
        %1330 = vmatprep.subr.bf16.mxu0 0
        %1331 = vmatpush1.bf16.msra.mxu0 0
        %1332 = vmatprep.subr.bf16.mxu0 0
        %1333 = vmatpush1.bf16.msra.mxu0 0
        %1334 = vmatprep.subr.bf16.mxu0 0
        %1335 = vmatpush1.bf16.msra.mxu0 0
        %1336 = vmatprep.subr.bf16.mxu0 0
        %1337 = vmatpush1.bf16.msra.mxu0 0
        %1338 = vmatprep.subr.bf16.mxu0 0
        %1339 = vmatpush1.bf16.msra.mxu0 0
        %1340 = vmatprep.subr.bf16.mxu0 0
        %1341 = vmatpush1.bf16.msra.mxu0 0
        %1342 = vmatprep.subr.bf16.mxu0 0
        %1343 = vmatpush1.bf16.msra.mxu0 0
        %1344 = vmatprep.subr.bf16.mxu0 0
        %1345 = vmatpush1.bf16.msra.mxu0 0
        %1346 = vmatprep.subr.bf16.mxu0 0
        %1347 = vmatpush1.bf16.msra.mxu0 0
        %1348 = vmatprep.subr.bf16.mxu0 0
        %1349 = vmatpush1.bf16.msra.mxu0 0
        %1350 = vmatprep.subr.bf16.mxu0 0
        %1351 = vmatpush1.bf16.msra.mxu0 0
        %1352 = vmatprep.mubr.bf16.mxu0 0
        %1353 = vmatmul.mubr.bf16.gmra.mrb[0].mxu0 %v1315
        %v1354 = vpop.f32.mrb[0].mxu0
        %v1355 = vadd.f32 0.0, %v1354
        %v1356 = vpop.f32.mrb[0].mxu0
        %v1357 = vpop.f32.mrb[0].mxu0
        %v1358 = vpop.f32.mrb[0].mxu0
        %1359 = vdwg.mxu0
        %1360 = vrot.lane.b32.xlu0 %v968, 64
        %v1361 = vpop.permute.xlu0 %1360
        %v1363 = vsel %vm1166, %v1214, 0
        %v1366 = vsel %vm1220, %v1361, 0
        %1368 = vmatprep.subr.bf16.mxu0 0
        %1369 = vmatpush1.bf16.msra.mxu0 %v1366
        %1370 = vmatprep.subr.bf16.mxu0 0
        %1371 = vmatpush1.bf16.msra.mxu0 0
        %1372 = vmatprep.subr.bf16.mxu0 0
        %1373 = vmatpush1.bf16.msra.mxu0 0
        %1374 = vmatprep.subr.bf16.mxu0 0
        %1375 = vmatpush1.bf16.msra.mxu0 0
        %1376 = vmatprep.subr.bf16.mxu0 0
        %1377 = vmatpush1.bf16.msra.mxu0 0
        %1378 = vmatprep.subr.bf16.mxu0 0
        %1379 = vmatpush1.bf16.msra.mxu0 0
        %1380 = vmatprep.subr.bf16.mxu0 0
        %1381 = vmatpush1.bf16.msra.mxu0 0
        %1382 = vmatprep.subr.bf16.mxu0 0
        %1383 = vmatpush1.bf16.msra.mxu0 0
        %1384 = vmatprep.subr.bf16.mxu0 0
        %1385 = vmatpush1.bf16.msra.mxu0 0
        %1386 = vmatprep.subr.bf16.mxu0 0
        %1387 = vmatpush1.bf16.msra.mxu0 0
        %1388 = vmatprep.subr.bf16.mxu0 0
        %1389 = vmatpush1.bf16.msra.mxu0 0
        %1390 = vmatprep.subr.bf16.mxu0 0
        %1391 = vmatpush1.bf16.msra.mxu0 0
        %1392 = vmatprep.subr.bf16.mxu0 0
        %1393 = vmatpush1.bf16.msra.mxu0 0
        %1394 = vmatprep.subr.bf16.mxu0 0
        %1395 = vmatpush1.bf16.msra.mxu0 0
        %1396 = vmatprep.subr.bf16.mxu0 0
        %1397 = vmatpush1.bf16.msra.mxu0 0
        %1398 = vmatprep.subr.bf16.mxu0 0
        %1399 = vmatpush1.bf16.msra.mxu0 0
        %1400 = vmatprep.mubr.bf16.mxu0 0
        %1401 = vmatmul.mubr.bf16.gmra.mrb[0].mxu0 %v1363
        %v1402 = vpop.f32.mrb[0].mxu0
        %v1403 = vadd.f32 0.0, %v1402
        %v1404 = vpop.f32.mrb[0].mxu0
        %v1405 = vpop.f32.mrb[0].mxu0
        %v1406 = vpop.f32.mrb[0].mxu0
        %1407 = vdwg.mxu0
        %v1408 = vpack.c.bf16 %v1259, %v1259
        %v1409 = vpack.c.bf16 %v1307, %v1307
        %v1410 = vpack.c.bf16 %v1355, %v1355
        %v1411 = vpack.c.bf16 %v1403, %v1403
        %v1412 = vld [vmem:[%s5] sm:$0xf]
        %v1413 = vld [vmem:[%s5 + $0x4] sm:$0xf]
        %v1414 = vld [vmem:[%s5 + $0x8] sm:$0xf]
        %v1415 = vld [vmem:[%s5 + $0xc] sm:$0xf]
        %v1416 = vld [vmem:[%s5 + $0x10] sm:$0xf]
        %v1417 = vld [vmem:[%s5 + $0x14] sm:$0xf]
        %v1418 = vld [vmem:[%s5 + $0x18] sm:$0xf]
        %v1419 = vld [vmem:[%s5 + $0x1c] sm:$0xf]
        %v1420 = vld [vmem:[%s5 + $0x20] sm:$0xf]
        %v1421 = vld [vmem:[%s5 + $0x24] sm:$0xf]
        %v1422 = vld [vmem:[%s5 + $0x28] sm:$0xf]
        %v1423 = vld [vmem:[%s5 + $0x2c] sm:$0xf]
        %v1424 = vld [vmem:[%s5 + $0x30] sm:$0xf]
        %v1425 = vld [vmem:[%s5 + $0x34] sm:$0xf]
        %v1426 = vld [vmem:[%s5 + $0x38] sm:$0xf]
        %v1427 = vld [vmem:[%s5 + $0x3c] sm:$0xf]
        %v1432 = vunpack.c.l.b16 %v1412
        %v1433 = vunpack.c.l.b16 %v1413
        %v1434 = vunpack.c.l.b16 %v1414
        %v1435 = vunpack.c.l.b16 %v1415
        %v1436 = vpack.c.b16 %v1433, %v1432
        %v1437 = vpack.c.b16 %v1435, %v1434
        %v1441 = vsel %vm972, %v1408, 0
        %1443 = vmatprep.subr.bf16.mxu0 0
        %1444 = vmatpush1.bf16.msra.mxu0 %v1436
        %1445 = vmatprep.subr.bf16.mxu0 0
        %1446 = vmatpush1.bf16.msra.mxu0 %v1437
        %1447 = vmatprep.subr.bf16.mxu0 0
        %1448 = vmatpush1.bf16.msra.mxu0 0
        %1449 = vmatprep.subr.bf16.mxu0 0
        %1450 = vmatpush1.bf16.msra.mxu0 0
        %1451 = vmatprep.subr.bf16.mxu0 0
        %1452 = vmatpush1.bf16.msra.mxu0 0
        %1453 = vmatprep.subr.bf16.mxu0 0
        %1454 = vmatpush1.bf16.msra.mxu0 0
        %1455 = vmatprep.subr.bf16.mxu0 0
        %1456 = vmatpush1.bf16.msra.mxu0 0
        %1457 = vmatprep.subr.bf16.mxu0 0
        %1458 = vmatpush1.bf16.msra.mxu0 0
        %1459 = vmatprep.subr.bf16.mxu0 0
        %1460 = vmatpush1.bf16.msra.mxu0 0
        %1461 = vmatprep.subr.bf16.mxu0 0
        %1462 = vmatpush1.bf16.msra.mxu0 0
        %1463 = vmatprep.subr.bf16.mxu0 0
        %1464 = vmatpush1.bf16.msra.mxu0 0
        %1465 = vmatprep.subr.bf16.mxu0 0
        %1466 = vmatpush1.bf16.msra.mxu0 0
        %1467 = vmatprep.subr.bf16.mxu0 0
        %1468 = vmatpush1.bf16.msra.mxu0 0
        %1469 = vmatprep.subr.bf16.mxu0 0
        %1470 = vmatpush1.bf16.msra.mxu0 0
        %1471 = vmatprep.subr.bf16.mxu0 0
        %1472 = vmatpush1.bf16.msra.mxu0 0
        %1473 = vmatprep.subr.bf16.mxu0 0
        %1474 = vmatpush1.bf16.msra.mxu0 0
        %1475 = vmatprep.mubr.bf16.mxu0 0
        %1476 = vmatmul.mubr.bf16.gmra.mrb[0].mxu0 %v1441
        %v1477 = vpop.f32.mrb[0].mxu0
        %v1478 = vadd.f32 0.0, %v1477
        %v1479 = vpop.f32.mrb[0].mxu0
        %v1480 = vpop.f32.mrb[0].mxu0
        %v1481 = vpop.f32.mrb[0].mxu0
        %1482 = vdwg.mxu0
        %v1487 = vunpack.c.l.b16 %v1416
        %v1488 = vunpack.c.l.b16 %v1417
        %v1489 = vunpack.c.l.b16 %v1418
        %v1490 = vunpack.c.l.b16 %v1419
        %v1491 = vpack.c.b16 %v1488, %v1487
        %v1492 = vpack.c.b16 %v1490, %v1489
        %v1496 = vsel %vm972, %v1409, 0
        %1498 = vmatprep.subr.bf16.mxu0 0
        %1499 = vmatpush1.bf16.msra.mxu0 %v1491
        %1500 = vmatprep.subr.bf16.mxu0 0
        %1501 = vmatpush1.bf16.msra.mxu0 %v1492
        %1502 = vmatprep.subr.bf16.mxu0 0
        %1503 = vmatpush1.bf16.msra.mxu0 0
        %1504 = vmatprep.subr.bf16.mxu0 0
        %1505 = vmatpush1.bf16.msra.mxu0 0
        %1506 = vmatprep.subr.bf16.mxu0 0
        %1507 = vmatpush1.bf16.msra.mxu0 0
        %1508 = vmatprep.subr.bf16.mxu0 0
        %1509 = vmatpush1.bf16.msra.mxu0 0
        %1510 = vmatprep.subr.bf16.mxu0 0
        %1511 = vmatpush1.bf16.msra.mxu0 0
        %1512 = vmatprep.subr.bf16.mxu0 0
        %1513 = vmatpush1.bf16.msra.mxu0 0
        %1514 = vmatprep.subr.bf16.mxu0 0
        %1515 = vmatpush1.bf16.msra.mxu0 0
        %1516 = vmatprep.subr.bf16.mxu0 0
        %1517 = vmatpush1.bf16.msra.mxu0 0
        %1518 = vmatprep.subr.bf16.mxu0 0
        %1519 = vmatpush1.bf16.msra.mxu0 0
        %1520 = vmatprep.subr.bf16.mxu0 0
        %1521 = vmatpush1.bf16.msra.mxu0 0
        %1522 = vmatprep.subr.bf16.mxu0 0
        %1523 = vmatpush1.bf16.msra.mxu0 0
        %1524 = vmatprep.subr.bf16.mxu0 0
        %1525 = vmatpush1.bf16.msra.mxu0 0
        %1526 = vmatprep.subr.bf16.mxu0 0
        %1527 = vmatpush1.bf16.msra.mxu0 0
        %1528 = vmatprep.subr.bf16.mxu0 0
        %1529 = vmatpush1.bf16.msra.mxu0 0
        %1530 = vmatprep.mubr.bf16.mxu0 0
        %1531 = vmatmul.mubr.bf16.gmra.mrb[0].mxu0 %v1496
        %v1532 = vpop.f32.mrb[0].mxu0
        %v1533 = vadd.f32 0.0, %v1532
        %v1534 = vpop.f32.mrb[0].mxu0
        %v1535 = vpop.f32.mrb[0].mxu0
        %v1536 = vpop.f32.mrb[0].mxu0
        %1537 = vdwg.mxu0
        %v1542 = vunpack.c.l.b16 %v1420
        %v1543 = vunpack.c.l.b16 %v1421
        %v1544 = vunpack.c.l.b16 %v1422
        %v1545 = vunpack.c.l.b16 %v1423
        %v1546 = vpack.c.b16 %v1543, %v1542
        %v1547 = vpack.c.b16 %v1545, %v1544
        %v1551 = vsel %vm972, %v1410, 0
        %1553 = vmatprep.subr.bf16.mxu0 0
        %1554 = vmatpush1.bf16.msra.mxu0 %v1546
        %1555 = vmatprep.subr.bf16.mxu0 0
        %1556 = vmatpush1.bf16.msra.mxu0 %v1547
        %1557 = vmatprep.subr.bf16.mxu0 0
        %1558 = vmatpush1.bf16.msra.mxu0 0
        %1559 = vmatprep.subr.bf16.mxu0 0
        %1560 = vmatpush1.bf16.msra.mxu0 0
        %1561 = vmatprep.subr.bf16.mxu0 0
        %1562 = vmatpush1.bf16.msra.mxu0 0
        %1563 = vmatprep.subr.bf16.mxu0 0
        %1564 = vmatpush1.bf16.msra.mxu0 0
        %1565 = vmatprep.subr.bf16.mxu0 0
        %1566 = vmatpush1.bf16.msra.mxu0 0
        %1567 = vmatprep.subr.bf16.mxu0 0
        %1568 = vmatpush1.bf16.msra.mxu0 0
        %1569 = vmatprep.subr.bf16.mxu0 0
        %1570 = vmatpush1.bf16.msra.mxu0 0
        %1571 = vmatprep.subr.bf16.mxu0 0
        %1572 = vmatpush1.bf16.msra.mxu0 0
        %1573 = vmatprep.subr.bf16.mxu0 0
        %1574 = vmatpush1.bf16.msra.mxu0 0
        %1575 = vmatprep.subr.bf16.mxu0 0
        %1576 = vmatpush1.bf16.msra.mxu0 0
        %1577 = vmatprep.subr.bf16.mxu0 0
        %1578 = vmatpush1.bf16.msra.mxu0 0
        %1579 = vmatprep.subr.bf16.mxu0 0
        %1580 = vmatpush1.bf16.msra.mxu0 0
        %1581 = vmatprep.subr.bf16.mxu0 0
        %1582 = vmatpush1.bf16.msra.mxu0 0
        %1583 = vmatprep.subr.bf16.mxu0 0
        %1584 = vmatpush1.bf16.msra.mxu0 0
        %1585 = vmatprep.mubr.bf16.mxu0 0
        %1586 = vmatmul.mubr.bf16.gmra.mrb[0].mxu0 %v1551
        %v1587 = vpop.f32.mrb[0].mxu0
        %v1588 = vadd.f32 0.0, %v1587
        %v1589 = vpop.f32.mrb[0].mxu0
        %v1590 = vpop.f32.mrb[0].mxu0
        %v1591 = vpop.f32.mrb[0].mxu0
        %1592 = vdwg.mxu0
        %v1597 = vunpack.c.l.b16 %v1424
        %v1598 = vunpack.c.l.b16 %v1425
        %v1599 = vunpack.c.l.b16 %v1426
        %v1600 = vunpack.c.l.b16 %v1427
        %v1601 = vpack.c.b16 %v1598, %v1597
        %v1602 = vpack.c.b16 %v1600, %v1599
        %v1606 = vsel %vm972, %v1411, 0
        %1608 = vmatprep.subr.bf16.mxu0 0
        %1609 = vmatpush1.bf16.msra.mxu0 %v1601
        %1610 = vmatprep.subr.bf16.mxu0 0
        %1611 = vmatpush1.bf16.msra.mxu0 %v1602
        %1612 = vmatprep.subr.bf16.mxu0 0
        %1613 = vmatpush1.bf16.msra.mxu0 0
        %1614 = vmatprep.subr.bf16.mxu0 0
        %1615 = vmatpush1.bf16.msra.mxu0 0
        %1616 = vmatprep.subr.bf16.mxu0 0
        %1617 = vmatpush1.bf16.msra.mxu0 0
        %1618 = vmatprep.subr.bf16.mxu0 0
        %1619 = vmatpush1.bf16.msra.mxu0 0
        %1620 = vmatprep.subr.bf16.mxu0 0
        %1621 = vmatpush1.bf16.msra.mxu0 0
        %1622 = vmatprep.subr.bf16.mxu0 0
        %1623 = vmatpush1.bf16.msra.mxu0 0
        %1624 = vmatprep.subr.bf16.mxu0 0
        %1625 = vmatpush1.bf16.msra.mxu0 0
        %1626 = vmatprep.subr.bf16.mxu0 0
        %1627 = vmatpush1.bf16.msra.mxu0 0
        %1628 = vmatprep.subr.bf16.mxu0 0
        %1629 = vmatpush1.bf16.msra.mxu0 0
        %1630 = vmatprep.subr.bf16.mxu0 0
        %1631 = vmatpush1.bf16.msra.mxu0 0
        %1632 = vmatprep.subr.bf16.mxu0 0
        %1633 = vmatpush1.bf16.msra.mxu0 0
        %1634 = vmatprep.subr.bf16.mxu0 0
        %1635 = vmatpush1.bf16.msra.mxu0 0
        %1636 = vmatprep.subr.bf16.mxu0 0
        %1637 = vmatpush1.bf16.msra.mxu0 0
        %1638 = vmatprep.subr.bf16.mxu0 0
        %1639 = vmatpush1.bf16.msra.mxu0 0
        %1640 = vmatprep.mubr.bf16.mxu0 0
        %1641 = vmatmul.mubr.bf16.gmra.mrb[0].mxu0 %v1606
        %v1642 = vpop.f32.mrb[0].mxu0
        %v1643 = vadd.f32 0.0, %v1642
        %v1644 = vpop.f32.mrb[0].mxu0
        %v1645 = vpop.f32.mrb[0].mxu0
        %v1646 = vpop.f32.mrb[0].mxu0
        %1647 = vdwg.mxu0
        %v1648 = vadd.f32 %v1478, %v1533
        %v1649 = vadd.f32 %v1648, %v1588
        %v1650 = vadd.f32 %v1649, %v1643
        %v1651 = vld [vmem:[%s6] sm:$0x1]
        %v1653 = vlaneseq
        %v1654 = vshrl.u32 %v1653, 7
        %v1655 = vsub.s32 0, %v1654
        %v1656 = vrot.slane %v1651, %v1655
        %v1658 = vadd.f32 %v1650, %v1656
        %v1659 = vadd.f32 %v1658, %v519
        %v1660 = vld [vmem:[%s7] sm:$0x1]
        %v1661 = vld [vmem:[%s8] sm:$0x1]
        %1662 = vadd.xlane.f32.xlu0 %v1659
        %v1663 = vpop.xlane.xlu0 %1662
        %v1664 = vmul.f32 %v1663, %v496
        %v1665 = vsub.f32 %v1659, %v1664
        %v1666 = vmul.f32 %v1665, %v1665
        %1667 = vadd.xlane.f32.xlu0 %v1666
        %v1668 = vpop.xlane.xlu0 %1667
        %v1669 = vmul.f32 %v1668, %v496
        %v1670 = vadd.f32 %v1669, 1e-12
        %v1671 = vrsqrt.pop %v1670
        %v1672 = vmul.f32 %v1665, %v1671
        %v1674 = vlaneseq
        %v1675 = vshrl.u32 %v1674, 7
        %v1676 = vsub.s32 0, %v1675
        %v1677 = vrot.slane %v1660, %v1676
        %v1679 = vmul.f32 %v1672, %v1677
        %v1681 = vlaneseq
        %v1682 = vshrl.u32 %v1681, 7
        %v1683 = vsub.s32 0, %v1682
        %v1684 = vrot.slane %v1661, %v1683
        %v1686 = vadd.f32 %v1679, %v1684
        %v1687 = vpack.c.bf16 %v1686, %v1686
        %v1688 = vld [vmem:[%s9] sm:$0xff]
        %v1689 = vld [vmem:[%s9 + $0x8] sm:$0xff]
        %v1690 = vld [vmem:[%s9 + $0x10] sm:$0xff]
        %v1691 = vld [vmem:[%s9 + $0x18] sm:$0xff]
        %v1692 = vld [vmem:[%s9 + $0x20] sm:$0xff]
        %v1693 = vld [vmem:[%s9 + $0x28] sm:$0xff]
        %v1694 = vld [vmem:[%s9 + $0x30] sm:$0xff]
        %v1695 = vld [vmem:[%s9 + $0x38] sm:$0xff]
        %v1696 = vld [vmem:[%s9 + $0x40] sm:$0xff]
        %v1697 = vld [vmem:[%s9 + $0x48] sm:$0xff]
        %v1698 = vld [vmem:[%s9 + $0x50] sm:$0xff]
        %v1699 = vld [vmem:[%s9 + $0x58] sm:$0xff]
        %v1700 = vld [vmem:[%s9 + $0x60] sm:$0xff]
        %v1701 = vld [vmem:[%s9 + $0x68] sm:$0xff]
        %v1702 = vld [vmem:[%s9 + $0x70] sm:$0xff]
        %v1703 = vld [vmem:[%s9 + $0x78] sm:$0xff]
        %v1704 = vld [vmem:[%s9 + $0x80] sm:$0xff]
        %v1705 = vld [vmem:[%s9 + $0x88] sm:$0xff]
        %v1706 = vld [vmem:[%s9 + $0x90] sm:$0xff]
        %v1707 = vld [vmem:[%s9 + $0x98] sm:$0xff]
        %v1708 = vld [vmem:[%s9 + $0xa0] sm:$0xff]
        %v1709 = vld [vmem:[%s9 + $0xa8] sm:$0xff]
        %v1710 = vld [vmem:[%s9 + $0xb0] sm:$0xff]
        %v1711 = vld [vmem:[%s9 + $0xb8] sm:$0xff]
        %v1712 = vld [vmem:[%s9 + $0xc0] sm:$0xff]
        %v1713 = vld [vmem:[%s9 + $0xc8] sm:$0xff]
        %v1714 = vld [vmem:[%s9 + $0xd0] sm:$0xff]
        %v1715 = vld [vmem:[%s9 + $0xd8] sm:$0xff]
        %v1716 = vld [vmem:[%s9 + $0xe0] sm:$0xff]
        %v1717 = vld [vmem:[%s9 + $0xe8] sm:$0xff]
        %v1718 = vld [vmem:[%s9 + $0xf0] sm:$0xff]
        %v1719 = vld [vmem:[%s9 + $0xf8] sm:$0xff]
        %v1720 = vld [vmem:[%s10] sm:$0xf]
        %v1722 = vlaneseq
        %v1723 = vshrl.u32 %v1722, 7
        %v1724 = vsub.s32 0, %v1723
        %v1725 = vrot.slane %v1720, %v1724
        %v1726 = vlaneseq
        %v1727 = vshrl.u32 %v1726, 7
        %v1728 = vsub.s32 1, %v1727
        %v1729 = vrot.slane %v1720, %v1728
        %v1730 = vlaneseq
        %v1731 = vshrl.u32 %v1730, 7
        %v1732 = vsub.s32 2, %v1731
        %v1733 = vrot.slane %v1720, %v1732
        %v1734 = vlaneseq
        %v1735 = vshrl.u32 %v1734, 7
        %v1736 = vsub.s32 3, %v1735
        %v1737 = vrot.slane %v1720, %v1736
        %v1774 = vunpack.c.l.b16 %v1688
        %v1775 = vunpack.c.h.b16 %v1688
        %v1776 = vunpack.c.l.b16 %v1689
        %v1777 = vunpack.c.h.b16 %v1689
        %v1778 = vunpack.c.l.b16 %v1690
        %v1779 = vunpack.c.h.b16 %v1690
        %v1780 = vunpack.c.l.b16 %v1691
        %v1781 = vunpack.c.h.b16 %v1691
        %v1782 = vunpack.c.l.b16 %v1692
        %v1783 = vunpack.c.h.b16 %v1692
        %v1784 = vunpack.c.l.b16 %v1693
        %v1785 = vunpack.c.h.b16 %v1693
        %v1786 = vunpack.c.l.b16 %v1694
        %v1787 = vunpack.c.h.b16 %v1694
        %v1788 = vunpack.c.l.b16 %v1695
        %v1789 = vunpack.c.h.b16 %v1695
        %v1790 = vunpack.c.l.b16 %v1696
        %v1791 = vunpack.c.h.b16 %v1696
        %v1792 = vunpack.c.l.b16 %v1697
        %v1793 = vunpack.c.h.b16 %v1697
        %v1794 = vunpack.c.l.b16 %v1698
        %v1795 = vunpack.c.h.b16 %v1698
        %v1796 = vunpack.c.l.b16 %v1699
        %v1797 = vunpack.c.h.b16 %v1699
        %v1798 = vunpack.c.l.b16 %v1700
        %v1799 = vunpack.c.h.b16 %v1700
        %v1800 = vunpack.c.l.b16 %v1701
        %v1801 = vunpack.c.h.b16 %v1701
        %v1802 = vunpack.c.l.b16 %v1702
        %v1803 = vunpack.c.h.b16 %v1702
        %v1804 = vunpack.c.l.b16 %v1703
        %v1805 = vunpack.c.h.b16 %v1703
        %v1806 = vunpack.c.l.b16 %v1704
        %v1807 = vunpack.c.h.b16 %v1704
        %v1808 = vunpack.c.l.b16 %v1705
        %v1809 = vunpack.c.h.b16 %v1705
        %v1810 = vunpack.c.l.b16 %v1706
        %v1811 = vunpack.c.h.b16 %v1706
        %v1812 = vunpack.c.l.b16 %v1707
        %v1813 = vunpack.c.h.b16 %v1707
        %v1814 = vunpack.c.l.b16 %v1708
        %v1815 = vunpack.c.h.b16 %v1708
        %v1816 = vunpack.c.l.b16 %v1709
        %v1817 = vunpack.c.h.b16 %v1709
        %v1818 = vunpack.c.l.b16 %v1710
        %v1819 = vunpack.c.h.b16 %v1710
        %v1820 = vunpack.c.l.b16 %v1711
        %v1821 = vunpack.c.h.b16 %v1711
        %v1822 = vunpack.c.l.b16 %v1712
        %v1823 = vunpack.c.h.b16 %v1712
        %v1824 = vunpack.c.l.b16 %v1713
        %v1825 = vunpack.c.h.b16 %v1713
        %v1826 = vunpack.c.l.b16 %v1714
        %v1827 = vunpack.c.h.b16 %v1714
        %v1828 = vunpack.c.l.b16 %v1715
        %v1829 = vunpack.c.h.b16 %v1715
        %v1830 = vunpack.c.l.b16 %v1716
        %v1831 = vunpack.c.h.b16 %v1716
        %v1832 = vunpack.c.l.b16 %v1717
        %v1833 = vunpack.c.h.b16 %v1717
        %v1834 = vunpack.c.l.b16 %v1718
        %v1835 = vunpack.c.h.b16 %v1718
        %v1836 = vunpack.c.l.b16 %v1719
        %v1837 = vunpack.c.h.b16 %v1719
        %v1838 = vpack.c.b16 %v1778, %v1774
        %v1839 = vpack.c.b16 %v1779, %v1775
        %v1840 = vpack.c.b16 %v1780, %v1776
        %v1841 = vpack.c.b16 %v1781, %v1777
        %v1842 = vpack.c.b16 %v1786, %v1782
        %v1843 = vpack.c.b16 %v1787, %v1783
        %v1844 = vpack.c.b16 %v1788, %v1784
        %v1845 = vpack.c.b16 %v1789, %v1785
        %v1846 = vpack.c.b16 %v1794, %v1790
        %v1847 = vpack.c.b16 %v1795, %v1791
        %v1848 = vpack.c.b16 %v1796, %v1792
        %v1849 = vpack.c.b16 %v1797, %v1793
        %v1850 = vpack.c.b16 %v1802, %v1798
        %v1851 = vpack.c.b16 %v1803, %v1799
        %v1852 = vpack.c.b16 %v1804, %v1800
        %v1853 = vpack.c.b16 %v1805, %v1801
        %v1854 = vpack.c.b16 %v1810, %v1806
        %v1855 = vpack.c.b16 %v1811, %v1807
        %v1856 = vpack.c.b16 %v1812, %v1808
        %v1857 = vpack.c.b16 %v1813, %v1809
        %v1858 = vpack.c.b16 %v1818, %v1814
        %v1859 = vpack.c.b16 %v1819, %v1815
        %v1860 = vpack.c.b16 %v1820, %v1816
        %v1861 = vpack.c.b16 %v1821, %v1817
        %v1862 = vpack.c.b16 %v1826, %v1822
        %v1863 = vpack.c.b16 %v1827, %v1823
        %v1864 = vpack.c.b16 %v1828, %v1824
        %v1865 = vpack.c.b16 %v1829, %v1825
        %v1866 = vpack.c.b16 %v1834, %v1830
        %v1867 = vpack.c.b16 %v1835, %v1831
        %v1868 = vpack.c.b16 %v1836, %v1832
        %v1869 = vpack.c.b16 %v1837, %v1833
        %1902 = vmatprep.subr.bf16.mxu0 %v1839
        %1903 = vmatpush1.bf16.msra.mxu0 %v1838
        %1904 = vmatprep.subr.bf16.mxu0 %v1843
        %1905 = vmatpush1.bf16.msra.mxu0 %v1842
        %1906 = vmatprep.subr.bf16.mxu0 %v1847
        %1907 = vmatpush1.bf16.msra.mxu0 %v1846
        %1908 = vmatprep.subr.bf16.mxu0 %v1851
        %1909 = vmatpush1.bf16.msra.mxu0 %v1850
        %1910 = vmatprep.subr.bf16.mxu0 %v1855
        %1911 = vmatpush1.bf16.msra.mxu0 %v1854
        %1912 = vmatprep.subr.bf16.mxu0 %v1859
        %1913 = vmatpush1.bf16.msra.mxu0 %v1858
        %1914 = vmatprep.subr.bf16.mxu0 %v1863
        %1915 = vmatpush1.bf16.msra.mxu0 %v1862
        %1916 = vmatprep.subr.bf16.mxu0 %v1867
        %1917 = vmatpush1.bf16.msra.mxu0 %v1866
        %1918 = vmatprep.subr.bf16.mxu0 0
        %1919 = vmatpush1.bf16.msra.mxu0 0
        %1920 = vmatprep.subr.bf16.mxu0 0
        %1921 = vmatpush1.bf16.msra.mxu0 0
        %1922 = vmatprep.subr.bf16.mxu0 0
        %1923 = vmatpush1.bf16.msra.mxu0 0
        %1924 = vmatprep.subr.bf16.mxu0 0
        %1925 = vmatpush1.bf16.msra.mxu0 0
        %1926 = vmatprep.subr.bf16.mxu0 0
        %1927 = vmatpush1.bf16.msra.mxu0 0
        %1928 = vmatprep.subr.bf16.mxu0 0
        %1929 = vmatpush1.bf16.msra.mxu0 0
        %1930 = vmatprep.subr.bf16.mxu0 0
        %1931 = vmatpush1.bf16.msra.mxu0 0
        %1932 = vmatprep.subr.bf16.mxu0 0
        %1933 = vmatpush1.bf16.msra.mxu0 0
        %1934 = vmatprep.mubr.bf16.mxu0 0
        %1935 = vmatmul.mubr.bf16.gmra.mrb[0].mxu0 %v1687
        %v1936 = vpop.f32.mrb[0].mxu0
        %v1937 = vadd.f32 %v1725, %v1936
        %v1938 = vpop.f32.mrb[0].mxu0
        %v1939 = vadd.f32 %v1729, %v1938
        %v1940 = vpop.f32.mrb[0].mxu0
        %v1941 = vpop.f32.mrb[0].mxu0
        %1942 = vdwg.mxu0
        %1943 = vmatprep.subr.bf16.mxu0 %v1841
        %1944 = vmatpush1.bf16.msra.mxu0 %v1840
        %1945 = vmatprep.subr.bf16.mxu0 %v1845
        %1946 = vmatpush1.bf16.msra.mxu0 %v1844
        %1947 = vmatprep.subr.bf16.mxu0 %v1849
        %1948 = vmatpush1.bf16.msra.mxu0 %v1848
        %1949 = vmatprep.subr.bf16.mxu0 %v1853
        %1950 = vmatpush1.bf16.msra.mxu0 %v1852
        %1951 = vmatprep.subr.bf16.mxu0 %v1857
        %1952 = vmatpush1.bf16.msra.mxu0 %v1856
        %1953 = vmatprep.subr.bf16.mxu0 %v1861
        %1954 = vmatpush1.bf16.msra.mxu0 %v1860
        %1955 = vmatprep.subr.bf16.mxu0 %v1865
        %1956 = vmatpush1.bf16.msra.mxu0 %v1864
        %1957 = vmatprep.subr.bf16.mxu0 %v1869
        %1958 = vmatpush1.bf16.msra.mxu0 %v1868
        %1959 = vmatprep.subr.bf16.mxu0 0
        %1960 = vmatpush1.bf16.msra.mxu0 0
        %1961 = vmatprep.subr.bf16.mxu0 0
        %1962 = vmatpush1.bf16.msra.mxu0 0
        %1963 = vmatprep.subr.bf16.mxu0 0
        %1964 = vmatpush1.bf16.msra.mxu0 0
        %1965 = vmatprep.subr.bf16.mxu0 0
        %1966 = vmatpush1.bf16.msra.mxu0 0
        %1967 = vmatprep.subr.bf16.mxu0 0
        %1968 = vmatpush1.bf16.msra.mxu0 0
        %1969 = vmatprep.subr.bf16.mxu0 0
        %1970 = vmatpush1.bf16.msra.mxu0 0
        %1971 = vmatprep.subr.bf16.mxu0 0
        %1972 = vmatpush1.bf16.msra.mxu0 0
        %1973 = vmatprep.subr.bf16.mxu0 0
        %1974 = vmatpush1.bf16.msra.mxu0 0
        %1975 = vmatprep.mubr.bf16.mxu0 0
        %1976 = vmatmul.mubr.bf16.gmra.mrb[0].mxu0 %v1687
        %v1977 = vpop.f32.mrb[0].mxu0
        %v1978 = vadd.f32 %v1733, %v1977
        %v1979 = vpop.f32.mrb[0].mxu0
        %v1980 = vadd.f32 %v1737, %v1979
        %v1981 = vpop.f32.mrb[0].mxu0
        %v1982 = vpop.f32.mrb[0].mxu0
        %1983 = vdwg.mxu0
        %v1984 = vmul.f32 %v1937, 0.5
        %v1985 = vmul.f32 %v1939, 0.5
        %v1986 = vmul.f32 %v1978, 0.5
        %v1987 = vmul.f32 %v1980, 0.5
        %v1988 = vmul.f32 %v1937, 0.044715
        %v1989 = vmul.f32 %v1939, 0.044715
        %v1990 = vmul.f32 %v1978, 0.044715
        %v1991 = vmul.f32 %v1980, 0.044715
        %v1992 = vmul.f32 %v1988, %v1937
        %v1993 = vmul.f32 %v1989, %v1939
        %v1994 = vmul.f32 %v1990, %v1978
        %v1995 = vmul.f32 %v1991, %v1980
        %v1996 = vmul.f32 %v1992, %v1937
        %v1997 = vmul.f32 %v1993, %v1939
        %v1998 = vmul.f32 %v1994, %v1978
        %v1999 = vmul.f32 %v1995, %v1980
        %v2000 = vadd.f32 %v1937, %v1996
        %v2001 = vadd.f32 %v1939, %v1997
        %v2002 = vadd.f32 %v1978, %v1998
        %v2003 = vadd.f32 %v1980, %v1999
        %v2004 = vmul.f32 %v2000, 0.7978846
        %v2005 = vmul.f32 %v2001, 0.7978846
        %v2006 = vmul.f32 %v2002, 0.7978846
        %v2007 = vmul.f32 %v2003, 0.7978846
        %v2008 = vtanh.pop %v2004
        %v2009 = vtanh.pop %v2005
        %v2010 = vtanh.pop %v2006
        %v2011 = vtanh.pop %v2007
        %v2012 = vadd.f32 %v2008, 1.0
        %v2013 = vadd.f32 %v2009, 1.0
        %v2014 = vadd.f32 %v2010, 1.0
        %v2015 = vadd.f32 %v2011, 1.0
        %v2016 = vmul.f32 %v1984, %v2012
        %v2017 = vmul.f32 %v1985, %v2013
        %v2018 = vmul.f32 %v1986, %v2014
        %v2019 = vmul.f32 %v1987, %v2015
        %v2020 = vpack.c.bf16 %v2016, %v2016
        %v2021 = vpack.c.bf16 %v2017, %v2017
        %v2022 = vpack.c.bf16 %v2018, %v2018
        %v2023 = vpack.c.bf16 %v2019, %v2019
        %v2024 = vld [vmem:[%s11] sm:$0xf]
        %v2025 = vld [vmem:[%s11 + $0x4] sm:$0xf]
        %v2026 = vld [vmem:[%s11 + $0x8] sm:$0xf]
        %v2027 = vld [vmem:[%s11 + $0xc] sm:$0xf]
        %v2028 = vld [vmem:[%s11 + $0x10] sm:$0xf]
        %v2029 = vld [vmem:[%s11 + $0x14] sm:$0xf]
        %v2030 = vld [vmem:[%s11 + $0x18] sm:$0xf]
        %v2031 = vld [vmem:[%s11 + $0x1c] sm:$0xf]
        %v2032 = vld [vmem:[%s11 + $0x20] sm:$0xf]
        %v2033 = vld [vmem:[%s11 + $0x24] sm:$0xf]
        %v2034 = vld [vmem:[%s11 + $0x28] sm:$0xf]
        %v2035 = vld [vmem:[%s11 + $0x2c] sm:$0xf]
        %v2036 = vld [vmem:[%s11 + $0x30] sm:$0xf]
        %v2037 = vld [vmem:[%s11 + $0x34] sm:$0xf]
        %v2038 = vld [vmem:[%s11 + $0x38] sm:$0xf]
        %v2039 = vld [vmem:[%s11 + $0x3c] sm:$0xf]
        %v2040 = vld [vmem:[%s11 + $0x40] sm:$0xf]
        %v2041 = vld [vmem:[%s11 + $0x44] sm:$0xf]
        %v2042 = vld [vmem:[%s11 + $0x48] sm:$0xf]
        %v2043 = vld [vmem:[%s11 + $0x4c] sm:$0xf]
        %v2044 = vld [vmem:[%s11 + $0x50] sm:$0xf]
        %v2045 = vld [vmem:[%s11 + $0x54] sm:$0xf]
        %v2046 = vld [vmem:[%s11 + $0x58] sm:$0xf]
        %v2047 = vld [vmem:[%s11 + $0x5c] sm:$0xf]
        %v2048 = vld [vmem:[%s11 + $0x60] sm:$0xf]
        %v2049 = vld [vmem:[%s11 + $0x64] sm:$0xf]
        %v2050 = vld [vmem:[%s11 + $0x68] sm:$0xf]
        %v2051 = vld [vmem:[%s11 + $0x6c] sm:$0xf]
        %v2052 = vld [vmem:[%s11 + $0x70] sm:$0xf]
        %v2053 = vld [vmem:[%s11 + $0x74] sm:$0xf]
        %v2054 = vld [vmem:[%s11 + $0x78] sm:$0xf]
        %v2055 = vld [vmem:[%s11 + $0x7c] sm:$0xf]
        %v2056 = vld [vmem:[%s11 + $0x80] sm:$0xf]
        %v2057 = vld [vmem:[%s11 + $0x84] sm:$0xf]
        %v2058 = vld [vmem:[%s11 + $0x88] sm:$0xf]
        %v2059 = vld [vmem:[%s11 + $0x8c] sm:$0xf]
        %v2060 = vld [vmem:[%s11 + $0x90] sm:$0xf]
        %v2061 = vld [vmem:[%s11 + $0x94] sm:$0xf]
        %v2062 = vld [vmem:[%s11 + $0x98] sm:$0xf]
        %v2063 = vld [vmem:[%s11 + $0x9c] sm:$0xf]
        %v2064 = vld [vmem:[%s11 + $0xa0] sm:$0xf]
        %v2065 = vld [vmem:[%s11 + $0xa4] sm:$0xf]
        %v2066 = vld [vmem:[%s11 + $0xa8] sm:$0xf]
        %v2067 = vld [vmem:[%s11 + $0xac] sm:$0xf]
        %v2068 = vld [vmem:[%s11 + $0xb0] sm:$0xf]
        %v2069 = vld [vmem:[%s11 + $0xb4] sm:$0xf]
        %v2070 = vld [vmem:[%s11 + $0xb8] sm:$0xf]
        %v2071 = vld [vmem:[%s11 + $0xbc] sm:$0xf]
        %v2072 = vld [vmem:[%s11 + $0xc0] sm:$0xf]
        %v2073 = vld [vmem:[%s11 + $0xc4] sm:$0xf]
        %v2074 = vld [vmem:[%s11 + $0xc8] sm:$0xf]
        %v2075 = vld [vmem:[%s11 + $0xcc] sm:$0xf]
        %v2076 = vld [vmem:[%s11 + $0xd0] sm:$0xf]
        %v2077 = vld [vmem:[%s11 + $0xd4] sm:$0xf]
        %v2078 = vld [vmem:[%s11 + $0xd8] sm:$0xf]
        %v2079 = vld [vmem:[%s11 + $0xdc] sm:$0xf]
        %v2080 = vld [vmem:[%s11 + $0xe0] sm:$0xf]
        %v2081 = vld [vmem:[%s11 + $0xe4] sm:$0xf]
        %v2082 = vld [vmem:[%s11 + $0xe8] sm:$0xf]
        %v2083 = vld [vmem:[%s11 + $0xec] sm:$0xf]
        %v2084 = vld [vmem:[%s11 + $0xf0] sm:$0xf]
        %v2085 = vld [vmem:[%s11 + $0xf4] sm:$0xf]
        %v2086 = vld [vmem:[%s11 + $0xf8] sm:$0xf]
        %v2087 = vld [vmem:[%s11 + $0xfc] sm:$0xf]
        %v2088 = vld [vmem:[%s12] sm:$0x1]
        %v2090 = vlaneseq
        %v2091 = vshrl.u32 %v2090, 7
        %v2092 = vsub.s32 0, %v2091
        %v2093 = vrot.slane %v2088, %v2092
        %v2159 = vunpack.c.l.b16 %v2024
        %v2160 = vunpack.c.l.b16 %v2025
        %v2161 = vunpack.c.l.b16 %v2026
        %v2162 = vunpack.c.l.b16 %v2027
        %v2163 = vunpack.c.l.b16 %v2028
        %v2164 = vunpack.c.l.b16 %v2029
        %v2165 = vunpack.c.l.b16 %v2030
        %v2166 = vunpack.c.l.b16 %v2031
        %v2167 = vunpack.c.l.b16 %v2032
        %v2168 = vunpack.c.l.b16 %v2033
        %v2169 = vunpack.c.l.b16 %v2034
        %v2170 = vunpack.c.l.b16 %v2035
        %v2171 = vunpack.c.l.b16 %v2036
        %v2172 = vunpack.c.l.b16 %v2037
        %v2173 = vunpack.c.l.b16 %v2038
        %v2174 = vunpack.c.l.b16 %v2039
        %v2175 = vunpack.c.l.b16 %v2040
        %v2176 = vunpack.c.l.b16 %v2041
        %v2177 = vunpack.c.l.b16 %v2042
        %v2178 = vunpack.c.l.b16 %v2043
        %v2179 = vunpack.c.l.b16 %v2044
        %v2180 = vunpack.c.l.b16 %v2045
        %v2181 = vunpack.c.l.b16 %v2046
        %v2182 = vunpack.c.l.b16 %v2047
        %v2183 = vunpack.c.l.b16 %v2048
        %v2184 = vunpack.c.l.b16 %v2049
        %v2185 = vunpack.c.l.b16 %v2050
        %v2186 = vunpack.c.l.b16 %v2051
        %v2187 = vunpack.c.l.b16 %v2052
        %v2188 = vunpack.c.l.b16 %v2053
        %v2189 = vunpack.c.l.b16 %v2054
        %v2190 = vunpack.c.l.b16 %v2055
        %v2191 = vunpack.c.l.b16 %v2056
        %v2192 = vunpack.c.l.b16 %v2057
        %v2193 = vunpack.c.l.b16 %v2058
        %v2194 = vunpack.c.l.b16 %v2059
        %v2195 = vunpack.c.l.b16 %v2060
        %v2196 = vunpack.c.l.b16 %v2061
        %v2197 = vunpack.c.l.b16 %v2062
        %v2198 = vunpack.c.l.b16 %v2063
        %v2199 = vunpack.c.l.b16 %v2064
        %v2200 = vunpack.c.l.b16 %v2065
        %v2201 = vunpack.c.l.b16 %v2066
        %v2202 = vunpack.c.l.b16 %v2067
        %v2203 = vunpack.c.l.b16 %v2068
        %v2204 = vunpack.c.l.b16 %v2069
        %v2205 = vunpack.c.l.b16 %v2070
        %v2206 = vunpack.c.l.b16 %v2071
        %v2207 = vunpack.c.l.b16 %v2072
        %v2208 = vunpack.c.l.b16 %v2073
        %v2209 = vunpack.c.l.b16 %v2074
        %v2210 = vunpack.c.l.b16 %v2075
        %v2211 = vunpack.c.l.b16 %v2076
        %v2212 = vunpack.c.l.b16 %v2077
        %v2213 = vunpack.c.l.b16 %v2078
        %v2214 = vunpack.c.l.b16 %v2079
        %v2215 = vunpack.c.l.b16 %v2080
        %v2216 = vunpack.c.l.b16 %v2081
        %v2217 = vunpack.c.l.b16 %v2082
        %v2218 = vunpack.c.l.b16 %v2083
        %v2219 = vunpack.c.l.b16 %v2084
        %v2220 = vunpack.c.l.b16 %v2085
        %v2221 = vunpack.c.l.b16 %v2086
        %v2222 = vunpack.c.l.b16 %v2087
        %v2223 = vpack.c.b16 %v2160, %v2159
        %v2224 = vpack.c.b16 %v2162, %v2161
        %v2225 = vpack.c.b16 %v2164, %v2163
        %v2226 = vpack.c.b16 %v2166, %v2165
        %v2227 = vpack.c.b16 %v2168, %v2167
        %v2228 = vpack.c.b16 %v2170, %v2169
        %v2229 = vpack.c.b16 %v2172, %v2171
        %v2230 = vpack.c.b16 %v2174, %v2173
        %v2231 = vpack.c.b16 %v2176, %v2175
        %v2232 = vpack.c.b16 %v2178, %v2177
        %v2233 = vpack.c.b16 %v2180, %v2179
        %v2234 = vpack.c.b16 %v2182, %v2181
        %v2235 = vpack.c.b16 %v2184, %v2183
        %v2236 = vpack.c.b16 %v2186, %v2185
        %v2237 = vpack.c.b16 %v2188, %v2187
        %v2238 = vpack.c.b16 %v2190, %v2189
        %v2239 = vpack.c.b16 %v2192, %v2191
        %v2240 = vpack.c.b16 %v2194, %v2193
        %v2241 = vpack.c.b16 %v2196, %v2195
        %v2242 = vpack.c.b16 %v2198, %v2197
        %v2243 = vpack.c.b16 %v2200, %v2199
        %v2244 = vpack.c.b16 %v2202, %v2201
        %v2245 = vpack.c.b16 %v2204, %v2203
        %v2246 = vpack.c.b16 %v2206, %v2205
        %v2247 = vpack.c.b16 %v2208, %v2207
        %v2248 = vpack.c.b16 %v2210, %v2209
        %v2249 = vpack.c.b16 %v2212, %v2211
        %v2250 = vpack.c.b16 %v2214, %v2213
        %v2251 = vpack.c.b16 %v2216, %v2215
        %v2252 = vpack.c.b16 %v2218, %v2217
        %v2253 = vpack.c.b16 %v2220, %v2219
        %v2254 = vpack.c.b16 %v2222, %v2221
        %2287 = vmatprep.subr.bf16.mxu0 0
        %2288 = vmatpush1.bf16.msra.mxu0 %v2223
        %2289 = vmatprep.subr.bf16.mxu0 0
        %2290 = vmatpush1.bf16.msra.mxu0 %v2224
        %2291 = vmatprep.subr.bf16.mxu0 0
        %2292 = vmatpush1.bf16.msra.mxu0 %v2225
        %2293 = vmatprep.subr.bf16.mxu0 0
        %2294 = vmatpush1.bf16.msra.mxu0 %v2226
        %2295 = vmatprep.subr.bf16.mxu0 0
        %2296 = vmatpush1.bf16.msra.mxu0 %v2227
        %2297 = vmatprep.subr.bf16.mxu0 0
        %2298 = vmatpush1.bf16.msra.mxu0 %v2228
        %2299 = vmatprep.subr.bf16.mxu0 0
        %2300 = vmatpush1.bf16.msra.mxu0 %v2229
        %2301 = vmatprep.subr.bf16.mxu0 0
        %2302 = vmatpush1.bf16.msra.mxu0 %v2230
        %2303 = vmatprep.subr.bf16.mxu0 0
        %2304 = vmatpush1.bf16.msra.mxu0 %v2231
        %2305 = vmatprep.subr.bf16.mxu0 0
        %2306 = vmatpush1.bf16.msra.mxu0 %v2232
        %2307 = vmatprep.subr.bf16.mxu0 0
        %2308 = vmatpush1.bf16.msra.mxu0 %v2233
        %2309 = vmatprep.subr.bf16.mxu0 0
        %2310 = vmatpush1.bf16.msra.mxu0 %v2234
        %2311 = vmatprep.subr.bf16.mxu0 0
        %2312 = vmatpush1.bf16.msra.mxu0 %v2235
        %2313 = vmatprep.subr.bf16.mxu0 0
        %2314 = vmatpush1.bf16.msra.mxu0 %v2236
        %2315 = vmatprep.subr.bf16.mxu0 0
        %2316 = vmatpush1.bf16.msra.mxu0 %v2237
        %2317 = vmatprep.subr.bf16.mxu0 0
        %2318 = vmatpush1.bf16.msra.mxu0 %v2238
        %2319 = vmatprep.mubr.bf16.mxu0 %v2021
        %2320 = vmatmul.mubr.bf16.gmra.mrb[0].mxu0 %v2020
        %v2321 = vpop.f32.mrb[0].mxu0
        %v2322 = vadd.f32 %v2093, %v2321
        %v2323 = vpop.f32.mrb[0].mxu0
        %v2324 = vpop.f32.mrb[0].mxu0
        %v2325 = vpop.f32.mrb[0].mxu0
        %2326 = vdwg.mxu0
        %2327 = vmatprep.subr.bf16.mxu0 0
        %2328 = vmatpush1.bf16.msra.mxu0 %v2239
        %2329 = vmatprep.subr.bf16.mxu0 0
        %2330 = vmatpush1.bf16.msra.mxu0 %v2240
        %2331 = vmatprep.subr.bf16.mxu0 0
        %2332 = vmatpush1.bf16.msra.mxu0 %v2241
        %2333 = vmatprep.subr.bf16.mxu0 0
        %2334 = vmatpush1.bf16.msra.mxu0 %v2242
        %2335 = vmatprep.subr.bf16.mxu0 0
        %2336 = vmatpush1.bf16.msra.mxu0 %v2243
        %2337 = vmatprep.subr.bf16.mxu0 0
        %2338 = vmatpush1.bf16.msra.mxu0 %v2244
        %2339 = vmatprep.subr.bf16.mxu0 0
        %2340 = vmatpush1.bf16.msra.mxu0 %v2245
        %2341 = vmatprep.subr.bf16.mxu0 0
        %2342 = vmatpush1.bf16.msra.mxu0 %v2246
        %2343 = vmatprep.subr.bf16.mxu0 0
        %2344 = vmatpush1.bf16.msra.mxu0 %v2247
        %2345 = vmatprep.subr.bf16.mxu0 0
        %2346 = vmatpush1.bf16.msra.mxu0 %v2248
        %2347 = vmatprep.subr.bf16.mxu0 0
        %2348 = vmatpush1.bf16.msra.mxu0 %v2249
        %2349 = vmatprep.subr.bf16.mxu0 0
        %2350 = vmatpush1.bf16.msra.mxu0 %v2250
        %2351 = vmatprep.subr.bf16.mxu0 0
        %2352 = vmatpush1.bf16.msra.mxu0 %v2251
        %2353 = vmatprep.subr.bf16.mxu0 0
        %2354 = vmatpush1.bf16.msra.mxu0 %v2252
        %2355 = vmatprep.subr.bf16.mxu0 0
        %2356 = vmatpush1.bf16.msra.mxu0 %v2253
        %2357 = vmatprep.subr.bf16.mxu0 0
        %2358 = vmatpush1.bf16.msra.mxu0 %v2254
        %2359 = vmatprep.mubr.bf16.mxu0 %v2023
        %2360 = vmatmul.mubr.bf16.gmra.mrb[0].mxu0 %v2022
        %v2361 = vpop.f32.mrb[0].mxu0
        %v2362 = vadd.f32 %v2322, %v2361
        %v2363 = vpop.f32.mrb[0].mxu0
        %v2364 = vpop.f32.mrb[0].mxu0
        %v2365 = vpop.f32.mrb[0].mxu0
        %2366 = vdwg.mxu0
        %v2367 = vadd.f32 %v2362, %v1686
        %v2368 = vld [vmem:[%s13] sm:$0x1]
        %v2369 = vld [vmem:[%s14] sm:$0x1]
        %2370 = vadd.xlane.f32.xlu0 %v2367
        %v2371 = vpop.xlane.xlu0 %2370
        %v2372 = vmul.f32 %v2371, %v496
        %v2373 = vsub.f32 %v2367, %v2372
        %v2374 = vmul.f32 %v2373, %v2373
        %2375 = vadd.xlane.f32.xlu0 %v2374
        %v2376 = vpop.xlane.xlu0 %2375
        %v2377 = vmul.f32 %v2376, %v496
        %v2378 = vadd.f32 %v2377, 1e-12
        %v2379 = vrsqrt.pop %v2378
        %v2380 = vmul.f32 %v2373, %v2379
        %v2382 = vlaneseq
        %v2383 = vshrl.u32 %v2382, 7
        %v2384 = vsub.s32 0, %v2383
        %v2385 = vrot.slane %v2368, %v2384
        %v2387 = vmul.f32 %v2380, %v2385
        %v2389 = vlaneseq
        %v2390 = vshrl.u32 %v2389, 7
        %v2391 = vsub.s32 0, %v2390
        %v2392 = vrot.slane %v2369, %v2391
        %v2394 = vadd.f32 %v2387, %v2392
        %v2395 = vpack.c.bf16 %v2394, %v2394
        %s2396 = scalar_lea.vmem %s3, 256
        %v2397 = vld [vmem:[%s2396] sm:$0xf]
        %v2398 = vld [vmem:[%s2396 + $0x4] sm:$0xf]
        %v2399 = vld [vmem:[%s2396 + $0x8] sm:$0xf]
        %v2400 = vld [vmem:[%s2396 + $0xc] sm:$0xf]
        %v2401 = vld [vmem:[%s2396 + $0x10] sm:$0xf]
        %v2402 = vld [vmem:[%s2396 + $0x14] sm:$0xf]
        %v2403 = vld [vmem:[%s2396 + $0x18] sm:$0xf]
        %v2404 = vld [vmem:[%s2396 + $0x1c] sm:$0xf]
        %v2405 = vld [vmem:[%s2396 + $0x20] sm:$0xf]
        %v2406 = vld [vmem:[%s2396 + $0x24] sm:$0xf]
        %v2407 = vld [vmem:[%s2396 + $0x28] sm:$0xf]
        %v2408 = vld [vmem:[%s2396 + $0x2c] sm:$0xf]
        %v2409 = vld [vmem:[%s2396 + $0x30] sm:$0xf]
        %v2410 = vld [vmem:[%s2396 + $0x34] sm:$0xf]
        %v2411 = vld [vmem:[%s2396 + $0x38] sm:$0xf]
        %v2412 = vld [vmem:[%s2396 + $0x3c] sm:$0xf]
        %v2413 = vld [vmem:[%s2396 + $0x40] sm:$0xf]
        %v2414 = vld [vmem:[%s2396 + $0x44] sm:$0xf]
        %v2415 = vld [vmem:[%s2396 + $0x48] sm:$0xf]
        %v2416 = vld [vmem:[%s2396 + $0x4c] sm:$0xf]
        %v2417 = vld [vmem:[%s2396 + $0x50] sm:$0xf]
        %v2418 = vld [vmem:[%s2396 + $0x54] sm:$0xf]
        %v2419 = vld [vmem:[%s2396 + $0x58] sm:$0xf]
        %v2420 = vld [vmem:[%s2396 + $0x5c] sm:$0xf]
        %v2421 = vld [vmem:[%s2396 + $0x60] sm:$0xf]
        %v2422 = vld [vmem:[%s2396 + $0x64] sm:$0xf]
        %v2423 = vld [vmem:[%s2396 + $0x68] sm:$0xf]
        %v2424 = vld [vmem:[%s2396 + $0x6c] sm:$0xf]
        %v2425 = vld [vmem:[%s2396 + $0x70] sm:$0xf]
        %v2426 = vld [vmem:[%s2396 + $0x74] sm:$0xf]
        %v2427 = vld [vmem:[%s2396 + $0x78] sm:$0xf]
        %v2428 = vld [vmem:[%s2396 + $0x7c] sm:$0xf]
        %v2429 = vld [vmem:[%s2396 + $0x80] sm:$0xf]
        %v2430 = vld [vmem:[%s2396 + $0x84] sm:$0xf]
        %v2431 = vld [vmem:[%s2396 + $0x88] sm:$0xf]
        %v2432 = vld [vmem:[%s2396 + $0x8c] sm:$0xf]
        %v2433 = vld [vmem:[%s2396 + $0x90] sm:$0xf]
        %v2434 = vld [vmem:[%s2396 + $0x94] sm:$0xf]
        %v2435 = vld [vmem:[%s2396 + $0x98] sm:$0xf]
        %v2436 = vld [vmem:[%s2396 + $0x9c] sm:$0xf]
        %v2437 = vld [vmem:[%s2396 + $0xa0] sm:$0xf]
        %v2438 = vld [vmem:[%s2396 + $0xa4] sm:$0xf]
        %v2439 = vld [vmem:[%s2396 + $0xa8] sm:$0xf]
        %v2440 = vld [vmem:[%s2396 + $0xac] sm:$0xf]
        %v2441 = vld [vmem:[%s2396 + $0xb0] sm:$0xf]
        %v2442 = vld [vmem:[%s2396 + $0xb4] sm:$0xf]
        %v2443 = vld [vmem:[%s2396 + $0xb8] sm:$0xf]
        %v2444 = vld [vmem:[%s2396 + $0xbc] sm:$0xf]
        %v2445 = vld [vmem:[%s2396 + $0xc0] sm:$0xf]
        %v2446 = vld [vmem:[%s2396 + $0xc4] sm:$0xf]
        %v2447 = vld [vmem:[%s2396 + $0xc8] sm:$0xf]
        %v2448 = vld [vmem:[%s2396 + $0xcc] sm:$0xf]
        %v2449 = vld [vmem:[%s2396 + $0xd0] sm:$0xf]
        %v2450 = vld [vmem:[%s2396 + $0xd4] sm:$0xf]
        %v2451 = vld [vmem:[%s2396 + $0xd8] sm:$0xf]
        %v2452 = vld [vmem:[%s2396 + $0xdc] sm:$0xf]
        %v2453 = vld [vmem:[%s2396 + $0xe0] sm:$0xf]
        %v2454 = vld [vmem:[%s2396 + $0xe4] sm:$0xf]
        %v2455 = vld [vmem:[%s2396 + $0xe8] sm:$0xf]
        %v2456 = vld [vmem:[%s2396 + $0xec] sm:$0xf]
        %v2457 = vld [vmem:[%s2396 + $0xf0] sm:$0xf]
        %v2458 = vld [vmem:[%s2396 + $0xf4] sm:$0xf]
        %v2459 = vld [vmem:[%s2396 + $0xf8] sm:$0xf]
        %v2460 = vld [vmem:[%s2396 + $0xfc] sm:$0xf]
        %s2461 = scalar_lea.vmem %s4, 4
        %v2462 = vld [vmem:[%s2461] sm:$0x1]
        %v2463 = vld [vmem:[%s2461 + $0x1] sm:$0x1]
        %v2464 = vld [vmem:[%s2461 + $0x2] sm:$0x1]
        %v2465 = vld [vmem:[%s2461 + $0x3] sm:$0x1]
        %v2470 = vlaneseq
        %v2471 = vshrl.u32 %v2470, 7
        %v2472 = vsub.s32 0, %v2471
        %v2473 = vrot.slane %v2462, %v2472
        %v2474 = vlaneseq
        %v2475 = vshrl.u32 %v2474, 7
        %v2476 = vsub.s32 0, %v2475
        %v2477 = vrot.slane %v2463, %v2476
        %v2478 = vlaneseq
        %v2479 = vshrl.u32 %v2478, 7
        %v2480 = vsub.s32 0, %v2479
        %v2481 = vrot.slane %v2464, %v2480
        %v2482 = vlaneseq
        %v2483 = vshrl.u32 %v2482, 7
        %v2484 = vsub.s32 0, %v2483
        %v2485 = vrot.slane %v2465, %v2484
        %v2506 = vunpack.c.l.b16 %v2397
        %v2507 = vunpack.c.l.b16 %v2398
        %v2508 = vunpack.c.l.b16 %v2399
        %v2509 = vunpack.c.l.b16 %v2400
        %v2510 = vunpack.c.l.b16 %v2401
        %v2511 = vunpack.c.l.b16 %v2402
        %v2512 = vunpack.c.l.b16 %v2403
        %v2513 = vunpack.c.l.b16 %v2404
        %v2514 = vunpack.c.l.b16 %v2405
        %v2515 = vunpack.c.l.b16 %v2406
        %v2516 = vunpack.c.l.b16 %v2407
        %v2517 = vunpack.c.l.b16 %v2408
        %v2518 = vunpack.c.l.b16 %v2409
        %v2519 = vunpack.c.l.b16 %v2410
        %v2520 = vunpack.c.l.b16 %v2411
        %v2521 = vunpack.c.l.b16 %v2412
        %v2522 = vpack.c.b16 %v2507, %v2506
        %v2523 = vpack.c.b16 %v2509, %v2508
        %v2524 = vpack.c.b16 %v2511, %v2510
        %v2525 = vpack.c.b16 %v2513, %v2512
        %v2526 = vpack.c.b16 %v2515, %v2514
        %v2527 = vpack.c.b16 %v2517, %v2516
        %v2528 = vpack.c.b16 %v2519, %v2518
        %v2529 = vpack.c.b16 %v2521, %v2520
        %2538 = vmatprep.subr.bf16.mxu0 0
        %2539 = vmatpush1.bf16.msra.mxu0 %v2522
        %2540 = vmatprep.subr.bf16.mxu0 0
        %2541 = vmatpush1.bf16.msra.mxu0 %v2523
        %2542 = vmatprep.subr.bf16.mxu0 0
        %2543 = vmatpush1.bf16.msra.mxu0 %v2524
        %2544 = vmatprep.subr.bf16.mxu0 0
        %2545 = vmatpush1.bf16.msra.mxu0 %v2525
        %2546 = vmatprep.subr.bf16.mxu0 0
        %2547 = vmatpush1.bf16.msra.mxu0 %v2526
        %2548 = vmatprep.subr.bf16.mxu0 0
        %2549 = vmatpush1.bf16.msra.mxu0 %v2527
        %2550 = vmatprep.subr.bf16.mxu0 0
        %2551 = vmatpush1.bf16.msra.mxu0 %v2528
        %2552 = vmatprep.subr.bf16.mxu0 0
        %2553 = vmatpush1.bf16.msra.mxu0 %v2529
        %2554 = vmatprep.subr.bf16.mxu0 0
        %2555 = vmatpush1.bf16.msra.mxu0 0
        %2556 = vmatprep.subr.bf16.mxu0 0
        %2557 = vmatpush1.bf16.msra.mxu0 0
        %2558 = vmatprep.subr.bf16.mxu0 0
        %2559 = vmatpush1.bf16.msra.mxu0 0
        %2560 = vmatprep.subr.bf16.mxu0 0
        %2561 = vmatpush1.bf16.msra.mxu0 0
        %2562 = vmatprep.subr.bf16.mxu0 0
        %2563 = vmatpush1.bf16.msra.mxu0 0
        %2564 = vmatprep.subr.bf16.mxu0 0
        %2565 = vmatpush1.bf16.msra.mxu0 0
        %2566 = vmatprep.subr.bf16.mxu0 0
        %2567 = vmatpush1.bf16.msra.mxu0 0
        %2568 = vmatprep.subr.bf16.mxu0 0
        %2569 = vmatpush1.bf16.msra.mxu0 0
        %2570 = vmatprep.mubr.bf16.mxu0 0
        %2571 = vmatmul.mubr.bf16.gmra.mrb[0].mxu0 %v2395
        %v2572 = vpop.f32.mrb[0].mxu0
        %v2573 = vadd.f32 %v2473, %v2572
        %v2574 = vpop.f32.mrb[0].mxu0
        %v2575 = vpop.f32.mrb[0].mxu0
        %v2576 = vpop.f32.mrb[0].mxu0
        %2577 = vdwg.mxu0
        %v2594 = vunpack.c.l.b16 %v2413
        %v2595 = vunpack.c.l.b16 %v2414
        %v2596 = vunpack.c.l.b16 %v2415
        %v2597 = vunpack.c.l.b16 %v2416
        %v2598 = vunpack.c.l.b16 %v2417
        %v2599 = vunpack.c.l.b16 %v2418
        %v2600 = vunpack.c.l.b16 %v2419
        %v2601 = vunpack.c.l.b16 %v2420
        %v2602 = vunpack.c.l.b16 %v2421
        %v2603 = vunpack.c.l.b16 %v2422
        %v2604 = vunpack.c.l.b16 %v2423
        %v2605 = vunpack.c.l.b16 %v2424
        %v2606 = vunpack.c.l.b16 %v2425
        %v2607 = vunpack.c.l.b16 %v2426
        %v2608 = vunpack.c.l.b16 %v2427
        %v2609 = vunpack.c.l.b16 %v2428
        %v2610 = vpack.c.b16 %v2595, %v2594
        %v2611 = vpack.c.b16 %v2597, %v2596
        %v2612 = vpack.c.b16 %v2599, %v2598
        %v2613 = vpack.c.b16 %v2601, %v2600
        %v2614 = vpack.c.b16 %v2603, %v2602
        %v2615 = vpack.c.b16 %v2605, %v2604
        %v2616 = vpack.c.b16 %v2607, %v2606
        %v2617 = vpack.c.b16 %v2609, %v2608
        %2626 = vmatprep.subr.bf16.mxu0 0
        %2627 = vmatpush1.bf16.msra.mxu0 %v2610
        %2628 = vmatprep.subr.bf16.mxu0 0
        %2629 = vmatpush1.bf16.msra.mxu0 %v2611
        %2630 = vmatprep.subr.bf16.mxu0 0
        %2631 = vmatpush1.bf16.msra.mxu0 %v2612
        %2632 = vmatprep.subr.bf16.mxu0 0
        %2633 = vmatpush1.bf16.msra.mxu0 %v2613
        %2634 = vmatprep.subr.bf16.mxu0 0
        %2635 = vmatpush1.bf16.msra.mxu0 %v2614
        %2636 = vmatprep.subr.bf16.mxu0 0
        %2637 = vmatpush1.bf16.msra.mxu0 %v2615
        %2638 = vmatprep.subr.bf16.mxu0 0
        %2639 = vmatpush1.bf16.msra.mxu0 %v2616
        %2640 = vmatprep.subr.bf16.mxu0 0
        %2641 = vmatpush1.bf16.msra.mxu0 %v2617
        %2642 = vmatprep.subr.bf16.mxu0 0
        %2643 = vmatpush1.bf16.msra.mxu0 0
        %2644 = vmatprep.subr.bf16.mxu0 0
        %2645 = vmatpush1.bf16.msra.mxu0 0
        %2646 = vmatprep.subr.bf16.mxu0 0
        %2647 = vmatpush1.bf16.msra.mxu0 0
        %2648 = vmatprep.subr.bf16.mxu0 0
        %2649 = vmatpush1.bf16.msra.mxu0 0
        %2650 = vmatprep.subr.bf16.mxu0 0
        %2651 = vmatpush1.bf16.msra.mxu0 0
        %2652 = vmatprep.subr.bf16.mxu0 0
        %2653 = vmatpush1.bf16.msra.mxu0 0
        %2654 = vmatprep.subr.bf16.mxu0 0
        %2655 = vmatpush1.bf16.msra.mxu0 0
        %2656 = vmatprep.subr.bf16.mxu0 0
        %2657 = vmatpush1.bf16.msra.mxu0 0
        %2658 = vmatprep.mubr.bf16.mxu0 0
        %2659 = vmatmul.mubr.bf16.gmra.mrb[0].mxu0 %v2395
        %v2660 = vpop.f32.mrb[0].mxu0
        %v2661 = vadd.f32 %v2477, %v2660
        %v2662 = vpop.f32.mrb[0].mxu0
        %v2663 = vpop.f32.mrb[0].mxu0
        %v2664 = vpop.f32.mrb[0].mxu0
        %2665 = vdwg.mxu0
        %v2682 = vunpack.c.l.b16 %v2429
        %v2683 = vunpack.c.l.b16 %v2430
        %v2684 = vunpack.c.l.b16 %v2431
        %v2685 = vunpack.c.l.b16 %v2432
        %v2686 = vunpack.c.l.b16 %v2433
        %v2687 = vunpack.c.l.b16 %v2434
        %v2688 = vunpack.c.l.b16 %v2435
        %v2689 = vunpack.c.l.b16 %v2436
        %v2690 = vunpack.c.l.b16 %v2437
        %v2691 = vunpack.c.l.b16 %v2438
        %v2692 = vunpack.c.l.b16 %v2439
        %v2693 = vunpack.c.l.b16 %v2440
        %v2694 = vunpack.c.l.b16 %v2441
        %v2695 = vunpack.c.l.b16 %v2442
        %v2696 = vunpack.c.l.b16 %v2443
        %v2697 = vunpack.c.l.b16 %v2444
        %v2698 = vpack.c.b16 %v2683, %v2682
        %v2699 = vpack.c.b16 %v2685, %v2684
        %v2700 = vpack.c.b16 %v2687, %v2686
        %v2701 = vpack.c.b16 %v2689, %v2688
        %v2702 = vpack.c.b16 %v2691, %v2690
        %v2703 = vpack.c.b16 %v2693, %v2692
        %v2704 = vpack.c.b16 %v2695, %v2694
        %v2705 = vpack.c.b16 %v2697, %v2696
        %2714 = vmatprep.subr.bf16.mxu0 0
        %2715 = vmatpush1.bf16.msra.mxu0 %v2698
        %2716 = vmatprep.subr.bf16.mxu0 0
        %2717 = vmatpush1.bf16.msra.mxu0 %v2699
        %2718 = vmatprep.subr.bf16.mxu0 0
        %2719 = vmatpush1.bf16.msra.mxu0 %v2700
        %2720 = vmatprep.subr.bf16.mxu0 0
        %2721 = vmatpush1.bf16.msra.mxu0 %v2701
        %2722 = vmatprep.subr.bf16.mxu0 0
        %2723 = vmatpush1.bf16.msra.mxu0 %v2702
        %2724 = vmatprep.subr.bf16.mxu0 0
        %2725 = vmatpush1.bf16.msra.mxu0 %v2703
        %2726 = vmatprep.subr.bf16.mxu0 0
        %2727 = vmatpush1.bf16.msra.mxu0 %v2704
        %2728 = vmatprep.subr.bf16.mxu0 0
        %2729 = vmatpush1.bf16.msra.mxu0 %v2705
        %2730 = vmatprep.subr.bf16.mxu0 0
        %2731 = vmatpush1.bf16.msra.mxu0 0
        %2732 = vmatprep.subr.bf16.mxu0 0
        %2733 = vmatpush1.bf16.msra.mxu0 0
        %2734 = vmatprep.subr.bf16.mxu0 0
        %2735 = vmatpush1.bf16.msra.mxu0 0
        %2736 = vmatprep.subr.bf16.mxu0 0
        %2737 = vmatpush1.bf16.msra.mxu0 0
        %2738 = vmatprep.subr.bf16.mxu0 0
        %2739 = vmatpush1.bf16.msra.mxu0 0
        %2740 = vmatprep.subr.bf16.mxu0 0
        %2741 = vmatpush1.bf16.msra.mxu0 0
        %2742 = vmatprep.subr.bf16.mxu0 0
        %2743 = vmatpush1.bf16.msra.mxu0 0
        %2744 = vmatprep.subr.bf16.mxu0 0
        %2745 = vmatpush1.bf16.msra.mxu0 0
        %2746 = vmatprep.mubr.bf16.mxu0 0
        %2747 = vmatmul.mubr.bf16.gmra.mrb[0].mxu0 %v2395
        %v2748 = vpop.f32.mrb[0].mxu0
        %v2749 = vadd.f32 %v2481, %v2748
        %v2750 = vpop.f32.mrb[0].mxu0
        %v2751 = vpop.f32.mrb[0].mxu0
        %v2752 = vpop.f32.mrb[0].mxu0
        %2753 = vdwg.mxu0
        %v2770 = vunpack.c.l.b16 %v2445
        %v2771 = vunpack.c.l.b16 %v2446
        %v2772 = vunpack.c.l.b16 %v2447
        %v2773 = vunpack.c.l.b16 %v2448
        %v2774 = vunpack.c.l.b16 %v2449
        %v2775 = vunpack.c.l.b16 %v2450
        %v2776 = vunpack.c.l.b16 %v2451
        %v2777 = vunpack.c.l.b16 %v2452
        %v2778 = vunpack.c.l.b16 %v2453
        %v2779 = vunpack.c.l.b16 %v2454
        %v2780 = vunpack.c.l.b16 %v2455
        %v2781 = vunpack.c.l.b16 %v2456
        %v2782 = vunpack.c.l.b16 %v2457
        %v2783 = vunpack.c.l.b16 %v2458
        %v2784 = vunpack.c.l.b16 %v2459
        %v2785 = vunpack.c.l.b16 %v2460
        %v2786 = vpack.c.b16 %v2771, %v2770
        %v2787 = vpack.c.b16 %v2773, %v2772
        %v2788 = vpack.c.b16 %v2775, %v2774
        %v2789 = vpack.c.b16 %v2777, %v2776
        %v2790 = vpack.c.b16 %v2779, %v2778
        %v2791 = vpack.c.b16 %v2781, %v2780
        %v2792 = vpack.c.b16 %v2783, %v2782
        %v2793 = vpack.c.b16 %v2785, %v2784
        %2802 = vmatprep.subr.bf16.mxu0 0
        %2803 = vmatpush1.bf16.msra.mxu0 %v2786
        %2804 = vmatprep.subr.bf16.mxu0 0
        %2805 = vmatpush1.bf16.msra.mxu0 %v2787
        %2806 = vmatprep.subr.bf16.mxu0 0
        %2807 = vmatpush1.bf16.msra.mxu0 %v2788
        %2808 = vmatprep.subr.bf16.mxu0 0
        %2809 = vmatpush1.bf16.msra.mxu0 %v2789
        %2810 = vmatprep.subr.bf16.mxu0 0
        %2811 = vmatpush1.bf16.msra.mxu0 %v2790
        %2812 = vmatprep.subr.bf16.mxu0 0
        %2813 = vmatpush1.bf16.msra.mxu0 %v2791
        %2814 = vmatprep.subr.bf16.mxu0 0
        %2815 = vmatpush1.bf16.msra.mxu0 %v2792
        %2816 = vmatprep.subr.bf16.mxu0 0
        %2817 = vmatpush1.bf16.msra.mxu0 %v2793
        %2818 = vmatprep.subr.bf16.mxu0 0
        %2819 = vmatpush1.bf16.msra.mxu0 0
        %2820 = vmatprep.subr.bf16.mxu0 0
        %2821 = vmatpush1.bf16.msra.mxu0 0
        %2822 = vmatprep.subr.bf16.mxu0 0
        %2823 = vmatpush1.bf16.msra.mxu0 0
        %2824 = vmatprep.subr.bf16.mxu0 0
        %2825 = vmatpush1.bf16.msra.mxu0 0
        %2826 = vmatprep.subr.bf16.mxu0 0
        %2827 = vmatpush1.bf16.msra.mxu0 0
        %2828 = vmatprep.subr.bf16.mxu0 0
        %2829 = vmatpush1.bf16.msra.mxu0 0
        %2830 = vmatprep.subr.bf16.mxu0 0
        %2831 = vmatpush1.bf16.msra.mxu0 0
        %2832 = vmatprep.subr.bf16.mxu0 0
        %2833 = vmatpush1.bf16.msra.mxu0 0
        %2834 = vmatprep.mubr.bf16.mxu0 0
        %2835 = vmatmul.mubr.bf16.gmra.mrb[0].mxu0 %v2395
        %v2836 = vpop.f32.mrb[0].mxu0
        %v2837 = vadd.f32 %v2485, %v2836
        %v2838 = vpop.f32.mrb[0].mxu0
        %v2839 = vpop.f32.mrb[0].mxu0
        %v2840 = vpop.f32.mrb[0].mxu0
        %2841 = vdwg.mxu0
        %v2842 = vpack.c.bf16 %v2573, %v2573
        %v2843 = vpack.c.bf16 %v2661, %v2661
        %v2844 = vpack.c.bf16 %v2749, %v2749
        %v2845 = vpack.c.bf16 %v2837, %v2837
        %2847 = vrot.lane.b32.xlu0 %v2842, 96
        %v2848 = vpop.permute.xlu0 %2847
        %v2850 = vsel %vm972, %v2842, 0
        %v2853 = vsel %vm972, %v2848, 0
        %2855 = vmatprep.subr.bf16.mxu0 0
        %2856 = vmatpush1.bf16.xpose.msra.mxu0 %v2853
        %2857 = vmatprep.subr.bf16.mxu0 0
        %2858 = vmatpush1.bf16.xpose.msra.mxu0 0
        %2859 = vmatprep.subr.bf16.mxu0 0
        %2860 = vmatpush1.bf16.xpose.msra.mxu0 0
        %2861 = vmatprep.subr.bf16.mxu0 0
        %2862 = vmatpush1.bf16.xpose.msra.mxu0 0
        %2863 = vmatprep.subr.bf16.mxu0 0
        %2864 = vmatpush1.bf16.xpose.msra.mxu0 0
        %2865 = vmatprep.subr.bf16.mxu0 0
        %2866 = vmatpush1.bf16.xpose.msra.mxu0 0
        %2867 = vmatprep.subr.bf16.mxu0 0
        %2868 = vmatpush1.bf16.xpose.msra.mxu0 0
        %2869 = vmatprep.subr.bf16.mxu0 0
        %2870 = vmatpush1.bf16.xpose.msra.mxu0 0
        %2871 = vmatprep.subr.bf16.mxu0 0
        %2872 = vmatpush1.bf16.xpose.msra.mxu0 0
        %2873 = vmatprep.subr.bf16.mxu0 0
        %2874 = vmatpush1.bf16.xpose.msra.mxu0 0
        %2875 = vmatprep.subr.bf16.mxu0 0
        %2876 = vmatpush1.bf16.xpose.msra.mxu0 0
        %2877 = vmatprep.subr.bf16.mxu0 0
        %2878 = vmatpush1.bf16.xpose.msra.mxu0 0
        %2879 = vmatprep.subr.bf16.mxu0 0
        %2880 = vmatpush1.bf16.xpose.msra.mxu0 0
        %2881 = vmatprep.subr.bf16.mxu0 0
        %2882 = vmatpush1.bf16.xpose.msra.mxu0 0
        %2883 = vmatprep.subr.bf16.mxu0 0
        %2884 = vmatpush1.bf16.xpose.msra.mxu0 0
        %2885 = vmatprep.subr.bf16.mxu0 0
        %2886 = vmatpush1.bf16.xpose.msra.mxu0 0
        %2887 = vmatprep.mubr.bf16.mxu0 0
        %2888 = vmatmul.mubr.bf16.gmra.mrb[0].mxu0 %v2850
        %v2889 = vpop.f32.mrb[0].mxu0
        %v2890 = vadd.f32 0.0, %v2889
        %v2891 = vpop.f32.mrb[0].mxu0
        %v2892 = vpop.f32.mrb[0].mxu0
        %v2893 = vpop.f32.mrb[0].mxu0
        %2894 = vdwg.mxu0
        %2896 = vrot.lane.b32.xlu0 %v2843, 96
        %v2897 = vpop.permute.xlu0 %2896
        %v2899 = vsel %vm972, %v2843, 0
        %v2902 = vsel %vm972, %v2897, 0
        %2904 = vmatprep.subr.bf16.mxu0 0
        %2905 = vmatpush1.bf16.xpose.msra.mxu0 %v2902
        %2906 = vmatprep.subr.bf16.mxu0 0
        %2907 = vmatpush1.bf16.xpose.msra.mxu0 0
        %2908 = vmatprep.subr.bf16.mxu0 0
        %2909 = vmatpush1.bf16.xpose.msra.mxu0 0
        %2910 = vmatprep.subr.bf16.mxu0 0
        %2911 = vmatpush1.bf16.xpose.msra.mxu0 0
        %2912 = vmatprep.subr.bf16.mxu0 0
        %2913 = vmatpush1.bf16.xpose.msra.mxu0 0
        %2914 = vmatprep.subr.bf16.mxu0 0
        %2915 = vmatpush1.bf16.xpose.msra.mxu0 0
        %2916 = vmatprep.subr.bf16.mxu0 0
        %2917 = vmatpush1.bf16.xpose.msra.mxu0 0
        %2918 = vmatprep.subr.bf16.mxu0 0
        %2919 = vmatpush1.bf16.xpose.msra.mxu0 0
        %2920 = vmatprep.subr.bf16.mxu0 0
        %2921 = vmatpush1.bf16.xpose.msra.mxu0 0
        %2922 = vmatprep.subr.bf16.mxu0 0
        %2923 = vmatpush1.bf16.xpose.msra.mxu0 0
        %2924 = vmatprep.subr.bf16.mxu0 0
        %2925 = vmatpush1.bf16.xpose.msra.mxu0 0
        %2926 = vmatprep.subr.bf16.mxu0 0
        %2927 = vmatpush1.bf16.xpose.msra.mxu0 0
        %2928 = vmatprep.subr.bf16.mxu0 0
        %2929 = vmatpush1.bf16.xpose.msra.mxu0 0
        %2930 = vmatprep.subr.bf16.mxu0 0
        %2931 = vmatpush1.bf16.xpose.msra.mxu0 0
        %2932 = vmatprep.subr.bf16.mxu0 0
        %2933 = vmatpush1.bf16.xpose.msra.mxu0 0
        %2934 = vmatprep.subr.bf16.mxu0 0
        %2935 = vmatpush1.bf16.xpose.msra.mxu0 0
        %2936 = vmatprep.mubr.bf16.mxu0 0
        %2937 = vmatmul.mubr.bf16.gmra.mrb[0].mxu0 %v2899
        %v2938 = vpop.f32.mrb[0].mxu0
        %v2939 = vadd.f32 0.0, %v2938
        %v2940 = vpop.f32.mrb[0].mxu0
        %v2941 = vpop.f32.mrb[0].mxu0
        %v2942 = vpop.f32.mrb[0].mxu0
        %2943 = vdwg.mxu0
        %2945 = vrot.lane.b32.xlu0 %v2844, 96
        %v2946 = vpop.permute.xlu0 %2945
        %v2948 = vsel %vm972, %v2844, 0
        %v2951 = vsel %vm972, %v2946, 0
        %2953 = vmatprep.subr.bf16.mxu0 0
        %2954 = vmatpush1.bf16.xpose.msra.mxu0 %v2951
        %2955 = vmatprep.subr.bf16.mxu0 0
        %2956 = vmatpush1.bf16.xpose.msra.mxu0 0
        %2957 = vmatprep.subr.bf16.mxu0 0
        %2958 = vmatpush1.bf16.xpose.msra.mxu0 0
        %2959 = vmatprep.subr.bf16.mxu0 0
        %2960 = vmatpush1.bf16.xpose.msra.mxu0 0
        %2961 = vmatprep.subr.bf16.mxu0 0
        %2962 = vmatpush1.bf16.xpose.msra.mxu0 0
        %2963 = vmatprep.subr.bf16.mxu0 0
        %2964 = vmatpush1.bf16.xpose.msra.mxu0 0
        %2965 = vmatprep.subr.bf16.mxu0 0
        %2966 = vmatpush1.bf16.xpose.msra.mxu0 0
        %2967 = vmatprep.subr.bf16.mxu0 0
        %2968 = vmatpush1.bf16.xpose.msra.mxu0 0
        %2969 = vmatprep.subr.bf16.mxu0 0
        %2970 = vmatpush1.bf16.xpose.msra.mxu0 0
        %2971 = vmatprep.subr.bf16.mxu0 0
        %2972 = vmatpush1.bf16.xpose.msra.mxu0 0
        %2973 = vmatprep.subr.bf16.mxu0 0
        %2974 = vmatpush1.bf16.xpose.msra.mxu0 0
        %2975 = vmatprep.subr.bf16.mxu0 0
        %2976 = vmatpush1.bf16.xpose.msra.mxu0 0
        %2977 = vmatprep.subr.bf16.mxu0 0
        %2978 = vmatpush1.bf16.xpose.msra.mxu0 0
        %2979 = vmatprep.subr.bf16.mxu0 0
        %2980 = vmatpush1.bf16.xpose.msra.mxu0 0
        %2981 = vmatprep.subr.bf16.mxu0 0
        %2982 = vmatpush1.bf16.xpose.msra.mxu0 0
        %2983 = vmatprep.subr.bf16.mxu0 0
        %2984 = vmatpush1.bf16.xpose.msra.mxu0 0
        %2985 = vmatprep.mubr.bf16.mxu0 0
        %2986 = vmatmul.mubr.bf16.gmra.mrb[0].mxu0 %v2948
        %v2987 = vpop.f32.mrb[0].mxu0
        %v2988 = vadd.f32 0.0, %v2987
        %v2989 = vpop.f32.mrb[0].mxu0
        %v2990 = vpop.f32.mrb[0].mxu0
        %v2991 = vpop.f32.mrb[0].mxu0
        %2992 = vdwg.mxu0
        %2994 = vrot.lane.b32.xlu0 %v2845, 96
        %v2995 = vpop.permute.xlu0 %2994
        %v2997 = vsel %vm972, %v2845, 0
        %v3000 = vsel %vm972, %v2995, 0
        %3002 = vmatprep.subr.bf16.mxu0 0
        %3003 = vmatpush1.bf16.xpose.msra.mxu0 %v3000
        %3004 = vmatprep.subr.bf16.mxu0 0
        %3005 = vmatpush1.bf16.xpose.msra.mxu0 0
        %3006 = vmatprep.subr.bf16.mxu0 0
        %3007 = vmatpush1.bf16.xpose.msra.mxu0 0
        %3008 = vmatprep.subr.bf16.mxu0 0
        %3009 = vmatpush1.bf16.xpose.msra.mxu0 0
        %3010 = vmatprep.subr.bf16.mxu0 0
        %3011 = vmatpush1.bf16.xpose.msra.mxu0 0
        %3012 = vmatprep.subr.bf16.mxu0 0
        %3013 = vmatpush1.bf16.xpose.msra.mxu0 0
        %3014 = vmatprep.subr.bf16.mxu0 0
        %3015 = vmatpush1.bf16.xpose.msra.mxu0 0
        %3016 = vmatprep.subr.bf16.mxu0 0
        %3017 = vmatpush1.bf16.xpose.msra.mxu0 0
        %3018 = vmatprep.subr.bf16.mxu0 0
        %3019 = vmatpush1.bf16.xpose.msra.mxu0 0
        %3020 = vmatprep.subr.bf16.mxu0 0
        %3021 = vmatpush1.bf16.xpose.msra.mxu0 0
        %3022 = vmatprep.subr.bf16.mxu0 0
        %3023 = vmatpush1.bf16.xpose.msra.mxu0 0
        %3024 = vmatprep.subr.bf16.mxu0 0
        %3025 = vmatpush1.bf16.xpose.msra.mxu0 0
        %3026 = vmatprep.subr.bf16.mxu0 0
        %3027 = vmatpush1.bf16.xpose.msra.mxu0 0
        %3028 = vmatprep.subr.bf16.mxu0 0
        %3029 = vmatpush1.bf16.xpose.msra.mxu0 0
        %3030 = vmatprep.subr.bf16.mxu0 0
        %3031 = vmatpush1.bf16.xpose.msra.mxu0 0
        %3032 = vmatprep.subr.bf16.mxu0 0
        %3033 = vmatpush1.bf16.xpose.msra.mxu0 0
        %3034 = vmatprep.mubr.bf16.mxu0 0
        %3035 = vmatmul.mubr.bf16.gmra.mrb[0].mxu0 %v2997
        %v3036 = vpop.f32.mrb[0].mxu0
        %v3037 = vadd.f32 0.0, %v3036
        %v3038 = vpop.f32.mrb[0].mxu0
        %v3039 = vpop.f32.mrb[0].mxu0
        %v3040 = vpop.f32.mrb[0].mxu0
        %3041 = vdwg.mxu0
        %v3042 = vsel %vm1166, %v2890, -inf
        %3043 = vmax.xlane.f32.xlu0 %v3042
        %v3044 = vpop.xlane.xlu0 %3043
        %v3045 = vsel %vm1166, %v2939, -inf
        %3046 = vmax.xlane.f32.xlu0 %v3045
        %v3047 = vpop.xlane.xlu0 %3046
        %v3048 = vsel %vm1166, %v2988, -inf
        %3049 = vmax.xlane.f32.xlu0 %v3048
        %v3050 = vpop.xlane.xlu0 %3049
        %v3051 = vsel %vm1166, %v3037, -inf
        %3052 = vmax.xlane.f32.xlu0 %v3051
        %v3053 = vpop.xlane.xlu0 %3052
        %v3054 = vsub.f32 %v2890, %v3044
        %v3055 = vsub.f32 %v2939, %v3047
        %v3056 = vsub.f32 %v2988, %v3050
        %v3057 = vsub.f32 %v3037, %v3053
        %v3058 = vmul.f32 %v3054, 1.442695
        %v3059 = vpow.pop %v3058
        %v3060 = vmul.f32 %v3055, 1.442695
        %v3061 = vpow.pop %v3060
        %v3062 = vmul.f32 %v3056, 1.442695
        %v3063 = vpow.pop %v3062
        %v3064 = vmul.f32 %v3057, 1.442695
        %v3065 = vpow.pop %v3064
        %v3066 = vsel %vm1166, %v3059, 0.0
        %3067 = vadd.xlane.f32.xlu0 %v3066
        %v3068 = vpop.xlane.xlu0 %3067
        %v3069 = vsel %vm1166, %v3061, 0.0
        %3070 = vadd.xlane.f32.xlu0 %v3069
        %v3071 = vpop.xlane.xlu0 %3070
        %v3072 = vsel %vm1166, %v3063, 0.0
        %3073 = vadd.xlane.f32.xlu0 %v3072
        %v3074 = vpop.xlane.xlu0 %3073
        %v3075 = vsel %vm1166, %v3065, 0.0
        %3076 = vadd.xlane.f32.xlu0 %v3075
        %v3077 = vpop.xlane.xlu0 %3076
        %v3078 = vrcp.pop %v3068
        %v3079 = vmul.f32 %v3059, %v3078
        %v3080 = vrcp.pop %v3071
        %v3081 = vmul.f32 %v3061, %v3080
        %v3082 = vrcp.pop %v3074
        %v3083 = vmul.f32 %v3063, %v3082
        %v3084 = vrcp.pop %v3077
        %v3085 = vmul.f32 %v3065, %v3084
        %v3086 = vpack.c.bf16 %v3079, %v3079
        %v3087 = vpack.c.bf16 %v3081, %v3081
        %v3088 = vpack.c.bf16 %v3083, %v3083
        %v3089 = vpack.c.bf16 %v3085, %v3085
        %3090 = vrot.lane.b32.xlu0 %v2842, 64
        %v3091 = vpop.permute.xlu0 %3090
        %v3093 = vsel %vm1166, %v3086, 0
        %v3096 = vsel %vm1220, %v3091, 0
        %3098 = vmatprep.subr.bf16.mxu0 0
        %3099 = vmatpush1.bf16.msra.mxu0 %v3096
        %3100 = vmatprep.subr.bf16.mxu0 0
        %3101 = vmatpush1.bf16.msra.mxu0 0
        %3102 = vmatprep.subr.bf16.mxu0 0
        %3103 = vmatpush1.bf16.msra.mxu0 0
        %3104 = vmatprep.subr.bf16.mxu0 0
        %3105 = vmatpush1.bf16.msra.mxu0 0
        %3106 = vmatprep.subr.bf16.mxu0 0
        %3107 = vmatpush1.bf16.msra.mxu0 0
        %3108 = vmatprep.subr.bf16.mxu0 0
        %3109 = vmatpush1.bf16.msra.mxu0 0
        %3110 = vmatprep.subr.bf16.mxu0 0
        %3111 = vmatpush1.bf16.msra.mxu0 0
        %3112 = vmatprep.subr.bf16.mxu0 0
        %3113 = vmatpush1.bf16.msra.mxu0 0
        %3114 = vmatprep.subr.bf16.mxu0 0
        %3115 = vmatpush1.bf16.msra.mxu0 0
        %3116 = vmatprep.subr.bf16.mxu0 0
        %3117 = vmatpush1.bf16.msra.mxu0 0
        %3118 = vmatprep.subr.bf16.mxu0 0
        %3119 = vmatpush1.bf16.msra.mxu0 0
        %3120 = vmatprep.subr.bf16.mxu0 0
        %3121 = vmatpush1.bf16.msra.mxu0 0
        %3122 = vmatprep.subr.bf16.mxu0 0
        %3123 = vmatpush1.bf16.msra.mxu0 0
        %3124 = vmatprep.subr.bf16.mxu0 0
        %3125 = vmatpush1.bf16.msra.mxu0 0
        %3126 = vmatprep.subr.bf16.mxu0 0
        %3127 = vmatpush1.bf16.msra.mxu0 0
        %3128 = vmatprep.subr.bf16.mxu0 0
        %3129 = vmatpush1.bf16.msra.mxu0 0
        %3130 = vmatprep.mubr.bf16.mxu0 0
        %3131 = vmatmul.mubr.bf16.gmra.mrb[0].mxu0 %v3093
        %v3132 = vpop.f32.mrb[0].mxu0
        %v3133 = vadd.f32 0.0, %v3132
        %v3134 = vpop.f32.mrb[0].mxu0
        %v3135 = vpop.f32.mrb[0].mxu0
        %v3136 = vpop.f32.mrb[0].mxu0
        %3137 = vdwg.mxu0
        %3138 = vrot.lane.b32.xlu0 %v2843, 64
        %v3139 = vpop.permute.xlu0 %3138
        %v3141 = vsel %vm1166, %v3087, 0
        %v3144 = vsel %vm1220, %v3139, 0
        %3146 = vmatprep.subr.bf16.mxu0 0
        %3147 = vmatpush1.bf16.msra.mxu0 %v3144
        %3148 = vmatprep.subr.bf16.mxu0 0
        %3149 = vmatpush1.bf16.msra.mxu0 0
        %3150 = vmatprep.subr.bf16.mxu0 0
        %3151 = vmatpush1.bf16.msra.mxu0 0
        %3152 = vmatprep.subr.bf16.mxu0 0
        %3153 = vmatpush1.bf16.msra.mxu0 0
        %3154 = vmatprep.subr.bf16.mxu0 0
        %3155 = vmatpush1.bf16.msra.mxu0 0
        %3156 = vmatprep.subr.bf16.mxu0 0
        %3157 = vmatpush1.bf16.msra.mxu0 0
        %3158 = vmatprep.subr.bf16.mxu0 0
        %3159 = vmatpush1.bf16.msra.mxu0 0
        %3160 = vmatprep.subr.bf16.mxu0 0
        %3161 = vmatpush1.bf16.msra.mxu0 0
        %3162 = vmatprep.subr.bf16.mxu0 0
        %3163 = vmatpush1.bf16.msra.mxu0 0
        %3164 = vmatprep.subr.bf16.mxu0 0
        %3165 = vmatpush1.bf16.msra.mxu0 0
        %3166 = vmatprep.subr.bf16.mxu0 0
        %3167 = vmatpush1.bf16.msra.mxu0 0
        %3168 = vmatprep.subr.bf16.mxu0 0
        %3169 = vmatpush1.bf16.msra.mxu0 0
        %3170 = vmatprep.subr.bf16.mxu0 0
        %3171 = vmatpush1.bf16.msra.mxu0 0
        %3172 = vmatprep.subr.bf16.mxu0 0
        %3173 = vmatpush1.bf16.msra.mxu0 0
        %3174 = vmatprep.subr.bf16.mxu0 0
        %3175 = vmatpush1.bf16.msra.mxu0 0
        %3176 = vmatprep.subr.bf16.mxu0 0
        %3177 = vmatpush1.bf16.msra.mxu0 0
        %3178 = vmatprep.mubr.bf16.mxu0 0
        %3179 = vmatmul.mubr.bf16.gmra.mrb[0].mxu0 %v3141
        %v3180 = vpop.f32.mrb[0].mxu0
        %v3181 = vadd.f32 0.0, %v3180
        %v3182 = vpop.f32.mrb[0].mxu0
        %v3183 = vpop.f32.mrb[0].mxu0
        %v3184 = vpop.f32.mrb[0].mxu0
        %3185 = vdwg.mxu0
        %3186 = vrot.lane.b32.xlu0 %v2844, 64
        %v3187 = vpop.permute.xlu0 %3186
        %v3189 = vsel %vm1166, %v3088, 0
        %v3192 = vsel %vm1220, %v3187, 0
        %3194 = vmatprep.subr.bf16.mxu0 0
        %3195 = vmatpush1.bf16.msra.mxu0 %v3192
        %3196 = vmatprep.subr.bf16.mxu0 0
        %3197 = vmatpush1.bf16.msra.mxu0 0
        %3198 = vmatprep.subr.bf16.mxu0 0
        %3199 = vmatpush1.bf16.msra.mxu0 0
        %3200 = vmatprep.subr.bf16.mxu0 0
        %3201 = vmatpush1.bf16.msra.mxu0 0
        %3202 = vmatprep.subr.bf16.mxu0 0
        %3203 = vmatpush1.bf16.msra.mxu0 0
        %3204 = vmatprep.subr.bf16.mxu0 0
        %3205 = vmatpush1.bf16.msra.mxu0 0
        %3206 = vmatprep.subr.bf16.mxu0 0
        %3207 = vmatpush1.bf16.msra.mxu0 0
        %3208 = vmatprep.subr.bf16.mxu0 0
        %3209 = vmatpush1.bf16.msra.mxu0 0
        %3210 = vmatprep.subr.bf16.mxu0 0
        %3211 = vmatpush1.bf16.msra.mxu0 0
        %3212 = vmatprep.subr.bf16.mxu0 0
        %3213 = vmatpush1.bf16.msra.mxu0 0
        %3214 = vmatprep.subr.bf16.mxu0 0
        %3215 = vmatpush1.bf16.msra.mxu0 0
        %3216 = vmatprep.subr.bf16.mxu0 0
        %3217 = vmatpush1.bf16.msra.mxu0 0
        %3218 = vmatprep.subr.bf16.mxu0 0
        %3219 = vmatpush1.bf16.msra.mxu0 0
        %3220 = vmatprep.subr.bf16.mxu0 0
        %3221 = vmatpush1.bf16.msra.mxu0 0
        %3222 = vmatprep.subr.bf16.mxu0 0
        %3223 = vmatpush1.bf16.msra.mxu0 0
        %3224 = vmatprep.subr.bf16.mxu0 0
        %3225 = vmatpush1.bf16.msra.mxu0 0
        %3226 = vmatprep.mubr.bf16.mxu0 0
        %3227 = vmatmul.mubr.bf16.gmra.mrb[0].mxu0 %v3189
        %v3228 = vpop.f32.mrb[0].mxu0
        %v3229 = vadd.f32 0.0, %v3228
        %v3230 = vpop.f32.mrb[0].mxu0
        %v3231 = vpop.f32.mrb[0].mxu0
        %v3232 = vpop.f32.mrb[0].mxu0
        %3233 = vdwg.mxu0
        %3234 = vrot.lane.b32.xlu0 %v2845, 64
        %v3235 = vpop.permute.xlu0 %3234
        %v3237 = vsel %vm1166, %v3089, 0
        %v3240 = vsel %vm1220, %v3235, 0
        %3242 = vmatprep.subr.bf16.mxu0 0
        %3243 = vmatpush1.bf16.msra.mxu0 %v3240
        %3244 = vmatprep.subr.bf16.mxu0 0
        %3245 = vmatpush1.bf16.msra.mxu0 0
        %3246 = vmatprep.subr.bf16.mxu0 0
        %3247 = vmatpush1.bf16.msra.mxu0 0
        %3248 = vmatprep.subr.bf16.mxu0 0
        %3249 = vmatpush1.bf16.msra.mxu0 0
        %3250 = vmatprep.subr.bf16.mxu0 0
        %3251 = vmatpush1.bf16.msra.mxu0 0
        %3252 = vmatprep.subr.bf16.mxu0 0
        %3253 = vmatpush1.bf16.msra.mxu0 0
        %3254 = vmatprep.subr.bf16.mxu0 0
        %3255 = vmatpush1.bf16.msra.mxu0 0
        %3256 = vmatprep.subr.bf16.mxu0 0
        %3257 = vmatpush1.bf16.msra.mxu0 0
        %3258 = vmatprep.subr.bf16.mxu0 0
        %3259 = vmatpush1.bf16.msra.mxu0 0
        %3260 = vmatprep.subr.bf16.mxu0 0
        %3261 = vmatpush1.bf16.msra.mxu0 0
        %3262 = vmatprep.subr.bf16.mxu0 0
        %3263 = vmatpush1.bf16.msra.mxu0 0
        %3264 = vmatprep.subr.bf16.mxu0 0
        %3265 = vmatpush1.bf16.msra.mxu0 0
        %3266 = vmatprep.subr.bf16.mxu0 0
        %3267 = vmatpush1.bf16.msra.mxu0 0
        %3268 = vmatprep.subr.bf16.mxu0 0
        %3269 = vmatpush1.bf16.msra.mxu0 0
        %3270 = vmatprep.subr.bf16.mxu0 0
        %3271 = vmatpush1.bf16.msra.mxu0 0
        %3272 = vmatprep.subr.bf16.mxu0 0
        %3273 = vmatpush1.bf16.msra.mxu0 0
        %3274 = vmatprep.mubr.bf16.mxu0 0
        %3275 = vmatmul.mubr.bf16.gmra.mrb[0].mxu0 %v3237
        %v3276 = vpop.f32.mrb[0].mxu0
        %v3277 = vadd.f32 0.0, %v3276
        %v3278 = vpop.f32.mrb[0].mxu0
        %v3279 = vpop.f32.mrb[0].mxu0
        %v3280 = vpop.f32.mrb[0].mxu0
        %3281 = vdwg.mxu0
        %v3282 = vpack.c.bf16 %v3133, %v3133
        %v3283 = vpack.c.bf16 %v3181, %v3181
        %v3284 = vpack.c.bf16 %v3229, %v3229
        %v3285 = vpack.c.bf16 %v3277, %v3277
        %s3286 = scalar_lea.vmem %s5, 64
        %v3287 = vld [vmem:[%s3286] sm:$0xf]
        %v3288 = vld [vmem:[%s3286 + $0x4] sm:$0xf]
        %v3289 = vld [vmem:[%s3286 + $0x8] sm:$0xf]
        %v3290 = vld [vmem:[%s3286 + $0xc] sm:$0xf]
        %v3291 = vld [vmem:[%s3286 + $0x10] sm:$0xf]
        %v3292 = vld [vmem:[%s3286 + $0x14] sm:$0xf]
        %v3293 = vld [vmem:[%s3286 + $0x18] sm:$0xf]
        %v3294 = vld [vmem:[%s3286 + $0x1c] sm:$0xf]
        %v3295 = vld [vmem:[%s3286 + $0x20] sm:$0xf]
        %v3296 = vld [vmem:[%s3286 + $0x24] sm:$0xf]
        %v3297 = vld [vmem:[%s3286 + $0x28] sm:$0xf]
        %v3298 = vld [vmem:[%s3286 + $0x2c] sm:$0xf]
        %v3299 = vld [vmem:[%s3286 + $0x30] sm:$0xf]
        %v3300 = vld [vmem:[%s3286 + $0x34] sm:$0xf]
        %v3301 = vld [vmem:[%s3286 + $0x38] sm:$0xf]
        %v3302 = vld [vmem:[%s3286 + $0x3c] sm:$0xf]
        %v3307 = vunpack.c.l.b16 %v3287
        %v3308 = vunpack.c.l.b16 %v3288
        %v3309 = vunpack.c.l.b16 %v3289
        %v3310 = vunpack.c.l.b16 %v3290
        %v3311 = vpack.c.b16 %v3308, %v3307
        %v3312 = vpack.c.b16 %v3310, %v3309
        %v3316 = vsel %vm972, %v3282, 0
        %3318 = vmatprep.subr.bf16.mxu0 0
        %3319 = vmatpush1.bf16.msra.mxu0 %v3311
        %3320 = vmatprep.subr.bf16.mxu0 0
        %3321 = vmatpush1.bf16.msra.mxu0 %v3312
        %3322 = vmatprep.subr.bf16.mxu0 0
        %3323 = vmatpush1.bf16.msra.mxu0 0
        %3324 = vmatprep.subr.bf16.mxu0 0
        %3325 = vmatpush1.bf16.msra.mxu0 0
        %3326 = vmatprep.subr.bf16.mxu0 0
        %3327 = vmatpush1.bf16.msra.mxu0 0
        %3328 = vmatprep.subr.bf16.mxu0 0
        %3329 = vmatpush1.bf16.msra.mxu0 0
        %3330 = vmatprep.subr.bf16.mxu0 0
        %3331 = vmatpush1.bf16.msra.mxu0 0
        %3332 = vmatprep.subr.bf16.mxu0 0
        %3333 = vmatpush1.bf16.msra.mxu0 0
        %3334 = vmatprep.subr.bf16.mxu0 0
        %3335 = vmatpush1.bf16.msra.mxu0 0
        %3336 = vmatprep.subr.bf16.mxu0 0
        %3337 = vmatpush1.bf16.msra.mxu0 0
        %3338 = vmatprep.subr.bf16.mxu0 0
        %3339 = vmatpush1.bf16.msra.mxu0 0
        %3340 = vmatprep.subr.bf16.mxu0 0
        %3341 = vmatpush1.bf16.msra.mxu0 0
        %3342 = vmatprep.subr.bf16.mxu0 0
        %3343 = vmatpush1.bf16.msra.mxu0 0
        %3344 = vmatprep.subr.bf16.mxu0 0
        %3345 = vmatpush1.bf16.msra.mxu0 0
        %3346 = vmatprep.subr.bf16.mxu0 0
        %3347 = vmatpush1.bf16.msra.mxu0 0
        %3348 = vmatprep.subr.bf16.mxu0 0
        %3349 = vmatpush1.bf16.msra.mxu0 0
        %3350 = vmatprep.mubr.bf16.mxu0 0
        %3351 = vmatmul.mubr.bf16.gmra.mrb[0].mxu0 %v3316
        %v3352 = vpop.f32.mrb[0].mxu0
        %v3353 = vadd.f32 0.0, %v3352
        %v3354 = vpop.f32.mrb[0].mxu0
        %v3355 = vpop.f32.mrb[0].mxu0
        %v3356 = vpop.f32.mrb[0].mxu0
        %3357 = vdwg.mxu0
        %v3362 = vunpack.c.l.b16 %v3291
        %v3363 = vunpack.c.l.b16 %v3292
        %v3364 = vunpack.c.l.b16 %v3293
        %v3365 = vunpack.c.l.b16 %v3294
        %v3366 = vpack.c.b16 %v3363, %v3362
        %v3367 = vpack.c.b16 %v3365, %v3364
        %v3371 = vsel %vm972, %v3283, 0
        %3373 = vmatprep.subr.bf16.mxu0 0
        %3374 = vmatpush1.bf16.msra.mxu0 %v3366
        %3375 = vmatprep.subr.bf16.mxu0 0
        %3376 = vmatpush1.bf16.msra.mxu0 %v3367
        %3377 = vmatprep.subr.bf16.mxu0 0
        %3378 = vmatpush1.bf16.msra.mxu0 0
        %3379 = vmatprep.subr.bf16.mxu0 0
        %3380 = vmatpush1.bf16.msra.mxu0 0
        %3381 = vmatprep.subr.bf16.mxu0 0
        %3382 = vmatpush1.bf16.msra.mxu0 0
        %3383 = vmatprep.subr.bf16.mxu0 0
        %3384 = vmatpush1.bf16.msra.mxu0 0
        %3385 = vmatprep.subr.bf16.mxu0 0
        %3386 = vmatpush1.bf16.msra.mxu0 0
        %3387 = vmatprep.subr.bf16.mxu0 0
        %3388 = vmatpush1.bf16.msra.mxu0 0
        %3389 = vmatprep.subr.bf16.mxu0 0
        %3390 = vmatpush1.bf16.msra.mxu0 0
        %3391 = vmatprep.subr.bf16.mxu0 0
        %3392 = vmatpush1.bf16.msra.mxu0 0
        %3393 = vmatprep.subr.bf16.mxu0 0
        %3394 = vmatpush1.bf16.msra.mxu0 0
        %3395 = vmatprep.subr.bf16.mxu0 0
        %3396 = vmatpush1.bf16.msra.mxu0 0
        %3397 = vmatprep.subr.bf16.mxu0 0
        %3398 = vmatpush1.bf16.msra.mxu0 0
        %3399 = vmatprep.subr.bf16.mxu0 0
        %3400 = vmatpush1.bf16.msra.mxu0 0
        %3401 = vmatprep.subr.bf16.mxu0 0
        %3402 = vmatpush1.bf16.msra.mxu0 0
        %3403 = vmatprep.subr.bf16.mxu0 0
        %3404 = vmatpush1.bf16.msra.mxu0 0
        %3405 = vmatprep.mubr.bf16.mxu0 0
        %3406 = vmatmul.mubr.bf16.gmra.mrb[0].mxu0 %v3371
        %v3407 = vpop.f32.mrb[0].mxu0
        %v3408 = vadd.f32 0.0, %v3407
        %v3409 = vpop.f32.mrb[0].mxu0
        %v3410 = vpop.f32.mrb[0].mxu0
        %v3411 = vpop.f32.mrb[0].mxu0
        %3412 = vdwg.mxu0
        %v3417 = vunpack.c.l.b16 %v3295
        %v3418 = vunpack.c.l.b16 %v3296
        %v3419 = vunpack.c.l.b16 %v3297
        %v3420 = vunpack.c.l.b16 %v3298
        %v3421 = vpack.c.b16 %v3418, %v3417
        %v3422 = vpack.c.b16 %v3420, %v3419
        %v3426 = vsel %vm972, %v3284, 0
        %3428 = vmatprep.subr.bf16.mxu0 0
        %3429 = vmatpush1.bf16.msra.mxu0 %v3421
        %3430 = vmatprep.subr.bf16.mxu0 0
        %3431 = vmatpush1.bf16.msra.mxu0 %v3422
        %3432 = vmatprep.subr.bf16.mxu0 0
        %3433 = vmatpush1.bf16.msra.mxu0 0
        %3434 = vmatprep.subr.bf16.mxu0 0
        %3435 = vmatpush1.bf16.msra.mxu0 0
        %3436 = vmatprep.subr.bf16.mxu0 0
        %3437 = vmatpush1.bf16.msra.mxu0 0
        %3438 = vmatprep.subr.bf16.mxu0 0
        %3439 = vmatpush1.bf16.msra.mxu0 0
        %3440 = vmatprep.subr.bf16.mxu0 0
        %3441 = vmatpush1.bf16.msra.mxu0 0
        %3442 = vmatprep.subr.bf16.mxu0 0
        %3443 = vmatpush1.bf16.msra.mxu0 0
        %3444 = vmatprep.subr.bf16.mxu0 0
        %3445 = vmatpush1.bf16.msra.mxu0 0
        %3446 = vmatprep.subr.bf16.mxu0 0
        %3447 = vmatpush1.bf16.msra.mxu0 0
        %3448 = vmatprep.subr.bf16.mxu0 0
        %3449 = vmatpush1.bf16.msra.mxu0 0
        %3450 = vmatprep.subr.bf16.mxu0 0
        %3451 = vmatpush1.bf16.msra.mxu0 0
        %3452 = vmatprep.subr.bf16.mxu0 0
        %3453 = vmatpush1.bf16.msra.mxu0 0
        %3454 = vmatprep.subr.bf16.mxu0 0
        %3455 = vmatpush1.bf16.msra.mxu0 0
        %3456 = vmatprep.subr.bf16.mxu0 0
        %3457 = vmatpush1.bf16.msra.mxu0 0
        %3458 = vmatprep.subr.bf16.mxu0 0
        %3459 = vmatpush1.bf16.msra.mxu0 0
        %3460 = vmatprep.mubr.bf16.mxu0 0
        %3461 = vmatmul.mubr.bf16.gmra.mrb[0].mxu0 %v3426
        %v3462 = vpop.f32.mrb[0].mxu0
        %v3463 = vadd.f32 0.0, %v3462
        %v3464 = vpop.f32.mrb[0].mxu0
        %v3465 = vpop.f32.mrb[0].mxu0
        %v3466 = vpop.f32.mrb[0].mxu0
        %3467 = vdwg.mxu0
        %v3472 = vunpack.c.l.b16 %v3299
        %v3473 = vunpack.c.l.b16 %v3300
        %v3474 = vunpack.c.l.b16 %v3301
        %v3475 = vunpack.c.l.b16 %v3302
        %v3476 = vpack.c.b16 %v3473, %v3472
        %v3477 = vpack.c.b16 %v3475, %v3474
        %v3481 = vsel %vm972, %v3285, 0
        %3483 = vmatprep.subr.bf16.mxu0 0
        %3484 = vmatpush1.bf16.msra.mxu0 %v3476
        %3485 = vmatprep.subr.bf16.mxu0 0
        %3486 = vmatpush1.bf16.msra.mxu0 %v3477
        %3487 = vmatprep.subr.bf16.mxu0 0
        %3488 = vmatpush1.bf16.msra.mxu0 0
        %3489 = vmatprep.subr.bf16.mxu0 0
        %3490 = vmatpush1.bf16.msra.mxu0 0
        %3491 = vmatprep.subr.bf16.mxu0 0
        %3492 = vmatpush1.bf16.msra.mxu0 0
        %3493 = vmatprep.subr.bf16.mxu0 0
        %3494 = vmatpush1.bf16.msra.mxu0 0
        %3495 = vmatprep.subr.bf16.mxu0 0
        %3496 = vmatpush1.bf16.msra.mxu0 0
        %3497 = vmatprep.subr.bf16.mxu0 0
        %3498 = vmatpush1.bf16.msra.mxu0 0
        %3499 = vmatprep.subr.bf16.mxu0 0
        %3500 = vmatpush1.bf16.msra.mxu0 0
        %3501 = vmatprep.subr.bf16.mxu0 0
        %3502 = vmatpush1.bf16.msra.mxu0 0
        %3503 = vmatprep.subr.bf16.mxu0 0
        %3504 = vmatpush1.bf16.msra.mxu0 0
        %3505 = vmatprep.subr.bf16.mxu0 0
        %3506 = vmatpush1.bf16.msra.mxu0 0
        %3507 = vmatprep.subr.bf16.mxu0 0
        %3508 = vmatpush1.bf16.msra.mxu0 0
        %3509 = vmatprep.subr.bf16.mxu0 0
        %3510 = vmatpush1.bf16.msra.mxu0 0
        %3511 = vmatprep.subr.bf16.mxu0 0
        %3512 = vmatpush1.bf16.msra.mxu0 0
        %3513 = vmatprep.subr.bf16.mxu0 0
        %3514 = vmatpush1.bf16.msra.mxu0 0
        %3515 = vmatprep.mubr.bf16.mxu0 0
        %3516 = vmatmul.mubr.bf16.gmra.mrb[0].mxu0 %v3481
        %v3517 = vpop.f32.mrb[0].mxu0
        %v3518 = vadd.f32 0.0, %v3517
        %v3519 = vpop.f32.mrb[0].mxu0
        %v3520 = vpop.f32.mrb[0].mxu0
        %v3521 = vpop.f32.mrb[0].mxu0
        %3522 = vdwg.mxu0
        %v3523 = vadd.f32 %v3353, %v3408
        %v3524 = vadd.f32 %v3523, %v3463
        %v3525 = vadd.f32 %v3524, %v3518
        %s3526 = scalar_lea.vmem %s6, 1
        %v3527 = vld [vmem:[%s3526] sm:$0x1]
        %v3529 = vlaneseq
        %v3530 = vshrl.u32 %v3529, 7
        %v3531 = vsub.s32 0, %v3530
        %v3532 = vrot.slane %v3527, %v3531
        %v3534 = vadd.f32 %v3525, %v3532
        %v3535 = vadd.f32 %v3534, %v2394
        %s3536 = scalar_lea.vmem %s7, 1
        %v3537 = vld [vmem:[%s3536] sm:$0x1]
        %s3538 = scalar_lea.vmem %s8, 1
        %v3539 = vld [vmem:[%s3538] sm:$0x1]
        %3540 = vadd.xlane.f32.xlu0 %v3535
        %v3541 = vpop.xlane.xlu0 %3540
        %v3542 = vmul.f32 %v3541, %v496
        %v3543 = vsub.f32 %v3535, %v3542
        %v3544 = vmul.f32 %v3543, %v3543
        %3545 = vadd.xlane.f32.xlu0 %v3544
        %v3546 = vpop.xlane.xlu0 %3545
        %v3547 = vmul.f32 %v3546, %v496
        %v3548 = vadd.f32 %v3547, 1e-12
        %v3549 = vrsqrt.pop %v3548
        %v3550 = vmul.f32 %v3543, %v3549
        %v3552 = vlaneseq
        %v3553 = vshrl.u32 %v3552, 7
        %v3554 = vsub.s32 0, %v3553
        %v3555 = vrot.slane %v3537, %v3554
        %v3557 = vmul.f32 %v3550, %v3555
        %v3559 = vlaneseq
        %v3560 = vshrl.u32 %v3559, 7
        %v3561 = vsub.s32 0, %v3560
        %v3562 = vrot.slane %v3539, %v3561
        %v3564 = vadd.f32 %v3557, %v3562
        %v3565 = vpack.c.bf16 %v3564, %v3564
        %s3566 = scalar_lea.vmem %s9, 256
        %v3567 = vld [vmem:[%s3566] sm:$0xff]
        %v3568 = vld [vmem:[%s3566 + $0x8] sm:$0xff]
        %v3569 = vld [vmem:[%s3566 + $0x10] sm:$0xff]
        %v3570 = vld [vmem:[%s3566 + $0x18] sm:$0xff]
        %v3571 = vld [vmem:[%s3566 + $0x20] sm:$0xff]
        %v3572 = vld [vmem:[%s3566 + $0x28] sm:$0xff]
        %v3573 = vld [vmem:[%s3566 + $0x30] sm:$0xff]
        %v3574 = vld [vmem:[%s3566 + $0x38] sm:$0xff]
        %v3575 = vld [vmem:[%s3566 + $0x40] sm:$0xff]
        %v3576 = vld [vmem:[%s3566 + $0x48] sm:$0xff]
        %v3577 = vld [vmem:[%s3566 + $0x50] sm:$0xff]
        %v3578 = vld [vmem:[%s3566 + $0x58] sm:$0xff]
        %v3579 = vld [vmem:[%s3566 + $0x60] sm:$0xff]
        %v3580 = vld [vmem:[%s3566 + $0x68] sm:$0xff]
        %v3581 = vld [vmem:[%s3566 + $0x70] sm:$0xff]
        %v3582 = vld [vmem:[%s3566 + $0x78] sm:$0xff]
        %v3583 = vld [vmem:[%s3566 + $0x80] sm:$0xff]
        %v3584 = vld [vmem:[%s3566 + $0x88] sm:$0xff]
        %v3585 = vld [vmem:[%s3566 + $0x90] sm:$0xff]
        %v3586 = vld [vmem:[%s3566 + $0x98] sm:$0xff]
        %v3587 = vld [vmem:[%s3566 + $0xa0] sm:$0xff]
        %v3588 = vld [vmem:[%s3566 + $0xa8] sm:$0xff]
        %v3589 = vld [vmem:[%s3566 + $0xb0] sm:$0xff]
        %v3590 = vld [vmem:[%s3566 + $0xb8] sm:$0xff]
        %v3591 = vld [vmem:[%s3566 + $0xc0] sm:$0xff]
        %v3592 = vld [vmem:[%s3566 + $0xc8] sm:$0xff]
        %v3593 = vld [vmem:[%s3566 + $0xd0] sm:$0xff]
        %v3594 = vld [vmem:[%s3566 + $0xd8] sm:$0xff]
        %v3595 = vld [vmem:[%s3566 + $0xe0] sm:$0xff]
        %v3596 = vld [vmem:[%s3566 + $0xe8] sm:$0xff]
        %v3597 = vld [vmem:[%s3566 + $0xf0] sm:$0xff]
        %v3598 = vld [vmem:[%s3566 + $0xf8] sm:$0xff]
        %s3599 = scalar_lea.vmem %s10, 4
        %v3600 = vld [vmem:[%s3599] sm:$0xf]
        %v3602 = vlaneseq
        %v3603 = vshrl.u32 %v3602, 7
        %v3604 = vsub.s32 0, %v3603
        %v3605 = vrot.slane %v3600, %v3604
        %v3606 = vlaneseq
        %v3607 = vshrl.u32 %v3606, 7
        %v3608 = vsub.s32 1, %v3607
        %v3609 = vrot.slane %v3600, %v3608
        %v3610 = vlaneseq
        %v3611 = vshrl.u32 %v3610, 7
        %v3612 = vsub.s32 2, %v3611
        %v3613 = vrot.slane %v3600, %v3612
        %v3614 = vlaneseq
        %v3615 = vshrl.u32 %v3614, 7
        %v3616 = vsub.s32 3, %v3615
        %v3617 = vrot.slane %v3600, %v3616
        %v3654 = vunpack.c.l.b16 %v3567
        %v3655 = vunpack.c.h.b16 %v3567
        %v3656 = vunpack.c.l.b16 %v3568
        %v3657 = vunpack.c.h.b16 %v3568
        %v3658 = vunpack.c.l.b16 %v3569
        %v3659 = vunpack.c.h.b16 %v3569
        %v3660 = vunpack.c.l.b16 %v3570
        %v3661 = vunpack.c.h.b16 %v3570
        %v3662 = vunpack.c.l.b16 %v3571
        %v3663 = vunpack.c.h.b16 %v3571
        %v3664 = vunpack.c.l.b16 %v3572
        %v3665 = vunpack.c.h.b16 %v3572
        %v3666 = vunpack.c.l.b16 %v3573
        %v3667 = vunpack.c.h.b16 %v3573
        %v3668 = vunpack.c.l.b16 %v3574
        %v3669 = vunpack.c.h.b16 %v3574
        %v3670 = vunpack.c.l.b16 %v3575
        %v3671 = vunpack.c.h.b16 %v3575
        %v3672 = vunpack.c.l.b16 %v3576
        %v3673 = vunpack.c.h.b16 %v3576
        %v3674 = vunpack.c.l.b16 %v3577
        %v3675 = vunpack.c.h.b16 %v3577
        %v3676 = vunpack.c.l.b16 %v3578
        %v3677 = vunpack.c.h.b16 %v3578
        %v3678 = vunpack.c.l.b16 %v3579
        %v3679 = vunpack.c.h.b16 %v3579
        %v3680 = vunpack.c.l.b16 %v3580
        %v3681 = vunpack.c.h.b16 %v3580
        %v3682 = vunpack.c.l.b16 %v3581
        %v3683 = vunpack.c.h.b16 %v3581
        %v3684 = vunpack.c.l.b16 %v3582
        %v3685 = vunpack.c.h.b16 %v3582
        %v3686 = vunpack.c.l.b16 %v3583
        %v3687 = vunpack.c.h.b16 %v3583
        %v3688 = vunpack.c.l.b16 %v3584
        %v3689 = vunpack.c.h.b16 %v3584
        %v3690 = vunpack.c.l.b16 %v3585
        %v3691 = vunpack.c.h.b16 %v3585
        %v3692 = vunpack.c.l.b16 %v3586
        %v3693 = vunpack.c.h.b16 %v3586
        %v3694 = vunpack.c.l.b16 %v3587
        %v3695 = vunpack.c.h.b16 %v3587
        %v3696 = vunpack.c.l.b16 %v3588
        %v3697 = vunpack.c.h.b16 %v3588
        %v3698 = vunpack.c.l.b16 %v3589
        %v3699 = vunpack.c.h.b16 %v3589
        %v3700 = vunpack.c.l.b16 %v3590
        %v3701 = vunpack.c.h.b16 %v3590
        %v3702 = vunpack.c.l.b16 %v3591
        %v3703 = vunpack.c.h.b16 %v3591
        %v3704 = vunpack.c.l.b16 %v3592
        %v3705 = vunpack.c.h.b16 %v3592
        %v3706 = vunpack.c.l.b16 %v3593
        %v3707 = vunpack.c.h.b16 %v3593
        %v3708 = vunpack.c.l.b16 %v3594
        %v3709 = vunpack.c.h.b16 %v3594
        %v3710 = vunpack.c.l.b16 %v3595
        %v3711 = vunpack.c.h.b16 %v3595
        %v3712 = vunpack.c.l.b16 %v3596
        %v3713 = vunpack.c.h.b16 %v3596
        %v3714 = vunpack.c.l.b16 %v3597
        %v3715 = vunpack.c.h.b16 %v3597
        %v3716 = vunpack.c.l.b16 %v3598
        %v3717 = vunpack.c.h.b16 %v3598
        %v3718 = vpack.c.b16 %v3658, %v3654
        %v3719 = vpack.c.b16 %v3659, %v3655
        %v3720 = vpack.c.b16 %v3660, %v3656
        %v3721 = vpack.c.b16 %v3661, %v3657
        %v3722 = vpack.c.b16 %v3666, %v3662
        %v3723 = vpack.c.b16 %v3667, %v3663
        %v3724 = vpack.c.b16 %v3668, %v3664
        %v3725 = vpack.c.b16 %v3669, %v3665
        %v3726 = vpack.c.b16 %v3674, %v3670
        %v3727 = vpack.c.b16 %v3675, %v3671
        %v3728 = vpack.c.b16 %v3676, %v3672
        %v3729 = vpack.c.b16 %v3677, %v3673
        %v3730 = vpack.c.b16 %v3682, %v3678
        %v3731 = vpack.c.b16 %v3683, %v3679
        %v3732 = vpack.c.b16 %v3684, %v3680
        %v3733 = vpack.c.b16 %v3685, %v3681
        %v3734 = vpack.c.b16 %v3690, %v3686
        %v3735 = vpack.c.b16 %v3691, %v3687
        %v3736 = vpack.c.b16 %v3692, %v3688
        %v3737 = vpack.c.b16 %v3693, %v3689
        %v3738 = vpack.c.b16 %v3698, %v3694
        %v3739 = vpack.c.b16 %v3699, %v3695
        %v3740 = vpack.c.b16 %v3700, %v3696
        %v3741 = vpack.c.b16 %v3701, %v3697
        %v3742 = vpack.c.b16 %v3706, %v3702
        %v3743 = vpack.c.b16 %v3707, %v3703
        %v3744 = vpack.c.b16 %v3708, %v3704
        %v3745 = vpack.c.b16 %v3709, %v3705
        %v3746 = vpack.c.b16 %v3714, %v3710
        %v3747 = vpack.c.b16 %v3715, %v3711
        %v3748 = vpack.c.b16 %v3716, %v3712
        %v3749 = vpack.c.b16 %v3717, %v3713
        %3782 = vmatprep.subr.bf16.mxu0 %v3719
        %3783 = vmatpush1.bf16.msra.mxu0 %v3718
        %3784 = vmatprep.subr.bf16.mxu0 %v3723
        %3785 = vmatpush1.bf16.msra.mxu0 %v3722
        %3786 = vmatprep.subr.bf16.mxu0 %v3727
        %3787 = vmatpush1.bf16.msra.mxu0 %v3726
        %3788 = vmatprep.subr.bf16.mxu0 %v3731
        %3789 = vmatpush1.bf16.msra.mxu0 %v3730
        %3790 = vmatprep.subr.bf16.mxu0 %v3735
        %3791 = vmatpush1.bf16.msra.mxu0 %v3734
        %3792 = vmatprep.subr.bf16.mxu0 %v3739
        %3793 = vmatpush1.bf16.msra.mxu0 %v3738
        %3794 = vmatprep.subr.bf16.mxu0 %v3743
        %3795 = vmatpush1.bf16.msra.mxu0 %v3742
        %3796 = vmatprep.subr.bf16.mxu0 %v3747
        %3797 = vmatpush1.bf16.msra.mxu0 %v3746
        %3798 = vmatprep.subr.bf16.mxu0 0
        %3799 = vmatpush1.bf16.msra.mxu0 0
        %3800 = vmatprep.subr.bf16.mxu0 0
        %3801 = vmatpush1.bf16.msra.mxu0 0
        %3802 = vmatprep.subr.bf16.mxu0 0
        %3803 = vmatpush1.bf16.msra.mxu0 0
        %3804 = vmatprep.subr.bf16.mxu0 0
        %3805 = vmatpush1.bf16.msra.mxu0 0
        %3806 = vmatprep.subr.bf16.mxu0 0
        %3807 = vmatpush1.bf16.msra.mxu0 0
        %3808 = vmatprep.subr.bf16.mxu0 0
        %3809 = vmatpush1.bf16.msra.mxu0 0
        %3810 = vmatprep.subr.bf16.mxu0 0
        %3811 = vmatpush1.bf16.msra.mxu0 0
        %3812 = vmatprep.subr.bf16.mxu0 0
        %3813 = vmatpush1.bf16.msra.mxu0 0
        %3814 = vmatprep.mubr.bf16.mxu0 0
        %3815 = vmatmul.mubr.bf16.gmra.mrb[0].mxu0 %v3565
        %v3816 = vpop.f32.mrb[0].mxu0
        %v3817 = vadd.f32 %v3605, %v3816
        %v3818 = vpop.f32.mrb[0].mxu0
        %v3819 = vadd.f32 %v3609, %v3818
        %v3820 = vpop.f32.mrb[0].mxu0
        %v3821 = vpop.f32.mrb[0].mxu0
        %3822 = vdwg.mxu0
        %3823 = vmatprep.subr.bf16.mxu0 %v3721
        %3824 = vmatpush1.bf16.msra.mxu0 %v3720
        %3825 = vmatprep.subr.bf16.mxu0 %v3725
        %3826 = vmatpush1.bf16.msra.mxu0 %v3724
        %3827 = vmatprep.subr.bf16.mxu0 %v3729
        %3828 = vmatpush1.bf16.msra.mxu0 %v3728
        %3829 = vmatprep.subr.bf16.mxu0 %v3733
        %3830 = vmatpush1.bf16.msra.mxu0 %v3732
        %3831 = vmatprep.subr.bf16.mxu0 %v3737
        %3832 = vmatpush1.bf16.msra.mxu0 %v3736
        %3833 = vmatprep.subr.bf16.mxu0 %v3741
        %3834 = vmatpush1.bf16.msra.mxu0 %v3740
        %3835 = vmatprep.subr.bf16.mxu0 %v3745
        %3836 = vmatpush1.bf16.msra.mxu0 %v3744
        %3837 = vmatprep.subr.bf16.mxu0 %v3749
        %3838 = vmatpush1.bf16.msra.mxu0 %v3748
        %3839 = vmatprep.subr.bf16.mxu0 0
        %3840 = vmatpush1.bf16.msra.mxu0 0
        %3841 = vmatprep.subr.bf16.mxu0 0
        %3842 = vmatpush1.bf16.msra.mxu0 0
        %3843 = vmatprep.subr.bf16.mxu0 0
        %3844 = vmatpush1.bf16.msra.mxu0 0
        %3845 = vmatprep.subr.bf16.mxu0 0
        %3846 = vmatpush1.bf16.msra.mxu0 0
        %3847 = vmatprep.subr.bf16.mxu0 0
        %3848 = vmatpush1.bf16.msra.mxu0 0
        %3849 = vmatprep.subr.bf16.mxu0 0
        %3850 = vmatpush1.bf16.msra.mxu0 0
        %3851 = vmatprep.subr.bf16.mxu0 0
        %3852 = vmatpush1.bf16.msra.mxu0 0
        %3853 = vmatprep.subr.bf16.mxu0 0
        %3854 = vmatpush1.bf16.msra.mxu0 0
        %3855 = vmatprep.mubr.bf16.mxu0 0
        %3856 = vmatmul.mubr.bf16.gmra.mrb[0].mxu0 %v3565
        %v3857 = vpop.f32.mrb[0].mxu0
        %v3858 = vadd.f32 %v3613, %v3857
        %v3859 = vpop.f32.mrb[0].mxu0
        %v3860 = vadd.f32 %v3617, %v3859
        %v3861 = vpop.f32.mrb[0].mxu0
        %v3862 = vpop.f32.mrb[0].mxu0
        %3863 = vdwg.mxu0
        %v3864 = vmul.f32 %v3817, 0.5
        %v3865 = vmul.f32 %v3819, 0.5
        %v3866 = vmul.f32 %v3858, 0.5
        %v3867 = vmul.f32 %v3860, 0.5
        %v3868 = vmul.f32 %v3817, 0.044715
        %v3869 = vmul.f32 %v3819, 0.044715
        %v3870 = vmul.f32 %v3858, 0.044715
        %v3871 = vmul.f32 %v3860, 0.044715
        %v3872 = vmul.f32 %v3868, %v3817
        %v3873 = vmul.f32 %v3869, %v3819
        %v3874 = vmul.f32 %v3870, %v3858
        %v3875 = vmul.f32 %v3871, %v3860
        %v3876 = vmul.f32 %v3872, %v3817
        %v3877 = vmul.f32 %v3873, %v3819
        %v3878 = vmul.f32 %v3874, %v3858
        %v3879 = vmul.f32 %v3875, %v3860
        %v3880 = vadd.f32 %v3817, %v3876
        %v3881 = vadd.f32 %v3819, %v3877
        %v3882 = vadd.f32 %v3858, %v3878
        %v3883 = vadd.f32 %v3860, %v3879
        %v3884 = vmul.f32 %v3880, 0.7978846
        %v3885 = vmul.f32 %v3881, 0.7978846
        %v3886 = vmul.f32 %v3882, 0.7978846
        %v3887 = vmul.f32 %v3883, 0.7978846
        %v3888 = vtanh.pop %v3884
        %v3889 = vtanh.pop %v3885
        %v3890 = vtanh.pop %v3886
        %v3891 = vtanh.pop %v3887
        %v3892 = vadd.f32 %v3888, 1.0
        %v3893 = vadd.f32 %v3889, 1.0
        %v3894 = vadd.f32 %v3890, 1.0
        %v3895 = vadd.f32 %v3891, 1.0
        %v3896 = vmul.f32 %v3864, %v3892
        %v3897 = vmul.f32 %v3865, %v3893
        %v3898 = vmul.f32 %v3866, %v3894
        %v3899 = vmul.f32 %v3867, %v3895
        %v3900 = vpack.c.bf16 %v3896, %v3896
        %v3901 = vpack.c.bf16 %v3897, %v3897
        %v3902 = vpack.c.bf16 %v3898, %v3898
        %v3903 = vpack.c.bf16 %v3899, %v3899
        %s3904 = scalar_lea.vmem %s11, 256
        %v3905 = vld [vmem:[%s3904] sm:$0xf]
        %v3906 = vld [vmem:[%s3904 + $0x4] sm:$0xf]
        %v3907 = vld [vmem:[%s3904 + $0x8] sm:$0xf]
        %v3908 = vld [vmem:[%s3904 + $0xc] sm:$0xf]
        %v3909 = vld [vmem:[%s3904 + $0x10] sm:$0xf]
        %v3910 = vld [vmem:[%s3904 + $0x14] sm:$0xf]
        %v3911 = vld [vmem:[%s3904 + $0x18] sm:$0xf]
        %v3912 = vld [vmem:[%s3904 + $0x1c] sm:$0xf]
        %v3913 = vld [vmem:[%s3904 + $0x20] sm:$0xf]
        %v3914 = vld [vmem:[%s3904 + $0x24] sm:$0xf]
        %v3915 = vld [vmem:[%s3904 + $0x28] sm:$0xf]
        %v3916 = vld [vmem:[%s3904 + $0x2c] sm:$0xf]
        %v3917 = vld [vmem:[%s3904 + $0x30] sm:$0xf]
        %v3918 = vld [vmem:[%s3904 + $0x34] sm:$0xf]
        %v3919 = vld [vmem:[%s3904 + $0x38] sm:$0xf]
        %v3920 = vld [vmem:[%s3904 + $0x3c] sm:$0xf]
        %v3921 = vld [vmem:[%s3904 + $0x40] sm:$0xf]
        %v3922 = vld [vmem:[%s3904 + $0x44] sm:$0xf]
        %v3923 = vld [vmem:[%s3904 + $0x48] sm:$0xf]
        %v3924 = vld [vmem:[%s3904 + $0x4c] sm:$0xf]
        %v3925 = vld [vmem:[%s3904 + $0x50] sm:$0xf]
        %v3926 = vld [vmem:[%s3904 + $0x54] sm:$0xf]
        %v3927 = vld [vmem:[%s3904 + $0x58] sm:$0xf]
        %v3928 = vld [vmem:[%s3904 + $0x5c] sm:$0xf]
        %v3929 = vld [vmem:[%s3904 + $0x60] sm:$0xf]
        %v3930 = vld [vmem:[%s3904 + $0x64] sm:$0xf]
        %v3931 = vld [vmem:[%s3904 + $0x68] sm:$0xf]
        %v3932 = vld [vmem:[%s3904 + $0x6c] sm:$0xf]
        %v3933 = vld [vmem:[%s3904 + $0x70] sm:$0xf]
        %v3934 = vld [vmem:[%s3904 + $0x74] sm:$0xf]
        %v3935 = vld [vmem:[%s3904 + $0x78] sm:$0xf]
        %v3936 = vld [vmem:[%s3904 + $0x7c] sm:$0xf]
        %v3937 = vld [vmem:[%s3904 + $0x80] sm:$0xf]
        %v3938 = vld [vmem:[%s3904 + $0x84] sm:$0xf]
        %v3939 = vld [vmem:[%s3904 + $0x88] sm:$0xf]
        %v3940 = vld [vmem:[%s3904 + $0x8c] sm:$0xf]
        %v3941 = vld [vmem:[%s3904 + $0x90] sm:$0xf]
        %v3942 = vld [vmem:[%s3904 + $0x94] sm:$0xf]
        %v3943 = vld [vmem:[%s3904 + $0x98] sm:$0xf]
        %v3944 = vld [vmem:[%s3904 + $0x9c] sm:$0xf]
        %v3945 = vld [vmem:[%s3904 + $0xa0] sm:$0xf]
        %v3946 = vld [vmem:[%s3904 + $0xa4] sm:$0xf]
        %v3947 = vld [vmem:[%s3904 + $0xa8] sm:$0xf]
        %v3948 = vld [vmem:[%s3904 + $0xac] sm:$0xf]
        %v3949 = vld [vmem:[%s3904 + $0xb0] sm:$0xf]
        %v3950 = vld [vmem:[%s3904 + $0xb4] sm:$0xf]
        %v3951 = vld [vmem:[%s3904 + $0xb8] sm:$0xf]
        %v3952 = vld [vmem:[%s3904 + $0xbc] sm:$0xf]
        %v3953 = vld [vmem:[%s3904 + $0xc0] sm:$0xf]
        %v3954 = vld [vmem:[%s3904 + $0xc4] sm:$0xf]
        %v3955 = vld [vmem:[%s3904 + $0xc8] sm:$0xf]
        %v3956 = vld [vmem:[%s3904 + $0xcc] sm:$0xf]
        %v3957 = vld [vmem:[%s3904 + $0xd0] sm:$0xf]
        %v3958 = vld [vmem:[%s3904 + $0xd4] sm:$0xf]
        %v3959 = vld [vmem:[%s3904 + $0xd8] sm:$0xf]
        %v3960 = vld [vmem:[%s3904 + $0xdc] sm:$0xf]
        %v3961 = vld [vmem:[%s3904 + $0xe0] sm:$0xf]
        %v3962 = vld [vmem:[%s3904 + $0xe4] sm:$0xf]
        %v3963 = vld [vmem:[%s3904 + $0xe8] sm:$0xf]
        %v3964 = vld [vmem:[%s3904 + $0xec] sm:$0xf]
        %v3965 = vld [vmem:[%s3904 + $0xf0] sm:$0xf]
        %v3966 = vld [vmem:[%s3904 + $0xf4] sm:$0xf]
        %v3967 = vld [vmem:[%s3904 + $0xf8] sm:$0xf]
        %v3968 = vld [vmem:[%s3904 + $0xfc] sm:$0xf]
        %s3969 = scalar_lea.vmem %s12, 1
        %v3970 = vld [vmem:[%s3969] sm:$0x1]
        %v3972 = vlaneseq
        %v3973 = vshrl.u32 %v3972, 7
        %v3974 = vsub.s32 0, %v3973
        %v3975 = vrot.slane %v3970, %v3974
        %v4041 = vunpack.c.l.b16 %v3905
        %v4042 = vunpack.c.l.b16 %v3906
        %v4043 = vunpack.c.l.b16 %v3907
        %v4044 = vunpack.c.l.b16 %v3908
        %v4045 = vunpack.c.l.b16 %v3909
        %v4046 = vunpack.c.l.b16 %v3910
        %v4047 = vunpack.c.l.b16 %v3911
        %v4048 = vunpack.c.l.b16 %v3912
        %v4049 = vunpack.c.l.b16 %v3913
        %v4050 = vunpack.c.l.b16 %v3914
        %v4051 = vunpack.c.l.b16 %v3915
        %v4052 = vunpack.c.l.b16 %v3916
        %v4053 = vunpack.c.l.b16 %v3917
        %v4054 = vunpack.c.l.b16 %v3918
        %v4055 = vunpack.c.l.b16 %v3919
        %v4056 = vunpack.c.l.b16 %v3920
        %v4057 = vunpack.c.l.b16 %v3921
        %v4058 = vunpack.c.l.b16 %v3922
        %v4059 = vunpack.c.l.b16 %v3923
        %v4060 = vunpack.c.l.b16 %v3924
        %v4061 = vunpack.c.l.b16 %v3925
        %v4062 = vunpack.c.l.b16 %v3926
        %v4063 = vunpack.c.l.b16 %v3927
        %v4064 = vunpack.c.l.b16 %v3928
        %v4065 = vunpack.c.l.b16 %v3929
        %v4066 = vunpack.c.l.b16 %v3930
        %v4067 = vunpack.c.l.b16 %v3931
        %v4068 = vunpack.c.l.b16 %v3932
        %v4069 = vunpack.c.l.b16 %v3933
        %v4070 = vunpack.c.l.b16 %v3934
        %v4071 = vunpack.c.l.b16 %v3935
        %v4072 = vunpack.c.l.b16 %v3936
        %v4073 = vunpack.c.l.b16 %v3937
        %v4074 = vunpack.c.l.b16 %v3938
        %v4075 = vunpack.c.l.b16 %v3939
        %v4076 = vunpack.c.l.b16 %v3940
        %v4077 = vunpack.c.l.b16 %v3941
        %v4078 = vunpack.c.l.b16 %v3942
        %v4079 = vunpack.c.l.b16 %v3943
        %v4080 = vunpack.c.l.b16 %v3944
        %v4081 = vunpack.c.l.b16 %v3945
        %v4082 = vunpack.c.l.b16 %v3946
        %v4083 = vunpack.c.l.b16 %v3947
        %v4084 = vunpack.c.l.b16 %v3948
        %v4085 = vunpack.c.l.b16 %v3949
        %v4086 = vunpack.c.l.b16 %v3950
        %v4087 = vunpack.c.l.b16 %v3951
        %v4088 = vunpack.c.l.b16 %v3952
        %v4089 = vunpack.c.l.b16 %v3953
        %v4090 = vunpack.c.l.b16 %v3954
        %v4091 = vunpack.c.l.b16 %v3955
        %v4092 = vunpack.c.l.b16 %v3956
        %v4093 = vunpack.c.l.b16 %v3957
        %v4094 = vunpack.c.l.b16 %v3958
        %v4095 = vunpack.c.l.b16 %v3959
        %v4096 = vunpack.c.l.b16 %v3960
        %v4097 = vunpack.c.l.b16 %v3961
        %v4098 = vunpack.c.l.b16 %v3962
        %v4099 = vunpack.c.l.b16 %v3963
        %v4100 = vunpack.c.l.b16 %v3964
        %v4101 = vunpack.c.l.b16 %v3965
        %v4102 = vunpack.c.l.b16 %v3966
        %v4103 = vunpack.c.l.b16 %v3967
        %v4104 = vunpack.c.l.b16 %v3968
        %v4105 = vpack.c.b16 %v4042, %v4041
        %v4106 = vpack.c.b16 %v4044, %v4043
        %v4107 = vpack.c.b16 %v4046, %v4045
        %v4108 = vpack.c.b16 %v4048, %v4047
        %v4109 = vpack.c.b16 %v4050, %v4049
        %v4110 = vpack.c.b16 %v4052, %v4051
        %v4111 = vpack.c.b16 %v4054, %v4053
        %v4112 = vpack.c.b16 %v4056, %v4055
        %v4113 = vpack.c.b16 %v4058, %v4057
        %v4114 = vpack.c.b16 %v4060, %v4059
        %v4115 = vpack.c.b16 %v4062, %v4061
        %v4116 = vpack.c.b16 %v4064, %v4063
        %v4117 = vpack.c.b16 %v4066, %v4065
        %v4118 = vpack.c.b16 %v4068, %v4067
        %v4119 = vpack.c.b16 %v4070, %v4069
        %v4120 = vpack.c.b16 %v4072, %v4071
        %v4121 = vpack.c.b16 %v4074, %v4073
        %v4122 = vpack.c.b16 %v4076, %v4075
        %v4123 = vpack.c.b16 %v4078, %v4077
        %v4124 = vpack.c.b16 %v4080, %v4079
        %v4125 = vpack.c.b16 %v4082, %v4081
        %v4126 = vpack.c.b16 %v4084, %v4083
        %v4127 = vpack.c.b16 %v4086, %v4085
        %v4128 = vpack.c.b16 %v4088, %v4087
        %v4129 = vpack.c.b16 %v4090, %v4089
        %v4130 = vpack.c.b16 %v4092, %v4091
        %v4131 = vpack.c.b16 %v4094, %v4093
        %v4132 = vpack.c.b16 %v4096, %v4095
        %v4133 = vpack.c.b16 %v4098, %v4097
        %v4134 = vpack.c.b16 %v4100, %v4099
        %v4135 = vpack.c.b16 %v4102, %v4101
        %v4136 = vpack.c.b16 %v4104, %v4103
        %4169 = vmatprep.subr.bf16.mxu0 0
        %4170 = vmatpush1.bf16.msra.mxu0 %v4105
        %4171 = vmatprep.subr.bf16.mxu0 0
        %4172 = vmatpush1.bf16.msra.mxu0 %v4106
        %4173 = vmatprep.subr.bf16.mxu0 0
        %4174 = vmatpush1.bf16.msra.mxu0 %v4107
        %4175 = vmatprep.subr.bf16.mxu0 0
        %4176 = vmatpush1.bf16.msra.mxu0 %v4108
        %4177 = vmatprep.subr.bf16.mxu0 0
        %4178 = vmatpush1.bf16.msra.mxu0 %v4109
        %4179 = vmatprep.subr.bf16.mxu0 0
        %4180 = vmatpush1.bf16.msra.mxu0 %v4110
        %4181 = vmatprep.subr.bf16.mxu0 0
        %4182 = vmatpush1.bf16.msra.mxu0 %v4111
        %4183 = vmatprep.subr.bf16.mxu0 0
        %4184 = vmatpush1.bf16.msra.mxu0 %v4112
        %4185 = vmatprep.subr.bf16.mxu0 0
        %4186 = vmatpush1.bf16.msra.mxu0 %v4113
        %4187 = vmatprep.subr.bf16.mxu0 0
        %4188 = vmatpush1.bf16.msra.mxu0 %v4114
        %4189 = vmatprep.subr.bf16.mxu0 0
        %4190 = vmatpush1.bf16.msra.mxu0 %v4115
        %4191 = vmatprep.subr.bf16.mxu0 0
        %4192 = vmatpush1.bf16.msra.mxu0 %v4116
        %4193 = vmatprep.subr.bf16.mxu0 0
        %4194 = vmatpush1.bf16.msra.mxu0 %v4117
        %4195 = vmatprep.subr.bf16.mxu0 0
        %4196 = vmatpush1.bf16.msra.mxu0 %v4118
        %4197 = vmatprep.subr.bf16.mxu0 0
        %4198 = vmatpush1.bf16.msra.mxu0 %v4119
        %4199 = vmatprep.subr.bf16.mxu0 0
        %4200 = vmatpush1.bf16.msra.mxu0 %v4120
        %4201 = vmatprep.mubr.bf16.mxu0 %v3901
        %4202 = vmatmul.mubr.bf16.gmra.mrb[0].mxu0 %v3900
        %v4203 = vpop.f32.mrb[0].mxu0
        %v4204 = vadd.f32 %v3975, %v4203
        %v4205 = vpop.f32.mrb[0].mxu0
        %v4206 = vpop.f32.mrb[0].mxu0
        %v4207 = vpop.f32.mrb[0].mxu0
        %4208 = vdwg.mxu0
        %4209 = vmatprep.subr.bf16.mxu0 0
        %4210 = vmatpush1.bf16.msra.mxu0 %v4121
        %4211 = vmatprep.subr.bf16.mxu0 0
        %4212 = vmatpush1.bf16.msra.mxu0 %v4122
        %4213 = vmatprep.subr.bf16.mxu0 0
        %4214 = vmatpush1.bf16.msra.mxu0 %v4123
        %4215 = vmatprep.subr.bf16.mxu0 0
        %4216 = vmatpush1.bf16.msra.mxu0 %v4124
        %4217 = vmatprep.subr.bf16.mxu0 0
        %4218 = vmatpush1.bf16.msra.mxu0 %v4125
        %4219 = vmatprep.subr.bf16.mxu0 0
        %4220 = vmatpush1.bf16.msra.mxu0 %v4126
        %4221 = vmatprep.subr.bf16.mxu0 0
        %4222 = vmatpush1.bf16.msra.mxu0 %v4127
        %4223 = vmatprep.subr.bf16.mxu0 0
        %4224 = vmatpush1.bf16.msra.mxu0 %v4128
        %4225 = vmatprep.subr.bf16.mxu0 0
        %4226 = vmatpush1.bf16.msra.mxu0 %v4129
        %4227 = vmatprep.subr.bf16.mxu0 0
        %4228 = vmatpush1.bf16.msra.mxu0 %v4130
        %4229 = vmatprep.subr.bf16.mxu0 0
        %4230 = vmatpush1.bf16.msra.mxu0 %v4131
        %4231 = vmatprep.subr.bf16.mxu0 0
        %4232 = vmatpush1.bf16.msra.mxu0 %v4132
        %4233 = vmatprep.subr.bf16.mxu0 0
        %4234 = vmatpush1.bf16.msra.mxu0 %v4133
        %4235 = vmatprep.subr.bf16.mxu0 0
        %4236 = vmatpush1.bf16.msra.mxu0 %v4134
        %4237 = vmatprep.subr.bf16.mxu0 0
        %4238 = vmatpush1.bf16.msra.mxu0 %v4135
        %4239 = vmatprep.subr.bf16.mxu0 0
        %4240 = vmatpush1.bf16.msra.mxu0 %v4136
        %4241 = vmatprep.mubr.bf16.mxu0 %v3903
        %4242 = vmatmul.mubr.bf16.gmra.mrb[0].mxu0 %v3902
        %v4243 = vpop.f32.mrb[0].mxu0
        %v4244 = vadd.f32 %v4204, %v4243
        %v4245 = vpop.f32.mrb[0].mxu0
        %v4246 = vpop.f32.mrb[0].mxu0
        %v4247 = vpop.f32.mrb[0].mxu0
        %4248 = vdwg.mxu0
        %v4249 = vadd.f32 %v4244, %v3564
        %s4250 = scalar_lea.vmem %s13, 1
        %v4251 = vld [vmem:[%s4250] sm:$0x1]
        %s4252 = scalar_lea.vmem %s14, 1
        %v4253 = vld [vmem:[%s4252] sm:$0x1]
        %4254 = vadd.xlane.f32.xlu0 %v4249
        %v4255 = vpop.xlane.xlu0 %4254
        %v4256 = vmul.f32 %v4255, %v496
        %v4257 = vsub.f32 %v4249, %v4256
        %v4258 = vmul.f32 %v4257, %v4257
        %4259 = vadd.xlane.f32.xlu0 %v4258
        %v4260 = vpop.xlane.xlu0 %4259
        %v4261 = vmul.f32 %v4260, %v496
        %v4262 = vadd.f32 %v4261, 1e-12
        %v4263 = vrsqrt.pop %v4262
        %v4264 = vmul.f32 %v4257, %v4263
        %v4266 = vlaneseq
        %v4267 = vshrl.u32 %v4266, 7
        %v4268 = vsub.s32 0, %v4267
        %v4269 = vrot.slane %v4251, %v4268
        %v4271 = vmul.f32 %v4264, %v4269
        %v4273 = vlaneseq
        %v4274 = vshrl.u32 %v4273, 7
        %v4275 = vsub.s32 0, %v4274
        %v4276 = vrot.slane %v4253, %v4275
        %v4278 = vadd.f32 %v4271, %v4276
        %4279 = vst [vmem:[%s485] sm:$0xff] %v4278
        %s4280 = sand.u32 %s357, 1
        %s4281 = scalar_lea.sflag [#allocation3], %s4280
        %s4282 = sand.u32 %s357, 1
        %s4283 = smul.addr %s4282, 8
        %s4284 = scalar_lea.vmem [#allocation2], %s4283
        // Predicated region
        $region81: #{bert_representer_forward.1} parent=79 // pred_check
          %p4285 = pneg %p367
        $region82: #{bert_representer_forward.1} parent=79 // pred_check_branch
          %4287 = sbr.rel (%p4285) target = $region84
        $region83: #{bert_representer_forward.1} parent=79 // pred_region
          %s4289 = ssub.s32 128, 128
          %4290 = vsyncadd %s4281, %s4289
          %s4291 = smul.addr %s29, 128
          %s4292 = scalar_lea.hbm %s15, %s4291
          %s4294 = sshll.u32 %s4284, 4
          %s4295 = int_to_ptr.vmem [resolvable:$true] %s4294
          %4297 = dma.vmem_to_hbm [thread:$0]  %s4295, 128, %s4292, %s4281
        $region84: #{bert_representer_forward.1} parent=79 // pred_fallthru
          _
      $region80: #{bert_representer_forward.1} parent=5 // pred_fallthru
        _
      %p4298 = scmp.le.s32.totalorder 2, %s24
      // Predicated region
      $region85: #{bert_representer_forward.1} parent=5 // pred_check
        %p4299 = pneg %p4298
      $region86: #{bert_representer_forward.1} parent=5 // pred_check_branch
        %4301 = sbr.rel (%p4299) target = $region88
      $region87: #{bert_representer_forward.1} parent=5 // pred_region
        %s4302 = ssub.s32 %s24, 2
        // Predicated region
        $region89: #{bert_representer_forward.1} parent=87 // pred_check
          %p4303 = pneg %p373
        $region90: #{bert_representer_forward.1} parent=87 // pred_check_branch
          %4305 = sbr.rel (%p4303) target = $region92
        $region91: #{bert_representer_forward.1} parent=87 // pred_region
          %s4306 = sand.u32 %s358, 1
          %s4307 = scalar_lea.sflag [#allocation3], %s4306
          %s4308 = sand.u32 %s358, 1
          %s4309 = smul.addr %s4308, 8
          %s4310 = scalar_lea.vmem [#allocation2], %s4309
          %4311 = dma.done %s4307, 128
        $region92: #{bert_representer_forward.1} parent=87 // pred_fallthru
          _
      $region88: #{bert_representer_forward.1} parent=5 // pred_fallthru
        _
    $region6: #{bert_representer_forward.1} parent=1 // loop_footer
      %s28 = sadd.s32 1, %s24
    $region7: #{bert_representer_forward.1} parent=1 // loop_footer_branch
      %23 = sbr.rel target = $region3
    $region8: #{bert_representer_forward.1} parent=1 // loop_exit
      _
    %4312 = vsyncpa [#allocation3], 1
    %s4313 = scalar_lea.sflag [#allocation3], 1
    %4314 = vsyncpa %s4313, 1

</llo_original>
